<compile_context>
chip_gen: v7x
topology: tpu7x:2x2x1
jax: 0.10.0
libtpu: 0.0.40
codegen_flags: <defaults>
</compile_context>

<pallas_src>
import functools
import math

import jax
import jax.numpy as jnp
from jax.experimental import pallas as pl
from jax.experimental.pallas import tpu as pltpu

HIDDEN = 32
NUM_HEADS = 4
HEAD_DIM = HIDDEN // NUM_HEADS
FFN = 64
NUM_LAYERS = 2
LN_EPS = 1e-5

VEC_WIDTH = max(2 * HIDDEN, FFN)          # lane width of the packed bias/LN row blob (=64)
VEC_ROWS_PER_LAYER = 13
HIGHEST = jax.lax.Precision.HIGHEST


# ---------------------------------------------------------------------------
# Fused whole-network kernel (one grid step == `bb` batch elements)
# ---------------------------------------------------------------------------
def transformer_kernel(q_ref, feat_ref, wA_ref, wB_ref, wC_ref, bkv_ref, vec_ref,
                       out_x_ref, out_attn_ref, *,
                       num_layers, num_heads, head_dim, bb, keep_query_position):
    L, H = q_ref.shape                     # (num_queries, hidden)
    queries = q_ref[...]

    pos = queries if bb == 1 else jnp.concatenate([queries] * bb, axis=0)   # (bb*L, H)
    if keep_query_position:
        x = jnp.zeros((bb * L, H), jnp.float32)     # decoder input is zeros; queries = pos
    else:
        x, pos = pos, None

    def vrow(r, width):                    # (1, width) row; broadcasts over token rows
        return vec_ref[r:r + 1, :width]

    def layer_norm(v, w, b):
        # one-pass mean / mean-of-squares -> the two reductions issue independently
        mu = jnp.mean(v, axis=-1, keepdims=True)
        ms = jnp.mean(v * v, axis=-1, keepdims=True)
        var = jnp.maximum(ms - mu * mu, 0.0)
        return (v - mu) * jax.lax.rsqrt(var + LN_EPS) * w + b

    def softmax_rows(s):                   # rows are (head, query) pairs
        s = s - jnp.max(s, axis=-1, keepdims=True)
        e = jnp.exp(s)
        return e / jnp.sum(e, axis=-1, keepdims=True)   # exact: attn is a module output

    def head_cols(n):
        return slice(n * head_dim, (n + 1) * head_dim)

    def self_attn(xin, layer):
        base = layer * VEC_ROWS_PER_LAYER
        wqk = wA_ref[2 * layer + 0]        # (H, 2H): [Wq^T*scale | Wk^T]
        wv = wC_ref[4 * layer + 0]         # (H, H)
        wo = wC_ref[4 * layer + 1]         # (H, H)
        x_qk = xin if pos is None else xin + pos
        qk = jnp.dot(x_qk, wqk, preferred_element_type=jnp.float32) + vrow(base + 0, 2 * H)
        v = jnp.dot(xin, wv, preferred_element_type=jnp.float32) + vrow(base + 1, H)
        q2, k2 = qk[:, :H], qk[:, H:]
        pv_rows = []
        for b in range(bb):
            rs = slice(b * L, (b + 1) * L)
            qb, kb, vb_ = q2[rs], k2[rs], v[rs]
            # all heads' scores stacked along sublanes -> a single softmax
            s = jnp.concatenate(
                [jax.lax.dot_general(qb[:, head_cols(n)], kb[:, head_cols(n)],
                                     (((1,), (1,)), ((), ())),
                                     preferred_element_type=jnp.float32)
                 for n in range(num_heads)], axis=0)                    # (NH*L, L)
            p = softmax_rows(s)
            pv = jnp.concatenate(
                [jnp.dot(p[n * L:(n + 1) * L], vb_[:, head_cols(n)],
                         preferred_element_type=jnp.float32)
                 for n in range(num_heads)], axis=1)                    # (L, H)
            pv_rows.append(pv)
        pv_all = pv_rows[0] if bb == 1 else jnp.concatenate(pv_rows, axis=0)
        return jnp.dot(pv_all, wo, preferred_element_type=jnp.float32) + vrow(base + 2, H)

    def cross_attn(xin, layer, need_attn):
        base = layer * VEC_ROWS_PER_LAYER
        wq = wC_ref[4 * layer + 2]         # (H, H), scale folded
        wo = wC_ref[4 * layer + 3]         # (H, H)
        wkv = wB_ref[2 * layer + 0]        # (2H, H): [Wk; Wv] rows -> channel-major proj
        bkv = bkv_ref[layer]               # (2H, 1) column bias
        x_q = xin if pos is None else xin + pos
        q2 = jnp.dot(x_q, wq, preferred_element_type=jnp.float32) + vrow(base + 5, H)
        pv_rows, attns = [], []
        for b in range(bb):
            feat_b = feat_ref[b]           # (H, S) channel-major: no feature transposes
            kv = jnp.dot(wkv, feat_b, preferred_element_type=jnp.float32) + bkv   # (2H, S)
            k_cm, v_cm = kv[:H], kv[H:]
            qb = q2[b * L:(b + 1) * L]
            s = jnp.concatenate(
                [jnp.dot(qb[:, head_cols(n)], k_cm[head_cols(n), :],
                         preferred_element_type=jnp.float32)
                 for n in range(num_heads)], axis=0)                    # (NH*L, S)
            p = softmax_rows(s)
            pv = jnp.concatenate(
                [jax.lax.dot_general(p[n * L:(n + 1) * L], v_cm[head_cols(n), :],
                                     (((1,), (1,)), ((), ())),
                                     preferred_element_type=jnp.float32)
                 for n in range(num_heads)], axis=1)                    # (L, H)
            pv_rows.append(pv)
            if need_attn:
                acc = p[0:L]
                for n in range(1, num_heads):
                    acc = acc + p[n * L:(n + 1) * L]
                attns.append(acc * (1.0 / num_heads))                   # head-averaged
        pv_all = pv_rows[0] if bb == 1 else jnp.concatenate(pv_rows, axis=0)
        out = jnp.dot(pv_all, wo, preferred_element_type=jnp.float32) + vrow(base + 6, H)
        return out, attns

    attn_out = None
    for layer in range(num_layers):
        base = layer * VEC_ROWS_PER_LAYER
        last = layer == num_layers - 1

        # --- self-attention block (post-norm, dropout=0 -> identity) ---
        sa = self_attn(x, layer)
        x = layer_norm(x + sa, vrow(base + 3, H), vrow(base + 4, H))

        # --- cross-attention block (attn weights only for the last layer) ---
        ca, attns = cross_attn(x, layer, need_attn=last)
        if last:
            attn_out = attns
        x = layer_norm(x + ca, vrow(base + 7, H), vrow(base + 8, H))

        # --- feed-forward block (relu) ---
        w1 = wA_ref[2 * layer + 1]         # (H, F)
        w2 = wB_ref[2 * layer + 1]         # (F, H) pre-transposed -> canonical matmul
        h1 = jnp.maximum(
            jnp.dot(x, w1, preferred_element_type=jnp.float32) + vrow(base + 9, FFN), 0.0)
        ff = jnp.dot(h1, w2, preferred_element_type=jnp.float32) + vrow(base + 10, H)
        x = layer_norm(x + ff, vrow(base + 11, H), vrow(base + 12, H))

    fb = num_layers * VEC_ROWS_PER_LAYER
    x = layer_norm(x, vrow(fb + 0, H), vrow(fb + 1, H))     # final decoder LayerNorm

    for b in range(bb):
        out_x_ref[b] = x[b * L:(b + 1) * L]
        out_attn_ref[b] = attn_out[b]


# ---------------------------------------------------------------------------
# Wrapper: one pallas_call for the whole network
# ---------------------------------------------------------------------------
def _const_spec(a):
    nd = a.ndim
    return pl.BlockSpec(a.shape, lambda g, _nd=nd: (0,) * _nd)


def transformer_forward(features, queries, packed, *, keep_query_position=True,
                        batch_block=1):
    bs, c, hh, ww = features.shape
    S = hh * ww
    L, H = queries.shape
    assert c == H and bs % batch_block == 0
    feat = features.reshape(bs, c, S).astype(jnp.float32)   # channel-major; NO transpose

    wA, wB, wC = packed["wA"], packed["wB"], packed["wC"]
    bkv, vecs = packed["bkv"], packed["vecs"]

    kernel = functools.partial(
        transformer_kernel, num_layers=NUM_LAYERS, num_heads=NUM_HEADS,
        head_dim=HEAD_DIM, bb=batch_block, keep_query_position=keep_query_position)

    out_x, out_attn = pl.pallas_call(
        kernel,
        grid=(bs // batch_block,),
        in_specs=[
            _const_spec(queries),                                 # (L, H) batch-invariant
            pl.BlockSpec((batch_block, H, S), lambda g: (g, 0, 0)),
            _const_spec(wA), _const_spec(wB), _const_spec(wC),
            _const_spec(bkv), _const_spec(vecs),
        ],
        out_specs=(
            pl.BlockSpec((batch_block, L, H), lambda g: (g, 0, 0)),
            pl.BlockSpec((batch_block, L, S), lambda g: (g, 0, 0)),
        ),
        out_shape=(
            jax.ShapeDtypeStruct((bs, L, H), jnp.float32),
            jax.ShapeDtypeStruct((bs, L, S), jnp.float32),
        ),
        compiler_params=pltpu.CompilerParams(dimension_semantics=("parallel",)),
    )(queries.astype(jnp.float32), feat, wA, wB, wC, bkv, vecs)
    return out_x, out_attn


# ---------------------------------------------------------------------------
# Deterministic raw (torch-convention) parameters + packing into kernel blobs
# ---------------------------------------------------------------------------
def init_raw_params(key):
    keys = iter(jax.random.split(key, 64))

    def nk():
        return next(keys)

    def xavier(shape):                     # (out, in), torch convention
        fan_out, fan_in = shape
        bound = math.sqrt(6.0 / (fan_in + fan_out))
        return jax.random.uniform(nk(), shape, jnp.float32, -bound, bound)

    def small(shape, s=0.05):              # small random biases/LN perturbations so the
        return s * jax.random.normal(nk(), shape, jnp.float32)   # kernel-vs-ref check is strict

    def mha_p():
        return {"in_w": xavier((3 * HIDDEN, HIDDEN)), "in_b": small((3 * HIDDEN,)),
                "out_w": xavier((HIDDEN, HIDDEN)), "out_b": small((HIDDEN,))}

    def norm_p():
        return {"w": 1.0 + small((HIDDEN,)), "b": small((HIDDEN,))}

    layers = []
    for _ in range(NUM_LAYERS):
        layers.append({
            "self_attn": mha_p(), "cross_attn": mha_p(),
            "norm1": norm_p(), "norm2": norm_p(), "norm3": norm_p(),
            "lin1_w": xavier((FFN, HIDDEN)), "lin1_b": small((FFN,)),
            "lin2_w": xavier((HIDDEN, FFN)), "lin2_b": small((HIDDEN,)),
        })
    return {"layers": layers, "final_norm": norm_p()}


def pack_params(raw):
    assert FFN == 2 * HIDDEN               # wA/wB stacking relies on F == 2H (this config)
    scale = 1.0 / math.sqrt(HEAD_DIM)

    def row(v):
        v = jnp.asarray(v, jnp.float32)
        return jnp.pad(v, (0, VEC_WIDTH - v.shape[0]))[None, :]

    wA, wB, wC, bkv, rows = [], [], [], [], []
    for lp in raw["layers"]:
        sa, ca = lp["self_attn"], lp["cross_attn"]
        sWq, sWk, sWv = jnp.split(sa["in_w"], 3, axis=0)
        sbq, sbk, sbv = jnp.split(sa["in_b"], 3)
        cWq, cWk, cWv = jnp.split(ca["in_w"], 3, axis=0)
        cbq, cbk, cbv = jnp.split(ca["in_b"], 3)

        wA += [jnp.concatenate([sWq.T * scale, sWk.T], axis=1),   # (H,2H) fused self Q|K
               lp["lin1_w"].T]                                    # (H, F)
        wB += [jnp.concatenate([cWk, cWv], axis=0),               # (2H,H) fused cross K;V
               lp["lin2_w"].T]                                    # (F, H) pre-transposed
        wC += [sWv.T, sa["out_w"].T, cWq.T * scale, ca["out_w"].T]
        bkv.append(jnp.concatenate([cbk, cbv])[:, None])          # (2H, 1) column bias

        rows += [row(jnp.concatenate([sbq * scale, sbk])),        # 0  self b_q|b_k
                 row(sbv),                                        # 1  self b_v
                 row(sa["out_b"]),                                # 2  self out bias
                 row(lp["norm1"]["w"]), row(lp["norm1"]["b"]),    # 3,4
                 row(cbq * scale),                                # 5  cross b_q
                 row(ca["out_b"]),                                # 6  cross out bias
                 row(lp["norm2"]["w"]), row(lp["norm2"]["b"]),    # 7,8
                 row(lp["lin1_b"]), row(lp["lin2_b"]),            # 9,10
                 row(lp["norm3"]["w"]), row(lp["norm3"]["b"])]    # 11,12
    rows += [row(raw["final_norm"]["w"]), row(raw["final_norm"]["b"])]
    return {"wA": jnp.stack(wA), "wB": jnp.stack(wB), "wC": jnp.stack(wC),
            "bkv": jnp.stack(bkv), "vecs": jnp.concatenate(rows, axis=0)}


# ---------------------------------------------------------------------------
# Pure-JAX reference on the RAW torch-convention params (high precision matmuls)
# ---------------------------------------------------------------------------
def ref_forward(features, queries, raw, keep_query_position=True):
    bs, c, hh, ww = features.shape
    feat = features.reshape(bs, c, hh * ww).transpose(0, 2, 1)    # (bs, S, H) token-major
    q = jnp.broadcast_to(queries[None], (bs,) + queries.shape)
    if keep_query_position:
        x, pos = jnp.zeros_like(q), q
    else:
        x, pos = q, None

    def wp(t):
        return t if pos is None else t + pos

    def ln(v, p):
        mu = jnp.mean(v, -1, keepdims=True)
        var = jnp.mean((v - mu) ** 2, -1, keepdims=True)
        return (v - mu) * jax.lax.rsqrt(var + LN_EPS) * p["w"] + p["b"]

    def mha(q_in, k_in, v_in, p):
        Wq, Wk, Wv = jnp.split(p["in_w"], 3, axis=0)
        bq, bk, bv = jnp.split(p["in_b"], 3)
        qp = jnp.einsum("bld,ed->ble", q_in, Wq, precision=HIGHEST) + bq
        kp = jnp.einsum("bsd,ed->bse", k_in, Wk, precision=HIGHEST) + bk
        vp = jnp.einsum("bsd,ed->bse", v_in, Wv, precision=HIGHEST) + bv
        B, Lq, _ = qp.shape
        Sk = kp.shape[1]
        qh = qp.reshape(B, Lq, NUM_HEADS, HEAD_DIM).transpose(0, 2, 1, 3)
        kh = kp.reshape(B, Sk, NUM_HEADS, HEAD_DIM).transpose(0, 2, 1, 3)
        vh = vp.reshape(B, Sk, NUM_HEADS, HEAD_DIM).transpose(0, 2, 1, 3)
        s = jnp.einsum("bnld,bnsd->bnls", qh, kh, precision=HIGHEST) / math.sqrt(HEAD_DIM)
        a = jax.nn.softmax(s, axis=-1)
        o = jnp.einsum("bnls,bnsd->bnld", a, vh, precision=HIGHEST)
        o = o.transpose(0, 2, 1, 3).reshape(B, Lq, HIDDEN)
        out = jnp.einsum("ble,de->bld", o, p["out_w"], precision=HIGHEST) + p["out_b"]
        return out, jnp.mean(a, axis=1)

    attn = None
    for lp in raw["layers"]:
        sa, _ = mha(wp(x), wp(x), x, lp["self_attn"])
        x = ln(x + sa, lp["norm1"])
        ca, attn = mha(wp(x), feat, feat, lp["cross_attn"])
        x = ln(x + ca, lp["norm2"])
        h = jnp.maximum(jnp.einsum("bld,fd->blf", x, lp["lin1_w"], precision=HIGHEST)
                        + lp["lin1_b"], 0.0)
        ff = jnp.einsum("blf,df->bld", h, lp["lin2_w"], precision=HIGHEST) + lp["lin2_b"]
        x = ln(x + ff, lp["norm3"])
    x = ln(x, raw["final_norm"])
    return x, attn


# ---------------------------------------------------------------------------
if __name__ == "__main__":
    key = jax.random.PRNGKey(0)
    k_feat, k_query, k_params = jax.random.split(key, 3)

    # features: (bs, C=hidden, h, w) -> S = h*w = 16 encoder tokens
    features = jax.random.normal(k_feat, (2, HIDDEN, 4, 4), jnp.float32)
    # queries: (num_queries, hidden)
    queries = jax.random.normal(k_query, (8, HIDDEN), jnp.float32)

    raw = init_raw_params(k_params)
    packed = pack_params(raw)

    ref_hidden, ref_attn = ref_forward(features, queries, raw, keep_query_position=True)

    forward = jax.jit(transformer_forward,
                      static_argnames=("keep_query_position", "batch_block"))

    # batch_block=1: grid=(2,) "parallel" (keeps both v7x TensorCores busy);
    # batch_block=2: whole batch in one grid step (best on single-TC v5e/v6e).
    for bb in (1, 2):
        hidden_state, attn_weights = forward(features, queries, packed,
                                             keep_query_position=True, batch_block=bb)
        hidden_state = jax.block_until_ready(hidden_state)
        attn_weights = jax.block_until_ready(attn_weights)
        assert hidden_state.shape == (2, 8, HIDDEN)
        assert attn_weights.shape == (2, 8, 16)
        assert jnp.allclose(hidden_state, ref_hidden, atol=1e-2, rtol=1e-2), (
            f"hidden mismatch (bb={bb}): "
            f"{float(jnp.max(jnp.abs(hidden_state - ref_hidden)))}")
        assert jnp.allclose(attn_weights, ref_attn, atol=1e-2, rtol=1e-2), (
            f"attn mismatch (bb={bb}): "
            f"{float(jnp.max(jnp.abs(attn_weights - ref_attn)))}")

    print("KERNEL_OK")
</pallas_src>

<mosaic_0001>
module attributes {stable_mosaic.version = 11 : i64} {
  func.func @transformer_kernel(%arg0: i32, %arg1: memref<8x32xf32, #tpu.memory_space<vmem>>, %arg2: memref<1x32x16xf32, #tpu.memory_space<vmem>>, %arg3: memref<4x32x64xf32, #tpu.memory_space<vmem>>, %arg4: memref<4x64x32xf32, #tpu.memory_space<vmem>>, %arg5: memref<8x32x32xf32, #tpu.memory_space<vmem>>, %arg6: memref<2x64x1xf32, #tpu.memory_space<vmem>>, %arg7: memref<28x64xf32, #tpu.memory_space<vmem>>, %arg8: memref<1x8x32xf32, #tpu.memory_space<vmem>>, %arg9: memref<1x8x16xf32, #tpu.memory_space<vmem>>) attributes {dimension_semantics = [#tpu.dimension_semantics<parallel>], iteration_bounds = array<i64: 2>, scalar_prefetch = 0 : i64, scratch_operands = 0 : i64, tpu.core_type = #tpu.core_type<tc>, window_params = [{pipeline_mode = #tpu.pipeline_mode<synchronous>, transform_indices = @transform_0, window_bounds = array<i64: 8, 32>}, {transform_indices = @transform_1, window_bounds = array<i64: 1, 32, 16>}, {pipeline_mode = #tpu.pipeline_mode<synchronous>, transform_indices = @transform_2, window_bounds = array<i64: 4, 32, 64>}, {pipeline_mode = #tpu.pipeline_mode<synchronous>, transform_indices = @transform_3, window_bounds = array<i64: 4, 64, 32>}, {pipeline_mode = #tpu.pipeline_mode<synchronous>, transform_indices = @transform_4, window_bounds = array<i64: 8, 32, 32>}, {pipeline_mode = #tpu.pipeline_mode<synchronous>, transform_indices = @transform_5, window_bounds = array<i64: 2, 64, 1>}, {pipeline_mode = #tpu.pipeline_mode<synchronous>, transform_indices = @transform_6, window_bounds = array<i64: 28, 64>}, {transform_indices = @transform_7, window_bounds = array<i64: 1, 8, 32>}, {transform_indices = @transform_8, window_bounds = array<i64: 1, 8, 16>}]} {
    %c0 = arith.constant 0 : index
    %c0_0 = arith.constant 0 : index
    %0 = vector.load %arg1[%c0, %c0_0] : memref<8x32xf32, #tpu.memory_space<vmem>>, vector<8x32xf32>
    %cst = arith.constant 0.000000e+00 : f32
    %1 = vector.broadcast %cst : f32 to vector<8x32xf32>
    %c0_1 = arith.constant 0 : index
    %c0_2 = arith.constant 0 : index
    %c0_3 = arith.constant 0 : index
    %2 = vector.load %arg3[%c0_1, %c0_2, %c0_3] : memref<4x32x64xf32, #tpu.memory_space<vmem>>, vector<1x32x64xf32>
    %3 = vector.shape_cast %2 : vector<1x32x64xf32> to vector<32x64xf32>
    %c0_4 = arith.constant 0 : index
    %c0_5 = arith.constant 0 : index
    %c0_6 = arith.constant 0 : index
    %4 = vector.load %arg5[%c0_4, %c0_5, %c0_6] : memref<8x32x32xf32, #tpu.memory_space<vmem>>, vector<1x32x32xf32>
    %5 = vector.shape_cast %4 : vector<1x32x32xf32> to vector<32x32xf32>
    %c1 = arith.constant 1 : index
    %c0_7 = arith.constant 0 : index
    %c0_8 = arith.constant 0 : index
    %6 = vector.load %arg5[%c1, %c0_7, %c0_8] : memref<8x32x32xf32, #tpu.memory_space<vmem>>, vector<1x32x32xf32>
    %7 = vector.shape_cast %6 : vector<1x32x32xf32> to vector<32x32xf32>
    %8 = arith.addf %1, %0 : vector<8x32xf32>
    %cst_9 = arith.constant dense<0.000000e+00> : vector<8x64xf32>
    %9 = tpu.matmul %8, %3, %cst_9 {dimension_numbers = #tpu.dot_dimension_numbers<[1], [0], [0], [1], [0, 0, 1, 1], [], []>} : vector<8x32xf32>, vector<32x64xf32>, vector<8x64xf32> -> vector<8x64xf32>
    %c0_10 = arith.constant 0 : index
    %c0_11 = arith.constant 0 : index
    %10 = vector.load %arg7[%c0_10, %c0_11] : memref<28x64xf32, #tpu.memory_space<vmem>>, vector<1x64xf32>
    %11 = vector.broadcast %10 : vector<1x64xf32> to vector<8x64xf32>
    %12 = arith.addf %9, %11 : vector<8x64xf32>
    %cst_12 = arith.constant dense<0.000000e+00> : vector<8x32xf32>
    %13 = tpu.matmul %1, %5, %cst_12 {dimension_numbers = #tpu.dot_dimension_numbers<[1], [0], [0], [1], [0, 0, 1, 1], [], []>} : vector<8x32xf32>, vector<32x32xf32>, vector<8x32xf32> -> vector<8x32xf32>
    %c1_13 = arith.constant 1 : index
    %c0_14 = arith.constant 0 : index
    %14 = vector.load %arg7[%c1_13, %c0_14] : memref<28x64xf32, #tpu.memory_space<vmem>>, vector<1x32xf32>
    %15 = vector.broadcast %14 : vector<1x32xf32> to vector<8x32xf32>
    %16 = arith.addf %13, %15 : vector<8x32xf32>
    %17 = vector.extract_strided_slice %12 {offsets = [0, 0], sizes = [8, 32], strides = [1, 1]} : vector<8x64xf32> to vector<8x32xf32>
    %18 = vector.extract_strided_slice %12 {offsets = [0, 32], sizes = [8, 32], strides = [1, 1]} : vector<8x64xf32> to vector<8x32xf32>
    %19 = vector.extract_strided_slice %17 {offsets = [0, 0], sizes = [8, 8], strides = [1, 1]} : vector<8x32xf32> to vector<8x8xf32>
    %20 = vector.extract_strided_slice %18 {offsets = [0, 0], sizes = [8, 8], strides = [1, 1]} : vector<8x32xf32> to vector<8x8xf32>
    %cst_15 = arith.constant dense<0.000000e+00> : vector<8x8xf32>
    %21 = tpu.matmul %19, %20, %cst_15 {dimension_numbers = #tpu.dot_dimension_numbers<[1], [1], [0], [0], [0, 0, 1, 0], [], []>} : vector<8x8xf32>, vector<8x8xf32>, vector<8x8xf32> -> vector<8x8xf32>
    %22 = vector.extract_strided_slice %17 {offsets = [0, 8], sizes = [8, 8], strides = [1, 1]} : vector<8x32xf32> to vector<8x8xf32>
    %23 = vector.extract_strided_slice %18 {offsets = [0, 8], sizes = [8, 8], strides = [1, 1]} : vector<8x32xf32> to vector<8x8xf32>
    %cst_16 = arith.constant dense<0.000000e+00> : vector<8x8xf32>
    %24 = tpu.matmul %22, %23, %cst_16 {dimension_numbers = #tpu.dot_dimension_numbers<[1], [1], [0], [0], [0, 0, 1, 0], [], []>} : vector<8x8xf32>, vector<8x8xf32>, vector<8x8xf32> -> vector<8x8xf32>
    %25 = vector.extract_strided_slice %17 {offsets = [0, 16], sizes = [8, 8], strides = [1, 1]} : vector<8x32xf32> to vector<8x8xf32>
    %26 = vector.extract_strided_slice %18 {offsets = [0, 16], sizes = [8, 8], strides = [1, 1]} : vector<8x32xf32> to vector<8x8xf32>
    %cst_17 = arith.constant dense<0.000000e+00> : vector<8x8xf32>
    %27 = tpu.matmul %25, %26, %cst_17 {dimension_numbers = #tpu.dot_dimension_numbers<[1], [1], [0], [0], [0, 0, 1, 0], [], []>} : vector<8x8xf32>, vector<8x8xf32>, vector<8x8xf32> -> vector<8x8xf32>
    %28 = vector.extract_strided_slice %17 {offsets = [0, 24], sizes = [8, 8], strides = [1, 1]} : vector<8x32xf32> to vector<8x8xf32>
    %29 = vector.extract_strided_slice %18 {offsets = [0, 24], sizes = [8, 8], strides = [1, 1]} : vector<8x32xf32> to vector<8x8xf32>
    %cst_18 = arith.constant dense<0.000000e+00> : vector<8x8xf32>
    %30 = tpu.matmul %28, %29, %cst_18 {dimension_numbers = #tpu.dot_dimension_numbers<[1], [1], [0], [0], [0, 0, 1, 0], [], []>} : vector<8x8xf32>, vector<8x8xf32>, vector<8x8xf32> -> vector<8x8xf32>
    %31 = tpu.concatenate %21, %24, %27, %30 in 0 : vector<8x8xf32>, vector<8x8xf32>, vector<8x8xf32>, vector<8x8xf32> -> vector<32x8xf32>
    %cst_19 = arith.constant dense<0xFF800000> : vector<32xf32>
    %32 = vector.multi_reduction <maximumf>, %31, %cst_19 [1] : vector<32x8xf32> to vector<32xf32>
    %33 = vector.shape_cast %32 : vector<32xf32> to vector<32x1xf32>
    %34 = vector.broadcast %33 : vector<32x1xf32> to vector<32x8xf32>
    %35 = arith.subf %31, %34 : vector<32x8xf32>
    %36 = math.exp %35 : vector<32x8xf32>
    %cst_20 = arith.constant dense<0.000000e+00> : vector<32xf32>
    %37 = vector.multi_reduction <add>, %36, %cst_20 [1] : vector<32x8xf32> to vector<32xf32>
    %38 = vector.shape_cast %37 : vector<32xf32> to vector<32x1xf32>
    %39 = vector.broadcast %38 : vector<32x1xf32> to vector<32x8xf32>
    %40 = arith.divf %36, %39 : vector<32x8xf32>
    %41 = vector.extract_strided_slice %40 {offsets = [0, 0], sizes = [8, 8], strides = [1, 1]} : vector<32x8xf32> to vector<8x8xf32>
    %42 = vector.extract_strided_slice %16 {offsets = [0, 0], sizes = [8, 8], strides = [1, 1]} : vector<8x32xf32> to vector<8x8xf32>
    %cst_21 = arith.constant dense<0.000000e+00> : vector<8x8xf32>
    %43 = tpu.matmul %41, %42, %cst_21 {dimension_numbers = #tpu.dot_dimension_numbers<[1], [0], [0], [1], [0, 0, 1, 1], [], []>} : vector<8x8xf32>, vector<8x8xf32>, vector<8x8xf32> -> vector<8x8xf32>
    %44 = vector.extract_strided_slice %40 {offsets = [8, 0], sizes = [8, 8], strides = [1, 1]} : vector<32x8xf32> to vector<8x8xf32>
    %45 = vector.extract_strided_slice %16 {offsets = [0, 8], sizes = [8, 8], strides = [1, 1]} : vector<8x32xf32> to vector<8x8xf32>
    %cst_22 = arith.constant dense<0.000000e+00> : vector<8x8xf32>
    %46 = tpu.matmul %44, %45, %cst_22 {dimension_numbers = #tpu.dot_dimension_numbers<[1], [0], [0], [1], [0, 0, 1, 1], [], []>} : vector<8x8xf32>, vector<8x8xf32>, vector<8x8xf32> -> vector<8x8xf32>
    %47 = vector.extract_strided_slice %40 {offsets = [16, 0], sizes = [8, 8], strides = [1, 1]} : vector<32x8xf32> to vector<8x8xf32>
    %48 = vector.extract_strided_slice %16 {offsets = [0, 16], sizes = [8, 8], strides = [1, 1]} : vector<8x32xf32> to vector<8x8xf32>
    %cst_23 = arith.constant dense<0.000000e+00> : vector<8x8xf32>
    %49 = tpu.matmul %47, %48, %cst_23 {dimension_numbers = #tpu.dot_dimension_numbers<[1], [0], [0], [1], [0, 0, 1, 1], [], []>} : vector<8x8xf32>, vector<8x8xf32>, vector<8x8xf32> -> vector<8x8xf32>
    %50 = vector.extract_strided_slice %40 {offsets = [24, 0], sizes = [8, 8], strides = [1, 1]} : vector<32x8xf32> to vector<8x8xf32>
    %51 = vector.extract_strided_slice %16 {offsets = [0, 24], sizes = [8, 8], strides = [1, 1]} : vector<8x32xf32> to vector<8x8xf32>
    %cst_24 = arith.constant dense<0.000000e+00> : vector<8x8xf32>
    %52 = tpu.matmul %50, %51, %cst_24 {dimension_numbers = #tpu.dot_dimension_numbers<[1], [0], [0], [1], [0, 0, 1, 1], [], []>} : vector<8x8xf32>, vector<8x8xf32>, vector<8x8xf32> -> vector<8x8xf32>
    %53 = tpu.concatenate %43, %46, %49, %52 in 1 : vector<8x8xf32>, vector<8x8xf32>, vector<8x8xf32>, vector<8x8xf32> -> vector<8x32xf32>
    %cst_25 = arith.constant dense<0.000000e+00> : vector<8x32xf32>
    %54 = tpu.matmul %53, %7, %cst_25 {dimension_numbers = #tpu.dot_dimension_numbers<[1], [0], [0], [1], [0, 0, 1, 1], [], []>} : vector<8x32xf32>, vector<32x32xf32>, vector<8x32xf32> -> vector<8x32xf32>
    %c2 = arith.constant 2 : index
    %c0_26 = arith.constant 0 : index
    %55 = vector.load %arg7[%c2, %c0_26] : memref<28x64xf32, #tpu.memory_space<vmem>>, vector<1x32xf32>
    %56 = vector.broadcast %55 : vector<1x32xf32> to vector<8x32xf32>
    %57 = arith.addf %54, %56 : vector<8x32xf32>
    %58 = arith.addf %1, %57 : vector<8x32xf32>
    %c3 = arith.constant 3 : index
    %c0_27 = arith.constant 0 : index
    %59 = vector.load %arg7[%c3, %c0_27] : memref<28x64xf32, #tpu.memory_space<vmem>>, vector<1x32xf32>
    %c4 = arith.constant 4 : index
    %c0_28 = arith.constant 0 : index
    %60 = vector.load %arg7[%c4, %c0_28] : memref<28x64xf32, #tpu.memory_space<vmem>>, vector<1x32xf32>
    %cst_29 = arith.constant dense<0.000000e+00> : vector<8xf32>
    %61 = vector.multi_reduction <add>, %58, %cst_29 [1] : vector<8x32xf32> to vector<8xf32>
    %62 = vector.shape_cast %61 : vector<8xf32> to vector<8x1xf32>
    %cst_30 = arith.constant 3.200000e+01 : f32
    %63 = vector.broadcast %cst_30 : f32 to vector<8x1xf32>
    %64 = arith.divf %62, %63 : vector<8x1xf32>
    %65 = arith.mulf %58, %58 : vector<8x32xf32>
    %cst_31 = arith.constant dense<0.000000e+00> : vector<8xf32>
    %66 = vector.multi_reduction <add>, %65, %cst_31 [1] : vector<8x32xf32> to vector<8xf32>
    %67 = vector.shape_cast %66 : vector<8xf32> to vector<8x1xf32>
    %cst_32 = arith.constant 3.200000e+01 : f32
    %68 = vector.broadcast %cst_32 : f32 to vector<8x1xf32>
    %69 = arith.divf %67, %68 : vector<8x1xf32>
    %70 = arith.mulf %64, %64 : vector<8x1xf32>
    %71 = arith.subf %69, %70 : vector<8x1xf32>
    %cst_33 = arith.constant 0.000000e+00 : f32
    %72 = vector.broadcast %cst_33 : f32 to vector<8x1xf32>
    %73 = arith.maximumf %71, %72 : vector<8x1xf32>
    %74 = vector.broadcast %64 : vector<8x1xf32> to vector<8x32xf32>
    %75 = arith.subf %58, %74 : vector<8x32xf32>
    %cst_34 = arith.constant 9.99999974E-6 : f32
    %76 = vector.broadcast %cst_34 : f32 to vector<8x1xf32>
    %77 = arith.addf %73, %76 : vector<8x1xf32>
    %78 = math.rsqrt %77 : vector<8x1xf32>
    %79 = vector.broadcast %78 : vector<8x1xf32> to vector<8x32xf32>
    %80 = arith.mulf %75, %79 : vector<8x32xf32>
    %81 = vector.broadcast %59 : vector<1x32xf32> to vector<8x32xf32>
    %82 = arith.mulf %80, %81 : vector<8x32xf32>
    %83 = vector.broadcast %60 : vector<1x32xf32> to vector<8x32xf32>
    %84 = arith.addf %82, %83 : vector<8x32xf32>
    %c2_35 = arith.constant 2 : index
    %c0_36 = arith.constant 0 : index
    %c0_37 = arith.constant 0 : index
    %85 = vector.load %arg5[%c2_35, %c0_36, %c0_37] : memref<8x32x32xf32, #tpu.memory_space<vmem>>, vector<1x32x32xf32>
    %86 = vector.shape_cast %85 : vector<1x32x32xf32> to vector<32x32xf32>
    %c3_38 = arith.constant 3 : index
    %c0_39 = arith.constant 0 : index
    %c0_40 = arith.constant 0 : index
    %87 = vector.load %arg5[%c3_38, %c0_39, %c0_40] : memref<8x32x32xf32, #tpu.memory_space<vmem>>, vector<1x32x32xf32>
    %88 = vector.shape_cast %87 : vector<1x32x32xf32> to vector<32x32xf32>
    %c0_41 = arith.constant 0 : index
    %c0_42 = arith.constant 0 : index
    %c0_43 = arith.constant 0 : index
    %89 = vector.load %arg4[%c0_41, %c0_42, %c0_43] : memref<4x64x32xf32, #tpu.memory_space<vmem>>, vector<1x64x32xf32>
    %90 = vector.shape_cast %89 : vector<1x64x32xf32> to vector<64x32xf32>
    %c0_44 = arith.constant 0 : index
    %c0_45 = arith.constant 0 : index
    %c0_46 = arith.constant 0 : index
    %91 = vector.load %arg6[%c0_44, %c0_45, %c0_46] : memref<2x64x1xf32, #tpu.memory_space<vmem>>, vector<1x64x1xf32>
    %92 = vector.shape_cast %91 : vector<1x64x1xf32> to vector<64x1xf32>
    %93 = arith.addf %84, %0 : vector<8x32xf32>
    %cst_47 = arith.constant dense<0.000000e+00> : vector<8x32xf32>
    %94 = tpu.matmul %93, %86, %cst_47 {dimension_numbers = #tpu.dot_dimension_numbers<[1], [0], [0], [1], [0, 0, 1, 1], [], []>} : vector<8x32xf32>, vector<32x32xf32>, vector<8x32xf32> -> vector<8x32xf32>
    %c5 = arith.constant 5 : index
    %c0_48 = arith.constant 0 : index
    %95 = vector.load %arg7[%c5, %c0_48] : memref<28x64xf32, #tpu.memory_space<vmem>>, vector<1x32xf32>
    %96 = vector.broadcast %95 : vector<1x32xf32> to vector<8x32xf32>
    %97 = arith.addf %94, %96 : vector<8x32xf32>
    %c0_49 = arith.constant 0 : index
    %c0_50 = arith.constant 0 : index
    %c0_51 = arith.constant 0 : index
    %98 = vector.load %arg2[%c0_49, %c0_50, %c0_51] : memref<1x32x16xf32, #tpu.memory_space<vmem>>, vector<1x32x16xf32>
    %99 = vector.shape_cast %98 : vector<1x32x16xf32> to vector<32x16xf32>
    %cst_52 = arith.constant dense<0.000000e+00> : vector<64x16xf32>
    %100 = tpu.matmul %90, %99, %cst_52 {dimension_numbers = #tpu.dot_dimension_numbers<[1], [0], [0], [1], [0, 0, 1, 1], [], []>} : vector<64x32xf32>, vector<32x16xf32>, vector<64x16xf32> -> vector<64x16xf32>
    %101 = vector.broadcast %92 : vector<64x1xf32> to vector<64x16xf32>
    %102 = arith.addf %100, %101 : vector<64x16xf32>
    %103 = vector.extract_strided_slice %102 {offsets = [0, 0], sizes = [32, 16], strides = [1, 1]} : vector<64x16xf32> to vector<32x16xf32>
    %104 = vector.extract_strided_slice %102 {offsets = [32, 0], sizes = [32, 16], strides = [1, 1]} : vector<64x16xf32> to vector<32x16xf32>
    %105 = vector.extract_strided_slice %97 {offsets = [0, 0], sizes = [8, 8], strides = [1, 1]} : vector<8x32xf32> to vector<8x8xf32>
    %106 = vector.extract_strided_slice %103 {offsets = [0, 0], sizes = [8, 16], strides = [1, 1]} : vector<32x16xf32> to vector<8x16xf32>
    %cst_53 = arith.constant dense<0.000000e+00> : vector<8x16xf32>
    %107 = tpu.matmul %105, %106, %cst_53 {dimension_numbers = #tpu.dot_dimension_numbers<[1], [0], [0], [1], [0, 0, 1, 1], [], []>} : vector<8x8xf32>, vector<8x16xf32>, vector<8x16xf32> -> vector<8x16xf32>
    %108 = vector.extract_strided_slice %97 {offsets = [0, 8], sizes = [8, 8], strides = [1, 1]} : vector<8x32xf32> to vector<8x8xf32>
    %109 = vector.extract_strided_slice %103 {offsets = [8, 0], sizes = [8, 16], strides = [1, 1]} : vector<32x16xf32> to vector<8x16xf32>
    %cst_54 = arith.constant dense<0.000000e+00> : vector<8x16xf32>
    %110 = tpu.matmul %108, %109, %cst_54 {dimension_numbers = #tpu.dot_dimension_numbers<[1], [0], [0], [1], [0, 0, 1, 1], [], []>} : vector<8x8xf32>, vector<8x16xf32>, vector<8x16xf32> -> vector<8x16xf32>
    %111 = vector.extract_strided_slice %97 {offsets = [0, 16], sizes = [8, 8], strides = [1, 1]} : vector<8x32xf32> to vector<8x8xf32>
    %112 = vector.extract_strided_slice %103 {offsets = [16, 0], sizes = [8, 16], strides = [1, 1]} : vector<32x16xf32> to vector<8x16xf32>
    %cst_55 = arith.constant dense<0.000000e+00> : vector<8x16xf32>
    %113 = tpu.matmul %111, %112, %cst_55 {dimension_numbers = #tpu.dot_dimension_numbers<[1], [0], [0], [1], [0, 0, 1, 1], [], []>} : vector<8x8xf32>, vector<8x16xf32>, vector<8x16xf32> -> vector<8x16xf32>
    %114 = vector.extract_strided_slice %97 {offsets = [0, 24], sizes = [8, 8], strides = [1, 1]} : vector<8x32xf32> to vector<8x8xf32>
    %115 = vector.extract_strided_slice %103 {offsets = [24, 0], sizes = [8, 16], strides = [1, 1]} : vector<32x16xf32> to vector<8x16xf32>
    %cst_56 = arith.constant dense<0.000000e+00> : vector<8x16xf32>
    %116 = tpu.matmul %114, %115, %cst_56 {dimension_numbers = #tpu.dot_dimension_numbers<[1], [0], [0], [1], [0, 0, 1, 1], [], []>} : vector<8x8xf32>, vector<8x16xf32>, vector<8x16xf32> -> vector<8x16xf32>
    %117 = tpu.concatenate %107, %110, %113, %116 in 0 : vector<8x16xf32>, vector<8x16xf32>, vector<8x16xf32>, vector<8x16xf32> -> vector<32x16xf32>
    %cst_57 = arith.constant dense<0xFF800000> : vector<32xf32>
    %118 = vector.multi_reduction <maximumf>, %117, %cst_57 [1] : vector<32x16xf32> to vector<32xf32>
    %119 = vector.shape_cast %118 : vector<32xf32> to vector<32x1xf32>
    %120 = vector.broadcast %119 : vector<32x1xf32> to vector<32x16xf32>
    %121 = arith.subf %117, %120 : vector<32x16xf32>
    %122 = math.exp %121 : vector<32x16xf32>
    %cst_58 = arith.constant dense<0.000000e+00> : vector<32xf32>
    %123 = vector.multi_reduction <add>, %122, %cst_58 [1] : vector<32x16xf32> to vector<32xf32>
    %124 = vector.shape_cast %123 : vector<32xf32> to vector<32x1xf32>
    %125 = vector.broadcast %124 : vector<32x1xf32> to vector<32x16xf32>
    %126 = arith.divf %122, %125 : vector<32x16xf32>
    %127 = vector.extract_strided_slice %126 {offsets = [0, 0], sizes = [8, 16], strides = [1, 1]} : vector<32x16xf32> to vector<8x16xf32>
    %128 = vector.extract_strided_slice %104 {offsets = [0, 0], sizes = [8, 16], strides = [1, 1]} : vector<32x16xf32> to vector<8x16xf32>
    %cst_59 = arith.constant dense<0.000000e+00> : vector<8x8xf32>
    %129 = tpu.matmul %127, %128, %cst_59 {dimension_numbers = #tpu.dot_dimension_numbers<[1], [1], [0], [0], [0, 0, 1, 0], [], []>} : vector<8x16xf32>, vector<8x16xf32>, vector<8x8xf32> -> vector<8x8xf32>
    %130 = vector.extract_strided_slice %126 {offsets = [8, 0], sizes = [8, 16], strides = [1, 1]} : vector<32x16xf32> to vector<8x16xf32>
    %131 = vector.extract_strided_slice %104 {offsets = [8, 0], sizes = [8, 16], strides = [1, 1]} : vector<32x16xf32> to vector<8x16xf32>
    %cst_60 = arith.constant dense<0.000000e+00> : vector<8x8xf32>
    %132 = tpu.matmul %130, %131, %cst_60 {dimension_numbers = #tpu.dot_dimension_numbers<[1], [1], [0], [0], [0, 0, 1, 0], [], []>} : vector<8x16xf32>, vector<8x16xf32>, vector<8x8xf32> -> vector<8x8xf32>
    %133 = vector.extract_strided_slice %126 {offsets = [16, 0], sizes = [8, 16], strides = [1, 1]} : vector<32x16xf32> to vector<8x16xf32>
    %134 = vector.extract_strided_slice %104 {offsets = [16, 0], sizes = [8, 16], strides = [1, 1]} : vector<32x16xf32> to vector<8x16xf32>
    %cst_61 = arith.constant dense<0.000000e+00> : vector<8x8xf32>
    %135 = tpu.matmul %133, %134, %cst_61 {dimension_numbers = #tpu.dot_dimension_numbers<[1], [1], [0], [0], [0, 0, 1, 0], [], []>} : vector<8x16xf32>, vector<8x16xf32>, vector<8x8xf32> -> vector<8x8xf32>
    %136 = vector.extract_strided_slice %126 {offsets = [24, 0], sizes = [8, 16], strides = [1, 1]} : vector<32x16xf32> to vector<8x16xf32>
    %137 = vector.extract_strided_slice %104 {offsets = [24, 0], sizes = [8, 16], strides = [1, 1]} : vector<32x16xf32> to vector<8x16xf32>
    %cst_62 = arith.constant dense<0.000000e+00> : vector<8x8xf32>
    %138 = tpu.matmul %136, %137, %cst_62 {dimension_numbers = #tpu.dot_dimension_numbers<[1], [1], [0], [0], [0, 0, 1, 0], [], []>} : vector<8x16xf32>, vector<8x16xf32>, vector<8x8xf32> -> vector<8x8xf32>
    %139 = tpu.concatenate %129, %132, %135, %138 in 1 : vector<8x8xf32>, vector<8x8xf32>, vector<8x8xf32>, vector<8x8xf32> -> vector<8x32xf32>
    %cst_63 = arith.constant dense<0.000000e+00> : vector<8x32xf32>
    %140 = tpu.matmul %139, %88, %cst_63 {dimension_numbers = #tpu.dot_dimension_numbers<[1], [0], [0], [1], [0, 0, 1, 1], [], []>} : vector<8x32xf32>, vector<32x32xf32>, vector<8x32xf32> -> vector<8x32xf32>
    %c6 = arith.constant 6 : index
    %c0_64 = arith.constant 0 : index
    %141 = vector.load %arg7[%c6, %c0_64] : memref<28x64xf32, #tpu.memory_space<vmem>>, vector<1x32xf32>
    %142 = vector.broadcast %141 : vector<1x32xf32> to vector<8x32xf32>
    %143 = arith.addf %140, %142 : vector<8x32xf32>
    %144 = arith.addf %84, %143 : vector<8x32xf32>
    %c7 = arith.constant 7 : index
    %c0_65 = arith.constant 0 : index
    %145 = vector.load %arg7[%c7, %c0_65] : memref<28x64xf32, #tpu.memory_space<vmem>>, vector<1x32xf32>
    %c8 = arith.constant 8 : index
    %c0_66 = arith.constant 0 : index
    %146 = vector.load %arg7[%c8, %c0_66] : memref<28x64xf32, #tpu.memory_space<vmem>>, vector<1x32xf32>
    %cst_67 = arith.constant dense<0.000000e+00> : vector<8xf32>
    %147 = vector.multi_reduction <add>, %144, %cst_67 [1] : vector<8x32xf32> to vector<8xf32>
    %148 = vector.shape_cast %147 : vector<8xf32> to vector<8x1xf32>
    %cst_68 = arith.constant 3.200000e+01 : f32
    %149 = vector.broadcast %cst_68 : f32 to vector<8x1xf32>
    %150 = arith.divf %148, %149 : vector<8x1xf32>
    %151 = arith.mulf %144, %144 : vector<8x32xf32>
    %cst_69 = arith.constant dense<0.000000e+00> : vector<8xf32>
    %152 = vector.multi_reduction <add>, %151, %cst_69 [1] : vector<8x32xf32> to vector<8xf32>
    %153 = vector.shape_cast %152 : vector<8xf32> to vector<8x1xf32>
    %cst_70 = arith.constant 3.200000e+01 : f32
    %154 = vector.broadcast %cst_70 : f32 to vector<8x1xf32>
    %155 = arith.divf %153, %154 : vector<8x1xf32>
    %156 = arith.mulf %150, %150 : vector<8x1xf32>
    %157 = arith.subf %155, %156 : vector<8x1xf32>
    %cst_71 = arith.constant 0.000000e+00 : f32
    %158 = vector.broadcast %cst_71 : f32 to vector<8x1xf32>
    %159 = arith.maximumf %157, %158 : vector<8x1xf32>
    %160 = vector.broadcast %150 : vector<8x1xf32> to vector<8x32xf32>
    %161 = arith.subf %144, %160 : vector<8x32xf32>
    %cst_72 = arith.constant 9.99999974E-6 : f32
    %162 = vector.broadcast %cst_72 : f32 to vector<8x1xf32>
    %163 = arith.addf %159, %162 : vector<8x1xf32>
    %164 = math.rsqrt %163 : vector<8x1xf32>
    %165 = vector.broadcast %164 : vector<8x1xf32> to vector<8x32xf32>
    %166 = arith.mulf %161, %165 : vector<8x32xf32>
    %167 = vector.broadcast %145 : vector<1x32xf32> to vector<8x32xf32>
    %168 = arith.mulf %166, %167 : vector<8x32xf32>
    %169 = vector.broadcast %146 : vector<1x32xf32> to vector<8x32xf32>
    %170 = arith.addf %168, %169 : vector<8x32xf32>
    %c1_73 = arith.constant 1 : index
    %c0_74 = arith.constant 0 : index
    %c0_75 = arith.constant 0 : index
    %171 = vector.load %arg3[%c1_73, %c0_74, %c0_75] : memref<4x32x64xf32, #tpu.memory_space<vmem>>, vector<1x32x64xf32>
    %172 = vector.shape_cast %171 : vector<1x32x64xf32> to vector<32x64xf32>
    %c1_76 = arith.constant 1 : index
    %c0_77 = arith.constant 0 : index
    %c0_78 = arith.constant 0 : index
    %173 = vector.load %arg4[%c1_76, %c0_77, %c0_78] : memref<4x64x32xf32, #tpu.memory_space<vmem>>, vector<1x64x32xf32>
    %174 = vector.shape_cast %173 : vector<1x64x32xf32> to vector<64x32xf32>
    %cst_79 = arith.constant dense<0.000000e+00> : vector<8x64xf32>
    %175 = tpu.matmul %170, %172, %cst_79 {dimension_numbers = #tpu.dot_dimension_numbers<[1], [0], [0], [1], [0, 0, 1, 1], [], []>} : vector<8x32xf32>, vector<32x64xf32>, vector<8x64xf32> -> vector<8x64xf32>
    %c9 = arith.constant 9 : index
    %c0_80 = arith.constant 0 : index
    %176 = vector.load %arg7[%c9, %c0_80] : memref<28x64xf32, #tpu.memory_space<vmem>>, vector<1x64xf32>
    %177 = vector.broadcast %176 : vector<1x64xf32> to vector<8x64xf32>
    %178 = arith.addf %175, %177 : vector<8x64xf32>
    %cst_81 = arith.constant 0.000000e+00 : f32
    %179 = vector.broadcast %cst_81 : f32 to vector<8x64xf32>
    %180 = arith.maximumf %178, %179 : vector<8x64xf32>
    %cst_82 = arith.constant dense<0.000000e+00> : vector<8x32xf32>
    %181 = tpu.matmul %180, %174, %cst_82 {dimension_numbers = #tpu.dot_dimension_numbers<[1], [0], [0], [1], [0, 0, 1, 1], [], []>} : vector<8x64xf32>, vector<64x32xf32>, vector<8x32xf32> -> vector<8x32xf32>
    %c10 = arith.constant 10 : index
    %c0_83 = arith.constant 0 : index
    %182 = vector.load %arg7[%c10, %c0_83] : memref<28x64xf32, #tpu.memory_space<vmem>>, vector<1x32xf32>
    %183 = vector.broadcast %182 : vector<1x32xf32> to vector<8x32xf32>
    %184 = arith.addf %181, %183 : vector<8x32xf32>
    %185 = arith.addf %170, %184 : vector<8x32xf32>
    %c11 = arith.constant 11 : index
    %c0_84 = arith.constant 0 : index
    %186 = vector.load %arg7[%c11, %c0_84] : memref<28x64xf32, #tpu.memory_space<vmem>>, vector<1x32xf32>
    %c12 = arith.constant 12 : index
    %c0_85 = arith.constant 0 : index
    %187 = vector.load %arg7[%c12, %c0_85] : memref<28x64xf32, #tpu.memory_space<vmem>>, vector<1x32xf32>
    %cst_86 = arith.constant dense<0.000000e+00> : vector<8xf32>
    %188 = vector.multi_reduction <add>, %185, %cst_86 [1] : vector<8x32xf32> to vector<8xf32>
    %189 = vector.shape_cast %188 : vector<8xf32> to vector<8x1xf32>
    %cst_87 = arith.constant 3.200000e+01 : f32
    %190 = vector.broadcast %cst_87 : f32 to vector<8x1xf32>
    %191 = arith.divf %189, %190 : vector<8x1xf32>
    %192 = arith.mulf %185, %185 : vector<8x32xf32>
    %cst_88 = arith.constant dense<0.000000e+00> : vector<8xf32>
    %193 = vector.multi_reduction <add>, %192, %cst_88 [1] : vector<8x32xf32> to vector<8xf32>
    %194 = vector.shape_cast %193 : vector<8xf32> to vector<8x1xf32>
    %cst_89 = arith.constant 3.200000e+01 : f32
    %195 = vector.broadcast %cst_89 : f32 to vector<8x1xf32>
    %196 = arith.divf %194, %195 : vector<8x1xf32>
    %197 = arith.mulf %191, %191 : vector<8x1xf32>
    %198 = arith.subf %196, %197 : vector<8x1xf32>
    %cst_90 = arith.constant 0.000000e+00 : f32
    %199 = vector.broadcast %cst_90 : f32 to vector<8x1xf32>
    %200 = arith.maximumf %198, %199 : vector<8x1xf32>
    %201 = vector.broadcast %191 : vector<8x1xf32> to vector<8x32xf32>
    %202 = arith.subf %185, %201 : vector<8x32xf32>
    %cst_91 = arith.constant 9.99999974E-6 : f32
    %203 = vector.broadcast %cst_91 : f32 to vector<8x1xf32>
    %204 = arith.addf %200, %203 : vector<8x1xf32>
    %205 = math.rsqrt %204 : vector<8x1xf32>
    %206 = vector.broadcast %205 : vector<8x1xf32> to vector<8x32xf32>
    %207 = arith.mulf %202, %206 : vector<8x32xf32>
    %208 = vector.broadcast %186 : vector<1x32xf32> to vector<8x32xf32>
    %209 = arith.mulf %207, %208 : vector<8x32xf32>
    %210 = vector.broadcast %187 : vector<1x32xf32> to vector<8x32xf32>
    %211 = arith.addf %209, %210 : vector<8x32xf32>
    %c2_92 = arith.constant 2 : index
    %c0_93 = arith.constant 0 : index
    %c0_94 = arith.constant 0 : index
    %212 = vector.load %arg3[%c2_92, %c0_93, %c0_94] : memref<4x32x64xf32, #tpu.memory_space<vmem>>, vector<1x32x64xf32>
    %213 = vector.shape_cast %212 : vector<1x32x64xf32> to vector<32x64xf32>
    %c4_95 = arith.constant 4 : index
    %c0_96 = arith.constant 0 : index
    %c0_97 = arith.constant 0 : index
    %214 = vector.load %arg5[%c4_95, %c0_96, %c0_97] : memref<8x32x32xf32, #tpu.memory_space<vmem>>, vector<1x32x32xf32>
    %215 = vector.shape_cast %214 : vector<1x32x32xf32> to vector<32x32xf32>
    %c5_98 = arith.constant 5 : index
    %c0_99 = arith.constant 0 : index
    %c0_100 = arith.constant 0 : index
    %216 = vector.load %arg5[%c5_98, %c0_99, %c0_100] : memref<8x32x32xf32, #tpu.memory_space<vmem>>, vector<1x32x32xf32>
    %217 = vector.shape_cast %216 : vector<1x32x32xf32> to vector<32x32xf32>
    %218 = arith.addf %211, %0 : vector<8x32xf32>
    %cst_101 = arith.constant dense<0.000000e+00> : vector<8x64xf32>
    %219 = tpu.matmul %218, %213, %cst_101 {dimension_numbers = #tpu.dot_dimension_numbers<[1], [0], [0], [1], [0, 0, 1, 1], [], []>} : vector<8x32xf32>, vector<32x64xf32>, vector<8x64xf32> -> vector<8x64xf32>
    %c13 = arith.constant 13 : index
    %c0_102 = arith.constant 0 : index
    %220 = vector.load %arg7[%c13, %c0_102] : memref<28x64xf32, #tpu.memory_space<vmem>>, vector<1x64xf32>
    %221 = vector.broadcast %220 : vector<1x64xf32> to vector<8x64xf32>
    %222 = arith.addf %219, %221 : vector<8x64xf32>
    %cst_103 = arith.constant dense<0.000000e+00> : vector<8x32xf32>
    %223 = tpu.matmul %211, %215, %cst_103 {dimension_numbers = #tpu.dot_dimension_numbers<[1], [0], [0], [1], [0, 0, 1, 1], [], []>} : vector<8x32xf32>, vector<32x32xf32>, vector<8x32xf32> -> vector<8x32xf32>
    %c14 = arith.constant 14 : index
    %c0_104 = arith.constant 0 : index
    %224 = vector.load %arg7[%c14, %c0_104] : memref<28x64xf32, #tpu.memory_space<vmem>>, vector<1x32xf32>
    %225 = vector.broadcast %224 : vector<1x32xf32> to vector<8x32xf32>
    %226 = arith.addf %223, %225 : vector<8x32xf32>
    %227 = vector.extract_strided_slice %222 {offsets = [0, 0], sizes = [8, 32], strides = [1, 1]} : vector<8x64xf32> to vector<8x32xf32>
    %228 = vector.extract_strided_slice %222 {offsets = [0, 32], sizes = [8, 32], strides = [1, 1]} : vector<8x64xf32> to vector<8x32xf32>
    %229 = vector.extract_strided_slice %227 {offsets = [0, 0], sizes = [8, 8], strides = [1, 1]} : vector<8x32xf32> to vector<8x8xf32>
    %230 = vector.extract_strided_slice %228 {offsets = [0, 0], sizes = [8, 8], strides = [1, 1]} : vector<8x32xf32> to vector<8x8xf32>
    %cst_105 = arith.constant dense<0.000000e+00> : vector<8x8xf32>
    %231 = tpu.matmul %229, %230, %cst_105 {dimension_numbers = #tpu.dot_dimension_numbers<[1], [1], [0], [0], [0, 0, 1, 0], [], []>} : vector<8x8xf32>, vector<8x8xf32>, vector<8x8xf32> -> vector<8x8xf32>
    %232 = vector.extract_strided_slice %227 {offsets = [0, 8], sizes = [8, 8], strides = [1, 1]} : vector<8x32xf32> to vector<8x8xf32>
    %233 = vector.extract_strided_slice %228 {offsets = [0, 8], sizes = [8, 8], strides = [1, 1]} : vector<8x32xf32> to vector<8x8xf32>
    %cst_106 = arith.constant dense<0.000000e+00> : vector<8x8xf32>
    %234 = tpu.matmul %232, %233, %cst_106 {dimension_numbers = #tpu.dot_dimension_numbers<[1], [1], [0], [0], [0, 0, 1, 0], [], []>} : vector<8x8xf32>, vector<8x8xf32>, vector<8x8xf32> -> vector<8x8xf32>
    %235 = vector.extract_strided_slice %227 {offsets = [0, 16], sizes = [8, 8], strides = [1, 1]} : vector<8x32xf32> to vector<8x8xf32>
    %236 = vector.extract_strided_slice %228 {offsets = [0, 16], sizes = [8, 8], strides = [1, 1]} : vector<8x32xf32> to vector<8x8xf32>
    %cst_107 = arith.constant dense<0.000000e+00> : vector<8x8xf32>
    %237 = tpu.matmul %235, %236, %cst_107 {dimension_numbers = #tpu.dot_dimension_numbers<[1], [1], [0], [0], [0, 0, 1, 0], [], []>} : vector<8x8xf32>, vector<8x8xf32>, vector<8x8xf32> -> vector<8x8xf32>
    %238 = vector.extract_strided_slice %227 {offsets = [0, 24], sizes = [8, 8], strides = [1, 1]} : vector<8x32xf32> to vector<8x8xf32>
    %239 = vector.extract_strided_slice %228 {offsets = [0, 24], sizes = [8, 8], strides = [1, 1]} : vector<8x32xf32> to vector<8x8xf32>
    %cst_108 = arith.constant dense<0.000000e+00> : vector<8x8xf32>
    %240 = tpu.matmul %238, %239, %cst_108 {dimension_numbers = #tpu.dot_dimension_numbers<[1], [1], [0], [0], [0, 0, 1, 0], [], []>} : vector<8x8xf32>, vector<8x8xf32>, vector<8x8xf32> -> vector<8x8xf32>
    %241 = tpu.concatenate %231, %234, %237, %240 in 0 : vector<8x8xf32>, vector<8x8xf32>, vector<8x8xf32>, vector<8x8xf32> -> vector<32x8xf32>
    %cst_109 = arith.constant dense<0xFF800000> : vector<32xf32>
    %242 = vector.multi_reduction <maximumf>, %241, %cst_109 [1] : vector<32x8xf32> to vector<32xf32>
    %243 = vector.shape_cast %242 : vector<32xf32> to vector<32x1xf32>
    %244 = vector.broadcast %243 : vector<32x1xf32> to vector<32x8xf32>
    %245 = arith.subf %241, %244 : vector<32x8xf32>
    %246 = math.exp %245 : vector<32x8xf32>
    %cst_110 = arith.constant dense<0.000000e+00> : vector<32xf32>
    %247 = vector.multi_reduction <add>, %246, %cst_110 [1] : vector<32x8xf32> to vector<32xf32>
    %248 = vector.shape_cast %247 : vector<32xf32> to vector<32x1xf32>
    %249 = vector.broadcast %248 : vector<32x1xf32> to vector<32x8xf32>
    %250 = arith.divf %246, %249 : vector<32x8xf32>
    %251 = vector.extract_strided_slice %250 {offsets = [0, 0], sizes = [8, 8], strides = [1, 1]} : vector<32x8xf32> to vector<8x8xf32>
    %252 = vector.extract_strided_slice %226 {offsets = [0, 0], sizes = [8, 8], strides = [1, 1]} : vector<8x32xf32> to vector<8x8xf32>
    %cst_111 = arith.constant dense<0.000000e+00> : vector<8x8xf32>
    %253 = tpu.matmul %251, %252, %cst_111 {dimension_numbers = #tpu.dot_dimension_numbers<[1], [0], [0], [1], [0, 0, 1, 1], [], []>} : vector<8x8xf32>, vector<8x8xf32>, vector<8x8xf32> -> vector<8x8xf32>
    %254 = vector.extract_strided_slice %250 {offsets = [8, 0], sizes = [8, 8], strides = [1, 1]} : vector<32x8xf32> to vector<8x8xf32>
    %255 = vector.extract_strided_slice %226 {offsets = [0, 8], sizes = [8, 8], strides = [1, 1]} : vector<8x32xf32> to vector<8x8xf32>
    %cst_112 = arith.constant dense<0.000000e+00> : vector<8x8xf32>
    %256 = tpu.matmul %254, %255, %cst_112 {dimension_numbers = #tpu.dot_dimension_numbers<[1], [0], [0], [1], [0, 0, 1, 1], [], []>} : vector<8x8xf32>, vector<8x8xf32>, vector<8x8xf32> -> vector<8x8xf32>
    %257 = vector.extract_strided_slice %250 {offsets = [16, 0], sizes = [8, 8], strides = [1, 1]} : vector<32x8xf32> to vector<8x8xf32>
    %258 = vector.extract_strided_slice %226 {offsets = [0, 16], sizes = [8, 8], strides = [1, 1]} : vector<8x32xf32> to vector<8x8xf32>
    %cst_113 = arith.constant dense<0.000000e+00> : vector<8x8xf32>
    %259 = tpu.matmul %257, %258, %cst_113 {dimension_numbers = #tpu.dot_dimension_numbers<[1], [0], [0], [1], [0, 0, 1, 1], [], []>} : vector<8x8xf32>, vector<8x8xf32>, vector<8x8xf32> -> vector<8x8xf32>
    %260 = vector.extract_strided_slice %250 {offsets = [24, 0], sizes = [8, 8], strides = [1, 1]} : vector<32x8xf32> to vector<8x8xf32>
    %261 = vector.extract_strided_slice %226 {offsets = [0, 24], sizes = [8, 8], strides = [1, 1]} : vector<8x32xf32> to vector<8x8xf32>
    %cst_114 = arith.constant dense<0.000000e+00> : vector<8x8xf32>
    %262 = tpu.matmul %260, %261, %cst_114 {dimension_numbers = #tpu.dot_dimension_numbers<[1], [0], [0], [1], [0, 0, 1, 1], [], []>} : vector<8x8xf32>, vector<8x8xf32>, vector<8x8xf32> -> vector<8x8xf32>
    %263 = tpu.concatenate %253, %256, %259, %262 in 1 : vector<8x8xf32>, vector<8x8xf32>, vector<8x8xf32>, vector<8x8xf32> -> vector<8x32xf32>
    %cst_115 = arith.constant dense<0.000000e+00> : vector<8x32xf32>
    %264 = tpu.matmul %263, %217, %cst_115 {dimension_numbers = #tpu.dot_dimension_numbers<[1], [0], [0], [1], [0, 0, 1, 1], [], []>} : vector<8x32xf32>, vector<32x32xf32>, vector<8x32xf32> -> vector<8x32xf32>
    %c15 = arith.constant 15 : index
    %c0_116 = arith.constant 0 : index
    %265 = vector.load %arg7[%c15, %c0_116] : memref<28x64xf32, #tpu.memory_space<vmem>>, vector<1x32xf32>
    %266 = vector.broadcast %265 : vector<1x32xf32> to vector<8x32xf32>
    %267 = arith.addf %264, %266 : vector<8x32xf32>
    %268 = arith.addf %211, %267 : vector<8x32xf32>
    %c16 = arith.constant 16 : index
    %c0_117 = arith.constant 0 : index
    %269 = vector.load %arg7[%c16, %c0_117] : memref<28x64xf32, #tpu.memory_space<vmem>>, vector<1x32xf32>
    %c17 = arith.constant 17 : index
    %c0_118 = arith.constant 0 : index
    %270 = vector.load %arg7[%c17, %c0_118] : memref<28x64xf32, #tpu.memory_space<vmem>>, vector<1x32xf32>
    %cst_119 = arith.constant dense<0.000000e+00> : vector<8xf32>
    %271 = vector.multi_reduction <add>, %268, %cst_119 [1] : vector<8x32xf32> to vector<8xf32>
    %272 = vector.shape_cast %271 : vector<8xf32> to vector<8x1xf32>
    %cst_120 = arith.constant 3.200000e+01 : f32
    %273 = vector.broadcast %cst_120 : f32 to vector<8x1xf32>
    %274 = arith.divf %272, %273 : vector<8x1xf32>
    %275 = arith.mulf %268, %268 : vector<8x32xf32>
    %cst_121 = arith.constant dense<0.000000e+00> : vector<8xf32>
    %276 = vector.multi_reduction <add>, %275, %cst_121 [1] : vector<8x32xf32> to vector<8xf32>
    %277 = vector.shape_cast %276 : vector<8xf32> to vector<8x1xf32>
    %cst_122 = arith.constant 3.200000e+01 : f32
    %278 = vector.broadcast %cst_122 : f32 to vector<8x1xf32>
    %279 = arith.divf %277, %278 : vector<8x1xf32>
    %280 = arith.mulf %274, %274 : vector<8x1xf32>
    %281 = arith.subf %279, %280 : vector<8x1xf32>
    %cst_123 = arith.constant 0.000000e+00 : f32
    %282 = vector.broadcast %cst_123 : f32 to vector<8x1xf32>
    %283 = arith.maximumf %281, %282 : vector<8x1xf32>
    %284 = vector.broadcast %274 : vector<8x1xf32> to vector<8x32xf32>
    %285 = arith.subf %268, %284 : vector<8x32xf32>
    %cst_124 = arith.constant 9.99999974E-6 : f32
    %286 = vector.broadcast %cst_124 : f32 to vector<8x1xf32>
    %287 = arith.addf %283, %286 : vector<8x1xf32>
    %288 = math.rsqrt %287 : vector<8x1xf32>
    %289 = vector.broadcast %288 : vector<8x1xf32> to vector<8x32xf32>
    %290 = arith.mulf %285, %289 : vector<8x32xf32>
    %291 = vector.broadcast %269 : vector<1x32xf32> to vector<8x32xf32>
    %292 = arith.mulf %290, %291 : vector<8x32xf32>
    %293 = vector.broadcast %270 : vector<1x32xf32> to vector<8x32xf32>
    %294 = arith.addf %292, %293 : vector<8x32xf32>
    %c6_125 = arith.constant 6 : index
    %c0_126 = arith.constant 0 : index
    %c0_127 = arith.constant 0 : index
    %295 = vector.load %arg5[%c6_125, %c0_126, %c0_127] : memref<8x32x32xf32, #tpu.memory_space<vmem>>, vector<1x32x32xf32>
    %296 = vector.shape_cast %295 : vector<1x32x32xf32> to vector<32x32xf32>
    %c7_128 = arith.constant 7 : index
    %c0_129 = arith.constant 0 : index
    %c0_130 = arith.constant 0 : index
    %297 = vector.load %arg5[%c7_128, %c0_129, %c0_130] : memref<8x32x32xf32, #tpu.memory_space<vmem>>, vector<1x32x32xf32>
    %298 = vector.shape_cast %297 : vector<1x32x32xf32> to vector<32x32xf32>
    %c2_131 = arith.constant 2 : index
    %c0_132 = arith.constant 0 : index
    %c0_133 = arith.constant 0 : index
    %299 = vector.load %arg4[%c2_131, %c0_132, %c0_133] : memref<4x64x32xf32, #tpu.memory_space<vmem>>, vector<1x64x32xf32>
    %300 = vector.shape_cast %299 : vector<1x64x32xf32> to vector<64x32xf32>
    %c1_134 = arith.constant 1 : index
    %c0_135 = arith.constant 0 : index
    %c0_136 = arith.constant 0 : index
    %301 = vector.load %arg6[%c1_134, %c0_135, %c0_136] : memref<2x64x1xf32, #tpu.memory_space<vmem>>, vector<1x64x1xf32>
    %302 = vector.shape_cast %301 : vector<1x64x1xf32> to vector<64x1xf32>
    %303 = arith.addf %294, %0 : vector<8x32xf32>
    %cst_137 = arith.constant dense<0.000000e+00> : vector<8x32xf32>
    %304 = tpu.matmul %303, %296, %cst_137 {dimension_numbers = #tpu.dot_dimension_numbers<[1], [0], [0], [1], [0, 0, 1, 1], [], []>} : vector<8x32xf32>, vector<32x32xf32>, vector<8x32xf32> -> vector<8x32xf32>
    %c18 = arith.constant 18 : index
    %c0_138 = arith.constant 0 : index
    %305 = vector.load %arg7[%c18, %c0_138] : memref<28x64xf32, #tpu.memory_space<vmem>>, vector<1x32xf32>
    %306 = vector.broadcast %305 : vector<1x32xf32> to vector<8x32xf32>
    %307 = arith.addf %304, %306 : vector<8x32xf32>
    %c0_139 = arith.constant 0 : index
    %c0_140 = arith.constant 0 : index
    %c0_141 = arith.constant 0 : index
    %308 = vector.load %arg2[%c0_139, %c0_140, %c0_141] : memref<1x32x16xf32, #tpu.memory_space<vmem>>, vector<1x32x16xf32>
    %309 = vector.shape_cast %308 : vector<1x32x16xf32> to vector<32x16xf32>
    %cst_142 = arith.constant dense<0.000000e+00> : vector<64x16xf32>
    %310 = tpu.matmul %300, %309, %cst_142 {dimension_numbers = #tpu.dot_dimension_numbers<[1], [0], [0], [1], [0, 0, 1, 1], [], []>} : vector<64x32xf32>, vector<32x16xf32>, vector<64x16xf32> -> vector<64x16xf32>
    %311 = vector.broadcast %302 : vector<64x1xf32> to vector<64x16xf32>
    %312 = arith.addf %310, %311 : vector<64x16xf32>
    %313 = vector.extract_strided_slice %312 {offsets = [0, 0], sizes = [32, 16], strides = [1, 1]} : vector<64x16xf32> to vector<32x16xf32>
    %314 = vector.extract_strided_slice %312 {offsets = [32, 0], sizes = [32, 16], strides = [1, 1]} : vector<64x16xf32> to vector<32x16xf32>
    %315 = vector.extract_strided_slice %307 {offsets = [0, 0], sizes = [8, 8], strides = [1, 1]} : vector<8x32xf32> to vector<8x8xf32>
    %316 = vector.extract_strided_slice %313 {offsets = [0, 0], sizes = [8, 16], strides = [1, 1]} : vector<32x16xf32> to vector<8x16xf32>
    %cst_143 = arith.constant dense<0.000000e+00> : vector<8x16xf32>
    %317 = tpu.matmul %315, %316, %cst_143 {dimension_numbers = #tpu.dot_dimension_numbers<[1], [0], [0], [1], [0, 0, 1, 1], [], []>} : vector<8x8xf32>, vector<8x16xf32>, vector<8x16xf32> -> vector<8x16xf32>
    %318 = vector.extract_strided_slice %307 {offsets = [0, 8], sizes = [8, 8], strides = [1, 1]} : vector<8x32xf32> to vector<8x8xf32>
    %319 = vector.extract_strided_slice %313 {offsets = [8, 0], sizes = [8, 16], strides = [1, 1]} : vector<32x16xf32> to vector<8x16xf32>
    %cst_144 = arith.constant dense<0.000000e+00> : vector<8x16xf32>
    %320 = tpu.matmul %318, %319, %cst_144 {dimension_numbers = #tpu.dot_dimension_numbers<[1], [0], [0], [1], [0, 0, 1, 1], [], []>} : vector<8x8xf32>, vector<8x16xf32>, vector<8x16xf32> -> vector<8x16xf32>
    %321 = vector.extract_strided_slice %307 {offsets = [0, 16], sizes = [8, 8], strides = [1, 1]} : vector<8x32xf32> to vector<8x8xf32>
    %322 = vector.extract_strided_slice %313 {offsets = [16, 0], sizes = [8, 16], strides = [1, 1]} : vector<32x16xf32> to vector<8x16xf32>
    %cst_145 = arith.constant dense<0.000000e+00> : vector<8x16xf32>
    %323 = tpu.matmul %321, %322, %cst_145 {dimension_numbers = #tpu.dot_dimension_numbers<[1], [0], [0], [1], [0, 0, 1, 1], [], []>} : vector<8x8xf32>, vector<8x16xf32>, vector<8x16xf32> -> vector<8x16xf32>
    %324 = vector.extract_strided_slice %307 {offsets = [0, 24], sizes = [8, 8], strides = [1, 1]} : vector<8x32xf32> to vector<8x8xf32>
    %325 = vector.extract_strided_slice %313 {offsets = [24, 0], sizes = [8, 16], strides = [1, 1]} : vector<32x16xf32> to vector<8x16xf32>
    %cst_146 = arith.constant dense<0.000000e+00> : vector<8x16xf32>
    %326 = tpu.matmul %324, %325, %cst_146 {dimension_numbers = #tpu.dot_dimension_numbers<[1], [0], [0], [1], [0, 0, 1, 1], [], []>} : vector<8x8xf32>, vector<8x16xf32>, vector<8x16xf32> -> vector<8x16xf32>
    %327 = tpu.concatenate %317, %320, %323, %326 in 0 : vector<8x16xf32>, vector<8x16xf32>, vector<8x16xf32>, vector<8x16xf32> -> vector<32x16xf32>
    %cst_147 = arith.constant dense<0xFF800000> : vector<32xf32>
    %328 = vector.multi_reduction <maximumf>, %327, %cst_147 [1] : vector<32x16xf32> to vector<32xf32>
    %329 = vector.shape_cast %328 : vector<32xf32> to vector<32x1xf32>
    %330 = vector.broadcast %329 : vector<32x1xf32> to vector<32x16xf32>
    %331 = arith.subf %327, %330 : vector<32x16xf32>
    %332 = math.exp %331 : vector<32x16xf32>
    %cst_148 = arith.constant dense<0.000000e+00> : vector<32xf32>
    %333 = vector.multi_reduction <add>, %332, %cst_148 [1] : vector<32x16xf32> to vector<32xf32>
    %334 = vector.shape_cast %333 : vector<32xf32> to vector<32x1xf32>
    %335 = vector.broadcast %334 : vector<32x1xf32> to vector<32x16xf32>
    %336 = arith.divf %332, %335 : vector<32x16xf32>
    %337 = vector.extract_strided_slice %336 {offsets = [0, 0], sizes = [8, 16], strides = [1, 1]} : vector<32x16xf32> to vector<8x16xf32>
    %338 = vector.extract_strided_slice %314 {offsets = [0, 0], sizes = [8, 16], strides = [1, 1]} : vector<32x16xf32> to vector<8x16xf32>
    %cst_149 = arith.constant dense<0.000000e+00> : vector<8x8xf32>
    %339 = tpu.matmul %337, %338, %cst_149 {dimension_numbers = #tpu.dot_dimension_numbers<[1], [1], [0], [0], [0, 0, 1, 0], [], []>} : vector<8x16xf32>, vector<8x16xf32>, vector<8x8xf32> -> vector<8x8xf32>
    %340 = vector.extract_strided_slice %336 {offsets = [8, 0], sizes = [8, 16], strides = [1, 1]} : vector<32x16xf32> to vector<8x16xf32>
    %341 = vector.extract_strided_slice %314 {offsets = [8, 0], sizes = [8, 16], strides = [1, 1]} : vector<32x16xf32> to vector<8x16xf32>
    %cst_150 = arith.constant dense<0.000000e+00> : vector<8x8xf32>
    %342 = tpu.matmul %340, %341, %cst_150 {dimension_numbers = #tpu.dot_dimension_numbers<[1], [1], [0], [0], [0, 0, 1, 0], [], []>} : vector<8x16xf32>, vector<8x16xf32>, vector<8x8xf32> -> vector<8x8xf32>
    %343 = vector.extract_strided_slice %336 {offsets = [16, 0], sizes = [8, 16], strides = [1, 1]} : vector<32x16xf32> to vector<8x16xf32>
    %344 = vector.extract_strided_slice %314 {offsets = [16, 0], sizes = [8, 16], strides = [1, 1]} : vector<32x16xf32> to vector<8x16xf32>
    %cst_151 = arith.constant dense<0.000000e+00> : vector<8x8xf32>
    %345 = tpu.matmul %343, %344, %cst_151 {dimension_numbers = #tpu.dot_dimension_numbers<[1], [1], [0], [0], [0, 0, 1, 0], [], []>} : vector<8x16xf32>, vector<8x16xf32>, vector<8x8xf32> -> vector<8x8xf32>
    %346 = vector.extract_strided_slice %336 {offsets = [24, 0], sizes = [8, 16], strides = [1, 1]} : vector<32x16xf32> to vector<8x16xf32>
    %347 = vector.extract_strided_slice %314 {offsets = [24, 0], sizes = [8, 16], strides = [1, 1]} : vector<32x16xf32> to vector<8x16xf32>
    %cst_152 = arith.constant dense<0.000000e+00> : vector<8x8xf32>
    %348 = tpu.matmul %346, %347, %cst_152 {dimension_numbers = #tpu.dot_dimension_numbers<[1], [1], [0], [0], [0, 0, 1, 0], [], []>} : vector<8x16xf32>, vector<8x16xf32>, vector<8x8xf32> -> vector<8x8xf32>
    %349 = tpu.concatenate %339, %342, %345, %348 in 1 : vector<8x8xf32>, vector<8x8xf32>, vector<8x8xf32>, vector<8x8xf32> -> vector<8x32xf32>
    %350 = vector.extract_strided_slice %336 {offsets = [0, 0], sizes = [8, 16], strides = [1, 1]} : vector<32x16xf32> to vector<8x16xf32>
    %351 = vector.extract_strided_slice %336 {offsets = [8, 0], sizes = [8, 16], strides = [1, 1]} : vector<32x16xf32> to vector<8x16xf32>
    %352 = arith.addf %350, %351 : vector<8x16xf32>
    %353 = vector.extract_strided_slice %336 {offsets = [16, 0], sizes = [8, 16], strides = [1, 1]} : vector<32x16xf32> to vector<8x16xf32>
    %354 = arith.addf %352, %353 : vector<8x16xf32>
    %355 = vector.extract_strided_slice %336 {offsets = [24, 0], sizes = [8, 16], strides = [1, 1]} : vector<32x16xf32> to vector<8x16xf32>
    %356 = arith.addf %354, %355 : vector<8x16xf32>
    %cst_153 = arith.constant 2.500000e-01 : f32
    %357 = vector.broadcast %cst_153 : f32 to vector<8x16xf32>
    %358 = arith.mulf %356, %357 : vector<8x16xf32>
    %cst_154 = arith.constant dense<0.000000e+00> : vector<8x32xf32>
    %359 = tpu.matmul %349, %298, %cst_154 {dimension_numbers = #tpu.dot_dimension_numbers<[1], [0], [0], [1], [0, 0, 1, 1], [], []>} : vector<8x32xf32>, vector<32x32xf32>, vector<8x32xf32> -> vector<8x32xf32>
    %c19 = arith.constant 19 : index
    %c0_155 = arith.constant 0 : index
    %360 = vector.load %arg7[%c19, %c0_155] : memref<28x64xf32, #tpu.memory_space<vmem>>, vector<1x32xf32>
    %361 = vector.broadcast %360 : vector<1x32xf32> to vector<8x32xf32>
    %362 = arith.addf %359, %361 : vector<8x32xf32>
    %363 = arith.addf %294, %362 : vector<8x32xf32>
    %c20 = arith.constant 20 : index
    %c0_156 = arith.constant 0 : index
    %364 = vector.load %arg7[%c20, %c0_156] : memref<28x64xf32, #tpu.memory_space<vmem>>, vector<1x32xf32>
    %c21 = arith.constant 21 : index
    %c0_157 = arith.constant 0 : index
    %365 = vector.load %arg7[%c21, %c0_157] : memref<28x64xf32, #tpu.memory_space<vmem>>, vector<1x32xf32>
    %cst_158 = arith.constant dense<0.000000e+00> : vector<8xf32>
    %366 = vector.multi_reduction <add>, %363, %cst_158 [1] : vector<8x32xf32> to vector<8xf32>
    %367 = vector.shape_cast %366 : vector<8xf32> to vector<8x1xf32>
    %cst_159 = arith.constant 3.200000e+01 : f32
    %368 = vector.broadcast %cst_159 : f32 to vector<8x1xf32>
    %369 = arith.divf %367, %368 : vector<8x1xf32>
    %370 = arith.mulf %363, %363 : vector<8x32xf32>
    %cst_160 = arith.constant dense<0.000000e+00> : vector<8xf32>
    %371 = vector.multi_reduction <add>, %370, %cst_160 [1] : vector<8x32xf32> to vector<8xf32>
    %372 = vector.shape_cast %371 : vector<8xf32> to vector<8x1xf32>
    %cst_161 = arith.constant 3.200000e+01 : f32
    %373 = vector.broadcast %cst_161 : f32 to vector<8x1xf32>
    %374 = arith.divf %372, %373 : vector<8x1xf32>
    %375 = arith.mulf %369, %369 : vector<8x1xf32>
    %376 = arith.subf %374, %375 : vector<8x1xf32>
    %cst_162 = arith.constant 0.000000e+00 : f32
    %377 = vector.broadcast %cst_162 : f32 to vector<8x1xf32>
    %378 = arith.maximumf %376, %377 : vector<8x1xf32>
    %379 = vector.broadcast %369 : vector<8x1xf32> to vector<8x32xf32>
    %380 = arith.subf %363, %379 : vector<8x32xf32>
    %cst_163 = arith.constant 9.99999974E-6 : f32
    %381 = vector.broadcast %cst_163 : f32 to vector<8x1xf32>
    %382 = arith.addf %378, %381 : vector<8x1xf32>
    %383 = math.rsqrt %382 : vector<8x1xf32>
    %384 = vector.broadcast %383 : vector<8x1xf32> to vector<8x32xf32>
    %385 = arith.mulf %380, %384 : vector<8x32xf32>
    %386 = vector.broadcast %364 : vector<1x32xf32> to vector<8x32xf32>
    %387 = arith.mulf %385, %386 : vector<8x32xf32>
    %388 = vector.broadcast %365 : vector<1x32xf32> to vector<8x32xf32>
    %389 = arith.addf %387, %388 : vector<8x32xf32>
    %c3_164 = arith.constant 3 : index
    %c0_165 = arith.constant 0 : index
    %c0_166 = arith.constant 0 : index
    %390 = vector.load %arg3[%c3_164, %c0_165, %c0_166] : memref<4x32x64xf32, #tpu.memory_space<vmem>>, vector<1x32x64xf32>
    %391 = vector.shape_cast %390 : vector<1x32x64xf32> to vector<32x64xf32>
    %c3_167 = arith.constant 3 : index
    %c0_168 = arith.constant 0 : index
    %c0_169 = arith.constant 0 : index
    %392 = vector.load %arg4[%c3_167, %c0_168, %c0_169] : memref<4x64x32xf32, #tpu.memory_space<vmem>>, vector<1x64x32xf32>
    %393 = vector.shape_cast %392 : vector<1x64x32xf32> to vector<64x32xf32>
    %cst_170 = arith.constant dense<0.000000e+00> : vector<8x64xf32>
    %394 = tpu.matmul %389, %391, %cst_170 {dimension_numbers = #tpu.dot_dimension_numbers<[1], [0], [0], [1], [0, 0, 1, 1], [], []>} : vector<8x32xf32>, vector<32x64xf32>, vector<8x64xf32> -> vector<8x64xf32>
    %c22 = arith.constant 22 : index
    %c0_171 = arith.constant 0 : index
    %395 = vector.load %arg7[%c22, %c0_171] : memref<28x64xf32, #tpu.memory_space<vmem>>, vector<1x64xf32>
    %396 = vector.broadcast %395 : vector<1x64xf32> to vector<8x64xf32>
    %397 = arith.addf %394, %396 : vector<8x64xf32>
    %cst_172 = arith.constant 0.000000e+00 : f32
    %398 = vector.broadcast %cst_172 : f32 to vector<8x64xf32>
    %399 = arith.maximumf %397, %398 : vector<8x64xf32>
    %cst_173 = arith.constant dense<0.000000e+00> : vector<8x32xf32>
    %400 = tpu.matmul %399, %393, %cst_173 {dimension_numbers = #tpu.dot_dimension_numbers<[1], [0], [0], [1], [0, 0, 1, 1], [], []>} : vector<8x64xf32>, vector<64x32xf32>, vector<8x32xf32> -> vector<8x32xf32>
    %c23 = arith.constant 23 : index
    %c0_174 = arith.constant 0 : index
    %401 = vector.load %arg7[%c23, %c0_174] : memref<28x64xf32, #tpu.memory_space<vmem>>, vector<1x32xf32>
    %402 = vector.broadcast %401 : vector<1x32xf32> to vector<8x32xf32>
    %403 = arith.addf %400, %402 : vector<8x32xf32>
    %404 = arith.addf %389, %403 : vector<8x32xf32>
    %c24 = arith.constant 24 : index
    %c0_175 = arith.constant 0 : index
    %405 = vector.load %arg7[%c24, %c0_175] : memref<28x64xf32, #tpu.memory_space<vmem>>, vector<1x32xf32>
    %c25 = arith.constant 25 : index
    %c0_176 = arith.constant 0 : index
    %406 = vector.load %arg7[%c25, %c0_176] : memref<28x64xf32, #tpu.memory_space<vmem>>, vector<1x32xf32>
    %cst_177 = arith.constant dense<0.000000e+00> : vector<8xf32>
    %407 = vector.multi_reduction <add>, %404, %cst_177 [1] : vector<8x32xf32> to vector<8xf32>
    %408 = vector.shape_cast %407 : vector<8xf32> to vector<8x1xf32>
    %cst_178 = arith.constant 3.200000e+01 : f32
    %409 = vector.broadcast %cst_178 : f32 to vector<8x1xf32>
    %410 = arith.divf %408, %409 : vector<8x1xf32>
    %411 = arith.mulf %404, %404 : vector<8x32xf32>
    %cst_179 = arith.constant dense<0.000000e+00> : vector<8xf32>
    %412 = vector.multi_reduction <add>, %411, %cst_179 [1] : vector<8x32xf32> to vector<8xf32>
    %413 = vector.shape_cast %412 : vector<8xf32> to vector<8x1xf32>
    %cst_180 = arith.constant 3.200000e+01 : f32
    %414 = vector.broadcast %cst_180 : f32 to vector<8x1xf32>
    %415 = arith.divf %413, %414 : vector<8x1xf32>
    %416 = arith.mulf %410, %410 : vector<8x1xf32>
    %417 = arith.subf %415, %416 : vector<8x1xf32>
    %cst_181 = arith.constant 0.000000e+00 : f32
    %418 = vector.broadcast %cst_181 : f32 to vector<8x1xf32>
    %419 = arith.maximumf %417, %418 : vector<8x1xf32>
    %420 = vector.broadcast %410 : vector<8x1xf32> to vector<8x32xf32>
    %421 = arith.subf %404, %420 : vector<8x32xf32>
    %cst_182 = arith.constant 9.99999974E-6 : f32
    %422 = vector.broadcast %cst_182 : f32 to vector<8x1xf32>
    %423 = arith.addf %419, %422 : vector<8x1xf32>
    %424 = math.rsqrt %423 : vector<8x1xf32>
    %425 = vector.broadcast %424 : vector<8x1xf32> to vector<8x32xf32>
    %426 = arith.mulf %421, %425 : vector<8x32xf32>
    %427 = vector.broadcast %405 : vector<1x32xf32> to vector<8x32xf32>
    %428 = arith.mulf %426, %427 : vector<8x32xf32>
    %429 = vector.broadcast %406 : vector<1x32xf32> to vector<8x32xf32>
    %430 = arith.addf %428, %429 : vector<8x32xf32>
    %c26 = arith.constant 26 : index
    %c0_183 = arith.constant 0 : index
    %431 = vector.load %arg7[%c26, %c0_183] : memref<28x64xf32, #tpu.memory_space<vmem>>, vector<1x32xf32>
    %c27 = arith.constant 27 : index
    %c0_184 = arith.constant 0 : index
    %432 = vector.load %arg7[%c27, %c0_184] : memref<28x64xf32, #tpu.memory_space<vmem>>, vector<1x32xf32>
    %cst_185 = arith.constant dense<0.000000e+00> : vector<8xf32>
    %433 = vector.multi_reduction <add>, %430, %cst_185 [1] : vector<8x32xf32> to vector<8xf32>
    %434 = vector.shape_cast %433 : vector<8xf32> to vector<8x1xf32>
    %cst_186 = arith.constant 3.200000e+01 : f32
    %435 = vector.broadcast %cst_186 : f32 to vector<8x1xf32>
    %436 = arith.divf %434, %435 : vector<8x1xf32>
    %437 = arith.mulf %430, %430 : vector<8x32xf32>
    %cst_187 = arith.constant dense<0.000000e+00> : vector<8xf32>
    %438 = vector.multi_reduction <add>, %437, %cst_187 [1] : vector<8x32xf32> to vector<8xf32>
    %439 = vector.shape_cast %438 : vector<8xf32> to vector<8x1xf32>
    %cst_188 = arith.constant 3.200000e+01 : f32
    %440 = vector.broadcast %cst_188 : f32 to vector<8x1xf32>
    %441 = arith.divf %439, %440 : vector<8x1xf32>
    %442 = arith.mulf %436, %436 : vector<8x1xf32>
    %443 = arith.subf %441, %442 : vector<8x1xf32>
    %cst_189 = arith.constant 0.000000e+00 : f32
    %444 = vector.broadcast %cst_189 : f32 to vector<8x1xf32>
    %445 = arith.maximumf %443, %444 : vector<8x1xf32>
    %446 = vector.broadcast %436 : vector<8x1xf32> to vector<8x32xf32>
    %447 = arith.subf %430, %446 : vector<8x32xf32>
    %cst_190 = arith.constant 9.99999974E-6 : f32
    %448 = vector.broadcast %cst_190 : f32 to vector<8x1xf32>
    %449 = arith.addf %445, %448 : vector<8x1xf32>
    %450 = math.rsqrt %449 : vector<8x1xf32>
    %451 = vector.broadcast %450 : vector<8x1xf32> to vector<8x32xf32>
    %452 = arith.mulf %447, %451 : vector<8x32xf32>
    %453 = vector.broadcast %431 : vector<1x32xf32> to vector<8x32xf32>
    %454 = arith.mulf %452, %453 : vector<8x32xf32>
    %455 = vector.broadcast %432 : vector<1x32xf32> to vector<8x32xf32>
    %456 = arith.addf %454, %455 : vector<8x32xf32>
    %c0_191 = arith.constant 0 : index
    %c0_192 = arith.constant 0 : index
    %c0_193 = arith.constant 0 : index
    %457 = vector.load %arg8[%c0_191, %c0_192, %c0_193] : memref<1x8x32xf32, #tpu.memory_space<vmem>>, vector<1x8x32xf32>
    %458 = vector.shape_cast %457 : vector<1x8x32xf32> to vector<8x32xf32>
    %459 = vector.shape_cast %456 : vector<8x32xf32> to vector<1x8x32xf32>
    tpu.vector_store %arg8[%c0_191, %c0_192, %c0_193], %459 {strides = array<i32>} : memref<1x8x32xf32, #tpu.memory_space<vmem>>, vector<1x8x32xf32>,
    %c0_194 = arith.constant 0 : index
    %c0_195 = arith.constant 0 : index
    %c0_196 = arith.constant 0 : index
    %460 = vector.load %arg9[%c0_194, %c0_195, %c0_196] : memref<1x8x16xf32, #tpu.memory_space<vmem>>, vector<1x8x16xf32>
    %461 = vector.shape_cast %460 : vector<1x8x16xf32> to vector<8x16xf32>
    %462 = vector.shape_cast %358 : vector<8x16xf32> to vector<1x8x16xf32>
    tpu.vector_store %arg9[%c0_194, %c0_195, %c0_196], %462 {strides = array<i32>} : memref<1x8x16xf32, #tpu.memory_space<vmem>>, vector<1x8x16xf32>,
    return
  }
  func.func @transform_0(%arg0: i32) -> (i32, i32) {
    %c0_i32 = arith.constant 0 : i32
    %c0_i32_0 = arith.constant 0 : i32
    %c0_i32_1 = arith.constant 0 : i32
    return %c0_i32, %c0_i32_0 : i32, i32
  }
  func.func @transform_1(%arg0: i32) -> (i32, i32, i32) {
    %c0_i32 = arith.constant 0 : i32
    %c0_i32_0 = arith.constant 0 : i32
    %c0_i32_1 = arith.constant 0 : i32
    return %arg0, %c0_i32, %c0_i32_0 : i32, i32, i32
  }
  func.func @transform_2(%arg0: i32) -> (i32, i32, i32) {
    %c0_i32 = arith.constant 0 : i32
    %c0_i32_0 = arith.constant 0 : i32
    %c0_i32_1 = arith.constant 0 : i32
    %c0_i32_2 = arith.constant 0 : i32
    return %c0_i32, %c0_i32_0, %c0_i32_1 : i32, i32, i32
  }
  func.func @transform_3(%arg0: i32) -> (i32, i32, i32) {
    %c0_i32 = arith.constant 0 : i32
    %c0_i32_0 = arith.constant 0 : i32
    %c0_i32_1 = arith.constant 0 : i32
    %c0_i32_2 = arith.constant 0 : i32
    return %c0_i32, %c0_i32_0, %c0_i32_1 : i32, i32, i32
  }
  func.func @transform_4(%arg0: i32) -> (i32, i32, i32) {
    %c0_i32 = arith.constant 0 : i32
    %c0_i32_0 = arith.constant 0 : i32
    %c0_i32_1 = arith.constant 0 : i32
    %c0_i32_2 = arith.constant 0 : i32
    return %c0_i32, %c0_i32_0, %c0_i32_1 : i32, i32, i32
  }
  func.func @transform_5(%arg0: i32) -> (i32, i32, i32) {
    %c0_i32 = arith.constant 0 : i32
    %c0_i32_0 = arith.constant 0 : i32
    %c0_i32_1 = arith.constant 0 : i32
    %c0_i32_2 = arith.constant 0 : i32
    return %c0_i32, %c0_i32_0, %c0_i32_1 : i32, i32, i32
  }
  func.func @transform_6(%arg0: i32) -> (i32, i32) {
    %c0_i32 = arith.constant 0 : i32
    %c0_i32_0 = arith.constant 0 : i32
    %c0_i32_1 = arith.constant 0 : i32
    return %c0_i32, %c0_i32_0 : i32, i32
  }
  func.func @transform_7(%arg0: i32) -> (i32, i32, i32) {
    %c0_i32 = arith.constant 0 : i32
    %c0_i32_0 = arith.constant 0 : i32
    %c0_i32_1 = arith.constant 0 : i32
    return %arg0, %c0_i32, %c0_i32_0 : i32, i32, i32
  }
  func.func @transform_8(%arg0: i32) -> (i32, i32, i32) {
    %c0_i32 = arith.constant 0 : i32
    %c0_i32_0 = arith.constant 0 : i32
    %c0_i32_1 = arith.constant 0 : i32
    return %arg0, %c0_i32, %c0_i32_0 : i32, i32, i32
  }
}

</mosaic_0001>

<llo_original>
// kernel: transformer_forward.1
$region0: #{transformer_forward.1}
  #allocation0 [shape = 'u32[]', space=smem, size = 0x4, offset = 0x4, fixed_abs, tag = 'smem constant byte address 0x4 - core index']
  #allocation1 [shape = 'u32[144,128]{1,0:T(1,128)}', space=vmem, size = 0x12000, scoped, tag = 'internal scratch']
  %s0 = inlined_call_operand.vmem [shape: f32[8,32], index: 0, kind: input, shape index: {}]
  %s1 = inlined_call_operand.vmem [shape: f32[2,32,16], index: 1, kind: input, shape index: {}]
  %s2 = inlined_call_operand.vmem [shape: f32[4,32,64], index: 2, kind: input, shape index: {}]
  %s3 = inlined_call_operand.vmem [shape: f32[4,64,32], index: 3, kind: input, shape index: {}]
  %s4 = inlined_call_operand.vmem [shape: f32[8,32,32], index: 4, kind: input, shape index: {}]
  %s5 = inlined_call_operand.vmem [shape: f32[2,64,1], index: 5, kind: input, shape index: {}]
  %s6 = inlined_call_operand.vmem [shape: f32[28,64], index: 6, kind: input, shape index: {}]
  %s7 = inlined_call_operand.hbm [shape: f32[2,8,32], index: 7, kind: output, shape index: {0}]
  %s8 = inlined_call_operand.hbm [shape: f32[2,8,16], index: 8, kind: output, shape index: {1}]
  %9 = xla_tuple %s7, %s8
  %s10 = sld [smem:[#allocation0]]
  $region69: #{transformer_forward.1} parent=0
    _
  %s12 = ssub.s32 1, %s10
  %s13 = scalar_select 0, %s12, %s10
  $region1: #{transformer_forward.1} parent=0
    #allocation2 [shape = 'u8[8192]{0}', space=vmem, size = 0x2000, scoped, tag = 'output window, operand 0']
    #allocation3 [shape = 's32[2]{0}', space=sflag, size = 0x8, scoped, tag = 'scoped memory for transformer_forward.1']
    #allocation4 [shape = 'u8[8192]{0}', space=vmem, size = 0x2000, scoped, tag = 'output window, operand 1']
    #allocation5 [shape = 's32[2]{0}', space=sflag, size = 0x8, scoped, tag = 'scoped memory for transformer_forward.1']
    %14 = vsyncpa [#allocation3], 0
    %s15 = scalar_lea.sflag [#allocation3], 1
    %16 = vsyncpa %s15, 0
    %17 = vsyncpa [#allocation5], 0
    %s18 = scalar_lea.sflag [#allocation5], 1
    %19 = vsyncpa %s18, 0
    loop: start=0, step=1, limit=4
    $region2: #{transformer_forward.1} parent=1 // loop_pre_header
      _
    $region3: #{transformer_forward.1} parent=1 // loop_header
      %s21 = sphi 0, %s25
      %p22 = scmp.ge.s32.totalorder %s21, 4
      %s29 = sphi 0, %s29
      %s31 = sphi 0, %s29
      %s32 = sphi 0, %s31
      %s46 = sphi 0, %s32
      %s52 = sphi 0, %s54
      %s55 = sphi 0, %s52
      %s56 = sphi 0, %s55
      %s72 = sphi 0, %s56
      %s76 = sphi 0, %s76
      %s78 = sphi 0, %s76
      %s79 = sphi 0, %s78
      %s93 = sphi 0, %s79
      %s97 = sphi 0, %s97
      %s99 = sphi 0, %s97
      %s100 = sphi 0, %s99
      %s114 = sphi 0, %s100
      %s118 = sphi 0, %s118
      %s120 = sphi 0, %s118
      %s121 = sphi 0, %s120
      %s135 = sphi 0, %s121
      %s139 = sphi 0, %s139
      %s141 = sphi 0, %s139
      %s142 = sphi 0, %s141
      %s156 = sphi 0, %s142
      %s160 = sphi 0, %s160
      %s162 = sphi 0, %s160
      %s163 = sphi 0, %s162
      %s177 = sphi 0, %s163
      %s183 = sphi 0, %s185
      %s186 = sphi 0, %s183
      %s187 = sphi 0, %s186
      %s203 = sphi 0, %s187
      %s209 = sphi 0, %s211
      %s212 = sphi 0, %s209
      %s213 = sphi 0, %s212
      %s229 = sphi 0, %s213
    $region4: #{transformer_forward.1} parent=1 // loop_header_branch
      %24 = sbr.rel (%p22) target = $region8
    $region5: #{transformer_forward.1} parent=1 // loop_body
      %s26 = ssub.s32 %s21, 1
      %s27 = ssub.s32 %s21, 2
      %s28 = sadd.s32 %s21, 1
      %s30 = sadd.s32 %s29, 1
      %p33 = scmp.eq.s32.totalorder %s21, 1
      %p34 = scmp.ne.s32.totalorder %s29, %s31
      %p35 = scmp.eq.s32.totalorder %s21, 0
      %p36 = por %p34, %p35
      %p37 = scmp.ne.s32.totalorder %s29, %s31
      %p38 = scmp.eq.s32.totalorder %s26, 1
      %p39 = por %p37, %p38
      %p40 = scmp.ne.s32.totalorder %s31, %s32
      %p41 = scmp.eq.s32.totalorder %s26, 0
      %p42 = por %p40, %p41
      %p43 = scmp.ne.s32.totalorder %s31, %s32
      %p44 = scmp.eq.s32.totalorder %s27, 1
      %p45 = por %p43, %p44
      %p47 = scmp.ne.s32.totalorder %s32, %s46
      %p48 = scmp.eq.s32.totalorder %s27, 0
      %p49 = por %p47, %p48
      %s50 = ssub.s32 %s21, %s28
      %p51 = scmp.eq.s32.totalorder %s50, 0
      %s53 = sadd.s32 %s52, 1
      %s54 = scalar_select %p51, %s52, %s53
      %p57 = pneg %p51
      %p58 = scmp.eq.s32.totalorder %s21, 1
      %p59 = por %p57, %p58
      %p60 = scmp.ne.s32.totalorder %s52, %s55
      %p61 = scmp.eq.s32.totalorder %s21, 0
      %p62 = por %p60, %p61
      %p63 = scmp.ne.s32.totalorder %s52, %s55
      %p64 = scmp.eq.s32.totalorder %s26, 1
      %p65 = por %p63, %p64
      %p66 = scmp.ne.s32.totalorder %s55, %s56
      %p67 = scmp.eq.s32.totalorder %s26, 0
      %p68 = por %p66, %p67
      %p69 = scmp.ne.s32.totalorder %s55, %s56
      %p70 = scmp.eq.s32.totalorder %s27, 1
      %p71 = por %p69, %p70
      %p73 = scmp.ne.s32.totalorder %s56, %s72
      %p74 = scmp.eq.s32.totalorder %s27, 0
      %p75 = por %p73, %p74
      %s77 = sadd.s32 %s76, 1
      %p80 = scmp.eq.s32.totalorder %s21, 1
      %p81 = scmp.ne.s32.totalorder %s76, %s78
      %p82 = scmp.eq.s32.totalorder %s21, 0
      %p83 = por %p81, %p82
      %p84 = scmp.ne.s32.totalorder %s76, %s78
      %p85 = scmp.eq.s32.totalorder %s26, 1
      %p86 = por %p84, %p85
      %p87 = scmp.ne.s32.totalorder %s78, %s79
      %p88 = scmp.eq.s32.totalorder %s26, 0
      %p89 = por %p87, %p88
      %p90 = scmp.ne.s32.totalorder %s78, %s79
      %p91 = scmp.eq.s32.totalorder %s27, 1
      %p92 = por %p90, %p91
      %p94 = scmp.ne.s32.totalorder %s79, %s93
      %p95 = scmp.eq.s32.totalorder %s27, 0
      %p96 = por %p94, %p95
      %s98 = sadd.s32 %s97, 1
      %p101 = scmp.eq.s32.totalorder %s21, 1
      %p102 = scmp.ne.s32.totalorder %s97, %s99
      %p103 = scmp.eq.s32.totalorder %s21, 0
      %p104 = por %p102, %p103
      %p105 = scmp.ne.s32.totalorder %s97, %s99
      %p106 = scmp.eq.s32.totalorder %s26, 1
      %p107 = por %p105, %p106
      %p108 = scmp.ne.s32.totalorder %s99, %s100
      %p109 = scmp.eq.s32.totalorder %s26, 0
      %p110 = por %p108, %p109
      %p111 = scmp.ne.s32.totalorder %s99, %s100
      %p112 = scmp.eq.s32.totalorder %s27, 1
      %p113 = por %p111, %p112
      %p115 = scmp.ne.s32.totalorder %s100, %s114
      %p116 = scmp.eq.s32.totalorder %s27, 0
      %p117 = por %p115, %p116
      %s119 = sadd.s32 %s118, 1
      %p122 = scmp.eq.s32.totalorder %s21, 1
      %p123 = scmp.ne.s32.totalorder %s118, %s120
      %p124 = scmp.eq.s32.totalorder %s21, 0
      %p125 = por %p123, %p124
      %p126 = scmp.ne.s32.totalorder %s118, %s120
      %p127 = scmp.eq.s32.totalorder %s26, 1
      %p128 = por %p126, %p127
      %p129 = scmp.ne.s32.totalorder %s120, %s121
      %p130 = scmp.eq.s32.totalorder %s26, 0
      %p131 = por %p129, %p130
      %p132 = scmp.ne.s32.totalorder %s120, %s121
      %p133 = scmp.eq.s32.totalorder %s27, 1
      %p134 = por %p132, %p133
      %p136 = scmp.ne.s32.totalorder %s121, %s135
      %p137 = scmp.eq.s32.totalorder %s27, 0
      %p138 = por %p136, %p137
      %s140 = sadd.s32 %s139, 1
      %p143 = scmp.eq.s32.totalorder %s21, 1
      %p144 = scmp.ne.s32.totalorder %s139, %s141
      %p145 = scmp.eq.s32.totalorder %s21, 0
      %p146 = por %p144, %p145
      %p147 = scmp.ne.s32.totalorder %s139, %s141
      %p148 = scmp.eq.s32.totalorder %s26, 1
      %p149 = por %p147, %p148
      %p150 = scmp.ne.s32.totalorder %s141, %s142
      %p151 = scmp.eq.s32.totalorder %s26, 0
      %p152 = por %p150, %p151
      %p153 = scmp.ne.s32.totalorder %s141, %s142
      %p154 = scmp.eq.s32.totalorder %s27, 1
      %p155 = por %p153, %p154
      %p157 = scmp.ne.s32.totalorder %s142, %s156
      %p158 = scmp.eq.s32.totalorder %s27, 0
      %p159 = por %p157, %p158
      %s161 = sadd.s32 %s160, 1
      %p164 = scmp.eq.s32.totalorder %s21, 1
      %p165 = scmp.ne.s32.totalorder %s160, %s162
      %p166 = scmp.eq.s32.totalorder %s21, 0
      %p167 = por %p165, %p166
      %p168 = scmp.ne.s32.totalorder %s160, %s162
      %p169 = scmp.eq.s32.totalorder %s26, 1
      %p170 = por %p168, %p169
      %p171 = scmp.ne.s32.totalorder %s162, %s163
      %p172 = scmp.eq.s32.totalorder %s26, 0
      %p173 = por %p171, %p172
      %p174 = scmp.ne.s32.totalorder %s162, %s163
      %p175 = scmp.eq.s32.totalorder %s27, 1
      %p176 = por %p174, %p175
      %p178 = scmp.ne.s32.totalorder %s163, %s177
      %p179 = scmp.eq.s32.totalorder %s27, 0
      %p180 = por %p178, %p179
      %s181 = ssub.s32 %s21, %s28
      %p182 = scmp.eq.s32.totalorder %s181, 0
      %s184 = sadd.s32 %s183, 1
      %s185 = scalar_select %p182, %s183, %s184
      %p188 = pneg %p182
      %p189 = scmp.eq.s32.totalorder %s21, 1
      %p190 = por %p188, %p189
      %p191 = scmp.ne.s32.totalorder %s183, %s186
      %p192 = scmp.eq.s32.totalorder %s21, 0
      %p193 = por %p191, %p192
      %p194 = scmp.ne.s32.totalorder %s183, %s186
      %p195 = scmp.eq.s32.totalorder %s26, 1
      %p196 = por %p194, %p195
      %p197 = scmp.ne.s32.totalorder %s186, %s187
      %p198 = scmp.eq.s32.totalorder %s26, 0
      %p199 = por %p197, %p198
      %p200 = scmp.ne.s32.totalorder %s186, %s187
      %p201 = scmp.eq.s32.totalorder %s27, 1
      %p202 = por %p200, %p201
      %p204 = scmp.ne.s32.totalorder %s187, %s203
      %p205 = scmp.eq.s32.totalorder %s27, 0
      %p206 = por %p204, %p205
      %s207 = ssub.s32 %s21, %s28
      %p208 = scmp.eq.s32.totalorder %s207, 0
      %s210 = sadd.s32 %s209, 1
      %s211 = scalar_select %p208, %s209, %s210
      %p214 = pneg %p208
      %p215 = scmp.eq.s32.totalorder %s21, 1
      %p216 = por %p214, %p215
      %p217 = scmp.ne.s32.totalorder %s209, %s212
      %p218 = scmp.eq.s32.totalorder %s21, 0
      %p219 = por %p217, %p218
      %p220 = scmp.ne.s32.totalorder %s209, %s212
      %p221 = scmp.eq.s32.totalorder %s26, 1
      %p222 = por %p220, %p221
      %p223 = scmp.ne.s32.totalorder %s212, %s213
      %p224 = scmp.eq.s32.totalorder %s26, 0
      %p225 = por %p223, %p224
      %p226 = scmp.ne.s32.totalorder %s212, %s213
      %p227 = scmp.eq.s32.totalorder %s27, 1
      %p228 = por %p226, %p227
      %p230 = scmp.ne.s32.totalorder %s213, %s229
      %p231 = scmp.eq.s32.totalorder %s27, 0
      %p232 = por %p230, %p231
      %p233 = scmp.le.s32.totalorder 1, %s21
      %p234 = scmp.lt.s32.totalorder %s21, 3
      %p235 = pnand %p233, %p234
      %p236 = pneg %p235
      // Predicated region
      $region9: #{transformer_forward.1} parent=5 // pred_check
        _
      $region10: #{transformer_forward.1} parent=5 // pred_check_branch
        %238 = sbr.rel (%p235) target = $region12
      $region11: #{transformer_forward.1} parent=5 // pred_region
        %s239 = ssub.s32 %s21, 1
        // Predicated region
        $region13: #{transformer_forward.1} parent=11 // pred_check
          %p240 = pneg %p42
        $region14: #{transformer_forward.1} parent=11 // pred_check_branch
          %242 = sbr.rel (%p240) target = $region16
        $region15: #{transformer_forward.1} parent=11 // pred_region
          _
        $region16: #{transformer_forward.1} parent=11 // pred_fallthru
          _
        // Predicated region
        $region17: #{transformer_forward.1} parent=11 // pred_check
          %p243 = pneg %p89
        $region18: #{transformer_forward.1} parent=11 // pred_check_branch
          %245 = sbr.rel (%p243) target = $region20
        $region19: #{transformer_forward.1} parent=11 // pred_region
          _
        $region20: #{transformer_forward.1} parent=11 // pred_fallthru
          _
        // Predicated region
        $region21: #{transformer_forward.1} parent=11 // pred_check
          %p246 = pneg %p110
        $region22: #{transformer_forward.1} parent=11 // pred_check_branch
          %248 = sbr.rel (%p246) target = $region24
        $region23: #{transformer_forward.1} parent=11 // pred_region
          _
        $region24: #{transformer_forward.1} parent=11 // pred_fallthru
          _
        // Predicated region
        $region25: #{transformer_forward.1} parent=11 // pred_check
          %p249 = pneg %p131
        $region26: #{transformer_forward.1} parent=11 // pred_check_branch
          %251 = sbr.rel (%p249) target = $region28
        $region27: #{transformer_forward.1} parent=11 // pred_region
          _
        $region28: #{transformer_forward.1} parent=11 // pred_fallthru
          _
        // Predicated region
        $region29: #{transformer_forward.1} parent=11 // pred_check
          %p252 = pneg %p152
        $region30: #{transformer_forward.1} parent=11 // pred_check_branch
          %254 = sbr.rel (%p252) target = $region32
        $region31: #{transformer_forward.1} parent=11 // pred_region
          _
        $region32: #{transformer_forward.1} parent=11 // pred_fallthru
          _
        // Predicated region
        $region33: #{transformer_forward.1} parent=11 // pred_check
          %p255 = pneg %p173
        $region34: #{transformer_forward.1} parent=11 // pred_check_branch
          %257 = sbr.rel (%p255) target = $region36
        $region35: #{transformer_forward.1} parent=11 // pred_region
          _
        $region36: #{transformer_forward.1} parent=11 // pred_fallthru
          _
      $region12: #{transformer_forward.1} parent=5 // pred_fallthru
        _
      %p258 = scmp.lt.s32.totalorder %s21, 2
      // Predicated region
      $region37: #{transformer_forward.1} parent=5 // pred_check
        %p259 = pneg %p258
      $region38: #{transformer_forward.1} parent=5 // pred_check_branch
        %261 = sbr.rel (%p259) target = $region40
      $region39: #{transformer_forward.1} parent=5 // pred_region
        // Predicated region
        $region41: #{transformer_forward.1} parent=39 // pred_check
          %p262 = pneg %p62
        $region42: #{transformer_forward.1} parent=39 // pred_check_branch
          %264 = sbr.rel (%p262) target = $region44
        $region43: #{transformer_forward.1} parent=39 // pred_region
          %p265 = scmp.lt.s32.totalorder %s21, 1
          %s266 = scalar_select %p265, %s21, 1
          %s267 = smul.addr %s266, 4
          %s268 = smul.addr %s267, 8
          %s269 = scalar_lea.vmem %s1, %s268
        $region44: #{transformer_forward.1} parent=39 // pred_fallthru
          _
      $region40: #{transformer_forward.1} parent=5 // pred_fallthru
        _
      %p270 = scmp.le.s32.totalorder 1, %s21
      %p271 = scmp.lt.s32.totalorder %s21, 3
      %p272 = pnand %p270, %p271
      %p273 = pneg %p272
      // Predicated region
      $region45: #{transformer_forward.1} parent=5 // pred_check
        _
      $region46: #{transformer_forward.1} parent=5 // pred_check_branch
        %275 = sbr.rel (%p272) target = $region48
      $region47: #{transformer_forward.1} parent=5 // pred_region
        %s276 = ssub.s32 %s21, 1
        %p277 = pneg %p42
        %p278 = pneg %p39
        %p279 = scmp.lt.s32.totalorder %s26, 1
        %s280 = scalar_select %p279, %s26, 1
        %s281 = smul.addr %s280, 4
        %s282 = smul.addr %s281, 8
        %s283 = scalar_lea.vmem %s1, %s282
        %p284 = pneg %p68
        %p285 = pneg %p65
        %p286 = pneg %p89
        %p287 = pneg %p86
        %p288 = pneg %p110
        %p289 = pneg %p107
        %p290 = pneg %p131
        %p291 = pneg %p128
        %p292 = pneg %p152
        %p293 = pneg %p149
        %p294 = pneg %p173
        %p295 = pneg %p170
        %p296 = pneg %p199
        %p297 = pneg %p196
        %s298 = sand.u32 %s186, 1
        %s299 = scalar_lea.sflag [#allocation3], %s298
        %s300 = sand.u32 %s186, 1
        %s301 = smul.addr %s300, 8
        %s302 = scalar_lea.vmem [#allocation2], %s301
        %p303 = pneg %p225
        %p304 = pneg %p222
        %s305 = sand.u32 %s212, 1
        %s306 = scalar_lea.sflag [#allocation5], %s305
        %s307 = sand.u32 %s212, 1
        %s308 = smul.addr %s307, 8
        %s309 = scalar_lea.vmem [#allocation4], %s308
        %p310 = scmp.lt.s32.totalorder %s26, 1
        %s311 = scalar_select %p310, %s26, 1
        %s312 = smul.addr %s311, 4
        %s313 = smul.addr %s312, 8
        %s314 = scalar_lea.vmem %s1, %s313
        %v315 = vld [vmem:[%s0] sm:$0xff]
        %v316 = vld [vmem:[%s2] sm:$0xff]
        %v317 = vld [vmem:[%s2 + $0x8] sm:$0xff]
        %v318 = vld [vmem:[%s2 + $0x10] sm:$0xff]
        %v319 = vld [vmem:[%s2 + $0x18] sm:$0xff]
        %v320 = vld [vmem:[%s4] sm:$0xff]
        %v321 = vld [vmem:[%s4 + $0x8] sm:$0xff]
        %v322 = vld [vmem:[%s4 + $0x10] sm:$0xff]
        %v323 = vld [vmem:[%s4 + $0x18] sm:$0xff]
        %s324 = scalar_lea.vmem %s4, 32
        %v325 = vld [vmem:[%s324] sm:$0xff]
        %v326 = vld [vmem:[%s324 + $0x8] sm:$0xff]
        %v327 = vld [vmem:[%s324 + $0x10] sm:$0xff]
        %v328 = vld [vmem:[%s324 + $0x18] sm:$0xff]
        %v329 = vadd.f32 %v315, 0.0
        %v330 = vld [vmem:[%s6] sm:$0x1]
        %v331 = vlaneseq
        %v332 = vshrl.u32 %v331, 7
        %v333 = vsub.s32 0, %v332
        %v334 = vrot.slane %v330, %v333
        %vm335 = vcmask 261120
        %v337 = vsel %vm335, %v329, 0
        %339 = vmatprep.subr.mxu0 0.0
        %340 = vmatpush1.msra.mxu0 %v316
        %341 = vmatprep.subr.mxu0 0.0
        %342 = vmatpush1.msra.mxu0 %v317
        %343 = vmatprep.subr.mxu0 0.0
        %344 = vmatpush1.msra.mxu0 %v318
        %345 = vmatprep.subr.mxu0 0.0
        %346 = vmatpush1.msra.mxu0 %v319
        %347 = vmatprep.subr.mxu0 0.0
        %348 = vmatpush1.msra.mxu0 0.0
        %349 = vmatprep.subr.mxu0 0.0
        %350 = vmatpush1.msra.mxu0 0.0
        %351 = vmatprep.subr.mxu0 0.0
        %352 = vmatpush1.msra.mxu0 0.0
        %353 = vmatprep.subr.mxu0 0.0
        %354 = vmatpush1.msra.mxu0 0.0
        %355 = vmatprep.subr.mxu0 0.0
        %356 = vmatpush1.msra.mxu0 0.0
        %357 = vmatprep.subr.mxu0 0.0
        %358 = vmatpush1.msra.mxu0 0.0
        %359 = vmatprep.subr.mxu0 0.0
        %360 = vmatpush1.msra.mxu0 0.0
        %361 = vmatprep.subr.mxu0 0.0
        %362 = vmatpush1.msra.mxu0 0.0
        %363 = vmatprep.subr.mxu0 0.0
        %364 = vmatpush1.msra.mxu0 0.0
        %365 = vmatprep.subr.mxu0 0.0
        %366 = vmatpush1.msra.mxu0 0.0
        %367 = vmatprep.subr.mxu0 0.0
        %368 = vmatpush1.msra.mxu0 0.0
        %369 = vmatprep.subr.mxu0 0.0
        %370 = vmatpush1.msra.mxu0 0.0
        %371 = vmatprep.subr.mxu0 0.0
        %372 = vmatpush1.msra.mxu0 0.0
        %373 = vmatprep.subr.mxu0 0.0
        %374 = vmatpush1.msra.mxu0 0.0
        %375 = vmatprep.subr.mxu0 0.0
        %376 = vmatpush1.msra.mxu0 0.0
        %377 = vmatprep.subr.mxu0 0.0
        %378 = vmatpush1.msra.mxu0 0.0
        %379 = vmatprep.subr.mxu0 0.0
        %380 = vmatpush1.msra.mxu0 0.0
        %381 = vmatprep.subr.mxu0 0.0
        %382 = vmatpush1.msra.mxu0 0.0
        %383 = vmatprep.subr.mxu0 0.0
        %384 = vmatpush1.msra.mxu0 0.0
        %385 = vmatprep.subr.mxu0 0.0
        %386 = vmatpush1.msra.mxu0 0.0
        %387 = vmatprep.subr.mxu0 0.0
        %388 = vmatpush1.msra.mxu0 0.0
        %389 = vmatprep.subr.mxu0 0.0
        %390 = vmatpush1.msra.mxu0 0.0
        %391 = vmatprep.subr.mxu0 0.0
        %392 = vmatpush1.msra.mxu0 0.0
        %393 = vmatprep.subr.mxu0 0.0
        %394 = vmatpush1.msra.mxu0 0.0
        %395 = vmatprep.subr.mxu0 0.0
        %396 = vmatpush1.msra.mxu0 0.0
        %397 = vmatprep.subr.mxu0 0.0
        %398 = vmatpush1.msra.mxu0 0.0
        %399 = vmatprep.subr.mxu0 0.0
        %400 = vmatpush1.msra.mxu0 0.0
        %401 = vmatprep.subr.mxu0 0.0
        %402 = vmatpush1.msra.mxu0 0.0
        %403 = vmatprep.mubr.f32.mxu0 0.0
        %404 = vmatmul.mubr.f32.gmra.mrb[0].mxu0 %v337
        %v405 = vpop.f32.mrb[0].mxu0
        %v406 = vadd.f32 %v334, %v405
        %v407 = vpop.f32.mrb[0].mxu0
        %408 = vdwg.mxu0
        %v409 = vld [vmem:[%s6 + $0x1] sm:$0x1]
        %v410 = vlaneseq
        %v411 = vshrl.u32 %v410, 7
        %v412 = vsub.s32 0, %v411
        %v413 = vrot.slane %v409, %v412
        %v415 = vsel %vm335, 0.0, 0
        %417 = vmatprep.subr.mxu0 0.0
        %418 = vmatpush1.msra.mxu0 %v320
        %419 = vmatprep.subr.mxu0 0.0
        %420 = vmatpush1.msra.mxu0 %v321
        %421 = vmatprep.subr.mxu0 0.0
        %422 = vmatpush1.msra.mxu0 %v322
        %423 = vmatprep.subr.mxu0 0.0
        %424 = vmatpush1.msra.mxu0 %v323
        %425 = vmatprep.subr.mxu0 0.0
        %426 = vmatpush1.msra.mxu0 0.0
        %427 = vmatprep.subr.mxu0 0.0
        %428 = vmatpush1.msra.mxu0 0.0
        %429 = vmatprep.subr.mxu0 0.0
        %430 = vmatpush1.msra.mxu0 0.0
        %431 = vmatprep.subr.mxu0 0.0
        %432 = vmatpush1.msra.mxu0 0.0
        %433 = vmatprep.subr.mxu0 0.0
        %434 = vmatpush1.msra.mxu0 0.0
        %435 = vmatprep.subr.mxu0 0.0
        %436 = vmatpush1.msra.mxu0 0.0
        %437 = vmatprep.subr.mxu0 0.0
        %438 = vmatpush1.msra.mxu0 0.0
        %439 = vmatprep.subr.mxu0 0.0
        %440 = vmatpush1.msra.mxu0 0.0
        %441 = vmatprep.subr.mxu0 0.0
        %442 = vmatpush1.msra.mxu0 0.0
        %443 = vmatprep.subr.mxu0 0.0
        %444 = vmatpush1.msra.mxu0 0.0
        %445 = vmatprep.subr.mxu0 0.0
        %446 = vmatpush1.msra.mxu0 0.0
        %447 = vmatprep.subr.mxu0 0.0
        %448 = vmatpush1.msra.mxu0 0.0
        %449 = vmatprep.subr.mxu0 0.0
        %450 = vmatpush1.msra.mxu0 0.0
        %451 = vmatprep.subr.mxu0 0.0
        %452 = vmatpush1.msra.mxu0 0.0
        %453 = vmatprep.subr.mxu0 0.0
        %454 = vmatpush1.msra.mxu0 0.0
        %455 = vmatprep.subr.mxu0 0.0
        %456 = vmatpush1.msra.mxu0 0.0
        %457 = vmatprep.subr.mxu0 0.0
        %458 = vmatpush1.msra.mxu0 0.0
        %459 = vmatprep.subr.mxu0 0.0
        %460 = vmatpush1.msra.mxu0 0.0
        %461 = vmatprep.subr.mxu0 0.0
        %462 = vmatpush1.msra.mxu0 0.0
        %463 = vmatprep.subr.mxu0 0.0
        %464 = vmatpush1.msra.mxu0 0.0
        %465 = vmatprep.subr.mxu0 0.0
        %466 = vmatpush1.msra.mxu0 0.0
        %467 = vmatprep.subr.mxu0 0.0
        %468 = vmatpush1.msra.mxu0 0.0
        %469 = vmatprep.subr.mxu0 0.0
        %470 = vmatpush1.msra.mxu0 0.0
        %471 = vmatprep.subr.mxu0 0.0
        %472 = vmatpush1.msra.mxu0 0.0
        %473 = vmatprep.subr.mxu0 0.0
        %474 = vmatpush1.msra.mxu0 0.0
        %475 = vmatprep.subr.mxu0 0.0
        %476 = vmatpush1.msra.mxu0 0.0
        %477 = vmatprep.subr.mxu0 0.0
        %478 = vmatpush1.msra.mxu0 0.0
        %479 = vmatprep.subr.mxu0 0.0
        %480 = vmatpush1.msra.mxu0 0.0
        %481 = vmatprep.mubr.f32.mxu0 0.0
        %482 = vmatmul.mubr.f32.gmra.mrb[0].mxu0 %v415
        %v483 = vpop.f32.mrb[0].mxu0
        %v484 = vadd.f32 %v413, %v483
        %v485 = vpop.f32.mrb[0].mxu0
        %486 = vdwg.mxu0
        %488 = vrot.lane.b32.xlu0 %v406, 96
        %v489 = vpop.permute.xlu0 %488
        %vm490 = vcmask 64512
        %v491 = vsel %vm490, %v406, 0
        %v493 = vsel %vm490, %v489, 0
        %495 = vmatprep.subr.mxu0 0.0
        %496 = vmatpush1.xpose.msra.mxu0 %v493
        %497 = vmatprep.subr.mxu0 0.0
        %498 = vmatpush1.xpose.msra.mxu0 0.0
        %499 = vmatprep.subr.mxu0 0.0
        %500 = vmatpush1.xpose.msra.mxu0 0.0
        %501 = vmatprep.subr.mxu0 0.0
        %502 = vmatpush1.xpose.msra.mxu0 0.0
        %503 = vmatprep.subr.mxu0 0.0
        %504 = vmatpush1.xpose.msra.mxu0 0.0
        %505 = vmatprep.subr.mxu0 0.0
        %506 = vmatpush1.xpose.msra.mxu0 0.0
        %507 = vmatprep.subr.mxu0 0.0
        %508 = vmatpush1.xpose.msra.mxu0 0.0
        %509 = vmatprep.subr.mxu0 0.0
        %510 = vmatpush1.xpose.msra.mxu0 0.0
        %511 = vmatprep.subr.mxu0 0.0
        %512 = vmatpush1.xpose.msra.mxu0 0.0
        %513 = vmatprep.subr.mxu0 0.0
        %514 = vmatpush1.xpose.msra.mxu0 0.0
        %515 = vmatprep.subr.mxu0 0.0
        %516 = vmatpush1.xpose.msra.mxu0 0.0
        %517 = vmatprep.subr.mxu0 0.0
        %518 = vmatpush1.xpose.msra.mxu0 0.0
        %519 = vmatprep.subr.mxu0 0.0
        %520 = vmatpush1.xpose.msra.mxu0 0.0
        %521 = vmatprep.subr.mxu0 0.0
        %522 = vmatpush1.xpose.msra.mxu0 0.0
        %523 = vmatprep.subr.mxu0 0.0
        %524 = vmatpush1.xpose.msra.mxu0 0.0
        %525 = vmatprep.subr.mxu0 0.0
        %526 = vmatpush1.xpose.msra.mxu0 0.0
        %527 = vmatprep.subr.mxu0 0.0
        %528 = vmatpush1.xpose.msra.mxu0 0.0
        %529 = vmatprep.subr.mxu0 0.0
        %530 = vmatpush1.xpose.msra.mxu0 0.0
        %531 = vmatprep.subr.mxu0 0.0
        %532 = vmatpush1.xpose.msra.mxu0 0.0
        %533 = vmatprep.subr.mxu0 0.0
        %534 = vmatpush1.xpose.msra.mxu0 0.0
        %535 = vmatprep.subr.mxu0 0.0
        %536 = vmatpush1.xpose.msra.mxu0 0.0
        %537 = vmatprep.subr.mxu0 0.0
        %538 = vmatpush1.xpose.msra.mxu0 0.0
        %539 = vmatprep.subr.mxu0 0.0
        %540 = vmatpush1.xpose.msra.mxu0 0.0
        %541 = vmatprep.subr.mxu0 0.0
        %542 = vmatpush1.xpose.msra.mxu0 0.0
        %543 = vmatprep.subr.mxu0 0.0
        %544 = vmatpush1.xpose.msra.mxu0 0.0
        %545 = vmatprep.subr.mxu0 0.0
        %546 = vmatpush1.xpose.msra.mxu0 0.0
        %547 = vmatprep.subr.mxu0 0.0
        %548 = vmatpush1.xpose.msra.mxu0 0.0
        %549 = vmatprep.subr.mxu0 0.0
        %550 = vmatpush1.xpose.msra.mxu0 0.0
        %551 = vmatprep.subr.mxu0 0.0
        %552 = vmatpush1.xpose.msra.mxu0 0.0
        %553 = vmatprep.subr.mxu0 0.0
        %554 = vmatpush1.xpose.msra.mxu0 0.0
        %555 = vmatprep.subr.mxu0 0.0
        %556 = vmatpush1.xpose.msra.mxu0 0.0
        %557 = vmatprep.subr.mxu0 0.0
        %558 = vmatpush1.xpose.msra.mxu0 0.0
        %559 = vmatprep.mubr.f32.mxu0 0.0
        %560 = vmatmul.mubr.f32.gmra.mrb[0].mxu0 %v491
        %v561 = vpop.f32.mrb[0].mxu0
        %v562 = vadd.f32 0.0, %v561
        %v563 = vpop.f32.mrb[0].mxu0
        %564 = vdwg.mxu0
        %565 = vrot.lane.b32.xlu0 %v406, 120
        %v566 = vpop.permute.xlu0 %565
        %567 = vrot.lane.b32.xlu0 %v406, 88
        %v568 = vpop.permute.xlu0 %567
        %v569 = vsel %vm490, %v566, 0
        %v571 = vsel %vm490, %v568, 0
        %573 = vmatprep.subr.mxu0 0.0
        %574 = vmatpush1.xpose.msra.mxu0 %v571
        %575 = vmatprep.subr.mxu0 0.0
        %576 = vmatpush1.xpose.msra.mxu0 0.0
        %577 = vmatprep.subr.mxu0 0.0
        %578 = vmatpush1.xpose.msra.mxu0 0.0
        %579 = vmatprep.subr.mxu0 0.0
        %580 = vmatpush1.xpose.msra.mxu0 0.0
        %581 = vmatprep.subr.mxu0 0.0
        %582 = vmatpush1.xpose.msra.mxu0 0.0
        %583 = vmatprep.subr.mxu0 0.0
        %584 = vmatpush1.xpose.msra.mxu0 0.0
        %585 = vmatprep.subr.mxu0 0.0
        %586 = vmatpush1.xpose.msra.mxu0 0.0
        %587 = vmatprep.subr.mxu0 0.0
        %588 = vmatpush1.xpose.msra.mxu0 0.0
        %589 = vmatprep.subr.mxu0 0.0
        %590 = vmatpush1.xpose.msra.mxu0 0.0
        %591 = vmatprep.subr.mxu0 0.0
        %592 = vmatpush1.xpose.msra.mxu0 0.0
        %593 = vmatprep.subr.mxu0 0.0
        %594 = vmatpush1.xpose.msra.mxu0 0.0
        %595 = vmatprep.subr.mxu0 0.0
        %596 = vmatpush1.xpose.msra.mxu0 0.0
        %597 = vmatprep.subr.mxu0 0.0
        %598 = vmatpush1.xpose.msra.mxu0 0.0
        %599 = vmatprep.subr.mxu0 0.0
        %600 = vmatpush1.xpose.msra.mxu0 0.0
        %601 = vmatprep.subr.mxu0 0.0
        %602 = vmatpush1.xpose.msra.mxu0 0.0
        %603 = vmatprep.subr.mxu0 0.0
        %604 = vmatpush1.xpose.msra.mxu0 0.0
        %605 = vmatprep.subr.mxu0 0.0
        %606 = vmatpush1.xpose.msra.mxu0 0.0
        %607 = vmatprep.subr.mxu0 0.0
        %608 = vmatpush1.xpose.msra.mxu0 0.0
        %609 = vmatprep.subr.mxu0 0.0
        %610 = vmatpush1.xpose.msra.mxu0 0.0
        %611 = vmatprep.subr.mxu0 0.0
        %612 = vmatpush1.xpose.msra.mxu0 0.0
        %613 = vmatprep.subr.mxu0 0.0
        %614 = vmatpush1.xpose.msra.mxu0 0.0
        %615 = vmatprep.subr.mxu0 0.0
        %616 = vmatpush1.xpose.msra.mxu0 0.0
        %617 = vmatprep.subr.mxu0 0.0
        %618 = vmatpush1.xpose.msra.mxu0 0.0
        %619 = vmatprep.subr.mxu0 0.0
        %620 = vmatpush1.xpose.msra.mxu0 0.0
        %621 = vmatprep.subr.mxu0 0.0
        %622 = vmatpush1.xpose.msra.mxu0 0.0
        %623 = vmatprep.subr.mxu0 0.0
        %624 = vmatpush1.xpose.msra.mxu0 0.0
        %625 = vmatprep.subr.mxu0 0.0
        %626 = vmatpush1.xpose.msra.mxu0 0.0
        %627 = vmatprep.subr.mxu0 0.0
        %628 = vmatpush1.xpose.msra.mxu0 0.0
        %629 = vmatprep.subr.mxu0 0.0
        %630 = vmatpush1.xpose.msra.mxu0 0.0
        %631 = vmatprep.subr.mxu0 0.0
        %632 = vmatpush1.xpose.msra.mxu0 0.0
        %633 = vmatprep.subr.mxu0 0.0
        %634 = vmatpush1.xpose.msra.mxu0 0.0
        %635 = vmatprep.subr.mxu0 0.0
        %636 = vmatpush1.xpose.msra.mxu0 0.0
        %637 = vmatprep.mubr.f32.mxu0 0.0
        %638 = vmatmul.mubr.f32.gmra.mrb[0].mxu0 %v569
        %v639 = vpop.f32.mrb[0].mxu0
        %v640 = vadd.f32 0.0, %v639
        %v641 = vpop.f32.mrb[0].mxu0
        %642 = vdwg.mxu0
        %643 = vrot.lane.b32.xlu0 %v406, 112
        %v644 = vpop.permute.xlu0 %643
        %645 = vrot.lane.b32.xlu0 %v406, 80
        %v646 = vpop.permute.xlu0 %645
        %v647 = vsel %vm490, %v644, 0
        %v649 = vsel %vm490, %v646, 0
        %651 = vmatprep.subr.mxu0 0.0
        %652 = vmatpush1.xpose.msra.mxu0 %v649
        %653 = vmatprep.subr.mxu0 0.0
        %654 = vmatpush1.xpose.msra.mxu0 0.0
        %655 = vmatprep.subr.mxu0 0.0
        %656 = vmatpush1.xpose.msra.mxu0 0.0
        %657 = vmatprep.subr.mxu0 0.0
        %658 = vmatpush1.xpose.msra.mxu0 0.0
        %659 = vmatprep.subr.mxu0 0.0
        %660 = vmatpush1.xpose.msra.mxu0 0.0
        %661 = vmatprep.subr.mxu0 0.0
        %662 = vmatpush1.xpose.msra.mxu0 0.0
        %663 = vmatprep.subr.mxu0 0.0
        %664 = vmatpush1.xpose.msra.mxu0 0.0
        %665 = vmatprep.subr.mxu0 0.0
        %666 = vmatpush1.xpose.msra.mxu0 0.0
        %667 = vmatprep.subr.mxu0 0.0
        %668 = vmatpush1.xpose.msra.mxu0 0.0
        %669 = vmatprep.subr.mxu0 0.0
        %670 = vmatpush1.xpose.msra.mxu0 0.0
        %671 = vmatprep.subr.mxu0 0.0
        %672 = vmatpush1.xpose.msra.mxu0 0.0
        %673 = vmatprep.subr.mxu0 0.0
        %674 = vmatpush1.xpose.msra.mxu0 0.0
        %675 = vmatprep.subr.mxu0 0.0
        %676 = vmatpush1.xpose.msra.mxu0 0.0
        %677 = vmatprep.subr.mxu0 0.0
        %678 = vmatpush1.xpose.msra.mxu0 0.0
        %679 = vmatprep.subr.mxu0 0.0
        %680 = vmatpush1.xpose.msra.mxu0 0.0
        %681 = vmatprep.subr.mxu0 0.0
        %682 = vmatpush1.xpose.msra.mxu0 0.0
        %683 = vmatprep.subr.mxu0 0.0
        %684 = vmatpush1.xpose.msra.mxu0 0.0
        %685 = vmatprep.subr.mxu0 0.0
        %686 = vmatpush1.xpose.msra.mxu0 0.0
        %687 = vmatprep.subr.mxu0 0.0
        %688 = vmatpush1.xpose.msra.mxu0 0.0
        %689 = vmatprep.subr.mxu0 0.0
        %690 = vmatpush1.xpose.msra.mxu0 0.0
        %691 = vmatprep.subr.mxu0 0.0
        %692 = vmatpush1.xpose.msra.mxu0 0.0
        %693 = vmatprep.subr.mxu0 0.0
        %694 = vmatpush1.xpose.msra.mxu0 0.0
        %695 = vmatprep.subr.mxu0 0.0
        %696 = vmatpush1.xpose.msra.mxu0 0.0
        %697 = vmatprep.subr.mxu0 0.0
        %698 = vmatpush1.xpose.msra.mxu0 0.0
        %699 = vmatprep.subr.mxu0 0.0
        %700 = vmatpush1.xpose.msra.mxu0 0.0
        %701 = vmatprep.subr.mxu0 0.0
        %702 = vmatpush1.xpose.msra.mxu0 0.0
        %703 = vmatprep.subr.mxu0 0.0
        %704 = vmatpush1.xpose.msra.mxu0 0.0
        %705 = vmatprep.subr.mxu0 0.0
        %706 = vmatpush1.xpose.msra.mxu0 0.0
        %707 = vmatprep.subr.mxu0 0.0
        %708 = vmatpush1.xpose.msra.mxu0 0.0
        %709 = vmatprep.subr.mxu0 0.0
        %710 = vmatpush1.xpose.msra.mxu0 0.0
        %711 = vmatprep.subr.mxu0 0.0
        %712 = vmatpush1.xpose.msra.mxu0 0.0
        %713 = vmatprep.subr.mxu0 0.0
        %714 = vmatpush1.xpose.msra.mxu0 0.0
        %715 = vmatprep.mubr.f32.mxu0 0.0
        %716 = vmatmul.mubr.f32.gmra.mrb[0].mxu0 %v647
        %v717 = vpop.f32.mrb[0].mxu0
        %v718 = vadd.f32 0.0, %v717
        %v719 = vpop.f32.mrb[0].mxu0
        %720 = vdwg.mxu0
        %721 = vrot.lane.b32.xlu0 %v406, 104
        %v722 = vpop.permute.xlu0 %721
        %723 = vrot.lane.b32.xlu0 %v406, 72
        %v724 = vpop.permute.xlu0 %723
        %v725 = vsel %vm490, %v722, 0
        %v727 = vsel %vm490, %v724, 0
        %729 = vmatprep.subr.mxu0 0.0
        %730 = vmatpush1.xpose.msra.mxu0 %v727
        %731 = vmatprep.subr.mxu0 0.0
        %732 = vmatpush1.xpose.msra.mxu0 0.0
        %733 = vmatprep.subr.mxu0 0.0
        %734 = vmatpush1.xpose.msra.mxu0 0.0
        %735 = vmatprep.subr.mxu0 0.0
        %736 = vmatpush1.xpose.msra.mxu0 0.0
        %737 = vmatprep.subr.mxu0 0.0
        %738 = vmatpush1.xpose.msra.mxu0 0.0
        %739 = vmatprep.subr.mxu0 0.0
        %740 = vmatpush1.xpose.msra.mxu0 0.0
        %741 = vmatprep.subr.mxu0 0.0
        %742 = vmatpush1.xpose.msra.mxu0 0.0
        %743 = vmatprep.subr.mxu0 0.0
        %744 = vmatpush1.xpose.msra.mxu0 0.0
        %745 = vmatprep.subr.mxu0 0.0
        %746 = vmatpush1.xpose.msra.mxu0 0.0
        %747 = vmatprep.subr.mxu0 0.0
        %748 = vmatpush1.xpose.msra.mxu0 0.0
        %749 = vmatprep.subr.mxu0 0.0
        %750 = vmatpush1.xpose.msra.mxu0 0.0
        %751 = vmatprep.subr.mxu0 0.0
        %752 = vmatpush1.xpose.msra.mxu0 0.0
        %753 = vmatprep.subr.mxu0 0.0
        %754 = vmatpush1.xpose.msra.mxu0 0.0
        %755 = vmatprep.subr.mxu0 0.0
        %756 = vmatpush1.xpose.msra.mxu0 0.0
        %757 = vmatprep.subr.mxu0 0.0
        %758 = vmatpush1.xpose.msra.mxu0 0.0
        %759 = vmatprep.subr.mxu0 0.0
        %760 = vmatpush1.xpose.msra.mxu0 0.0
        %761 = vmatprep.subr.mxu0 0.0
        %762 = vmatpush1.xpose.msra.mxu0 0.0
        %763 = vmatprep.subr.mxu0 0.0
        %764 = vmatpush1.xpose.msra.mxu0 0.0
        %765 = vmatprep.subr.mxu0 0.0
        %766 = vmatpush1.xpose.msra.mxu0 0.0
        %767 = vmatprep.subr.mxu0 0.0
        %768 = vmatpush1.xpose.msra.mxu0 0.0
        %769 = vmatprep.subr.mxu0 0.0
        %770 = vmatpush1.xpose.msra.mxu0 0.0
        %771 = vmatprep.subr.mxu0 0.0
        %772 = vmatpush1.xpose.msra.mxu0 0.0
        %773 = vmatprep.subr.mxu0 0.0
        %774 = vmatpush1.xpose.msra.mxu0 0.0
        %775 = vmatprep.subr.mxu0 0.0
        %776 = vmatpush1.xpose.msra.mxu0 0.0
        %777 = vmatprep.subr.mxu0 0.0
        %778 = vmatpush1.xpose.msra.mxu0 0.0
        %779 = vmatprep.subr.mxu0 0.0
        %780 = vmatpush1.xpose.msra.mxu0 0.0
        %781 = vmatprep.subr.mxu0 0.0
        %782 = vmatpush1.xpose.msra.mxu0 0.0
        %783 = vmatprep.subr.mxu0 0.0
        %784 = vmatpush1.xpose.msra.mxu0 0.0
        %785 = vmatprep.subr.mxu0 0.0
        %786 = vmatpush1.xpose.msra.mxu0 0.0
        %787 = vmatprep.subr.mxu0 0.0
        %788 = vmatpush1.xpose.msra.mxu0 0.0
        %789 = vmatprep.subr.mxu0 0.0
        %790 = vmatpush1.xpose.msra.mxu0 0.0
        %791 = vmatprep.subr.mxu0 0.0
        %792 = vmatpush1.xpose.msra.mxu0 0.0
        %793 = vmatprep.mubr.f32.mxu0 0.0
        %794 = vmatmul.mubr.f32.gmra.mrb[0].mxu0 %v725
        %v795 = vpop.f32.mrb[0].mxu0
        %v796 = vadd.f32 0.0, %v795
        %v797 = vpop.f32.mrb[0].mxu0
        %798 = vdwg.mxu0
        %v799 = vsel %vm490, %v562, -inf
        %800 = vmax.xlane.f32.xlu0 %v799
        %v801 = vpop.xlane.xlu0 %800
        %v802 = vsel %vm490, %v640, -inf
        %803 = vmax.xlane.f32.xlu0 %v802
        %v804 = vpop.xlane.xlu0 %803
        %v805 = vsel %vm490, %v718, -inf
        %806 = vmax.xlane.f32.xlu0 %v805
        %v807 = vpop.xlane.xlu0 %806
        %v808 = vsel %vm490, %v796, -inf
        %809 = vmax.xlane.f32.xlu0 %v808
        %v810 = vpop.xlane.xlu0 %809
        %v811 = vsub.f32 %v562, %v801
        %v812 = vsub.f32 %v640, %v804
        %v813 = vsub.f32 %v718, %v807
        %v814 = vsub.f32 %v796, %v810
        %v815 = vmul.f32 %v811, 1.442695
        %v816 = vpow.pop %v815
        %v817 = vmul.f32 %v812, 1.442695
        %v818 = vpow.pop %v817
        %v819 = vmul.f32 %v813, 1.442695
        %v820 = vpow.pop %v819
        %v821 = vmul.f32 %v814, 1.442695
        %v822 = vpow.pop %v821
        %v823 = vsel %vm490, %v816, 0.0
        %824 = vadd.xlane.f32.xlu0 %v823
        %v825 = vpop.xlane.xlu0 %824
        %v826 = vsel %vm490, %v818, 0.0
        %827 = vadd.xlane.f32.xlu0 %v826
        %v828 = vpop.xlane.xlu0 %827
        %v829 = vsel %vm490, %v820, 0.0
        %830 = vadd.xlane.f32.xlu0 %v829
        %v831 = vpop.xlane.xlu0 %830
        %v832 = vsel %vm490, %v822, 0.0
        %833 = vadd.xlane.f32.xlu0 %v832
        %v834 = vpop.xlane.xlu0 %833
        %v835 = vrcp.pop %v825
        %v836 = vmul.f32 %v816, %v835
        %v837 = vrcp.pop %v828
        %v838 = vmul.f32 %v818, %v837
        %v839 = vrcp.pop %v831
        %v840 = vmul.f32 %v820, %v839
        %v841 = vrcp.pop %v834
        %v842 = vmul.f32 %v822, %v841
        %v844 = vsel %vm490, %v836, 0
        %846 = vmatprep.subr.mxu0 0.0
        %847 = vmatpush1.msra.mxu0 %v484
        %848 = vmatprep.subr.mxu0 0.0
        %849 = vmatpush1.msra.mxu0 0.0
        %850 = vmatprep.subr.mxu0 0.0
        %851 = vmatpush1.msra.mxu0 0.0
        %852 = vmatprep.subr.mxu0 0.0
        %853 = vmatpush1.msra.mxu0 0.0
        %854 = vmatprep.subr.mxu0 0.0
        %855 = vmatpush1.msra.mxu0 0.0
        %856 = vmatprep.subr.mxu0 0.0
        %857 = vmatpush1.msra.mxu0 0.0
        %858 = vmatprep.subr.mxu0 0.0
        %859 = vmatpush1.msra.mxu0 0.0
        %860 = vmatprep.subr.mxu0 0.0
        %861 = vmatpush1.msra.mxu0 0.0
        %862 = vmatprep.subr.mxu0 0.0
        %863 = vmatpush1.msra.mxu0 0.0
        %864 = vmatprep.subr.mxu0 0.0
        %865 = vmatpush1.msra.mxu0 0.0
        %866 = vmatprep.subr.mxu0 0.0
        %867 = vmatpush1.msra.mxu0 0.0
        %868 = vmatprep.subr.mxu0 0.0
        %869 = vmatpush1.msra.mxu0 0.0
        %870 = vmatprep.subr.mxu0 0.0
        %871 = vmatpush1.msra.mxu0 0.0
        %872 = vmatprep.subr.mxu0 0.0
        %873 = vmatpush1.msra.mxu0 0.0
        %874 = vmatprep.subr.mxu0 0.0
        %875 = vmatpush1.msra.mxu0 0.0
        %876 = vmatprep.subr.mxu0 0.0
        %877 = vmatpush1.msra.mxu0 0.0
        %878 = vmatprep.subr.mxu0 0.0
        %879 = vmatpush1.msra.mxu0 0.0
        %880 = vmatprep.subr.mxu0 0.0
        %881 = vmatpush1.msra.mxu0 0.0
        %882 = vmatprep.subr.mxu0 0.0
        %883 = vmatpush1.msra.mxu0 0.0
        %884 = vmatprep.subr.mxu0 0.0
        %885 = vmatpush1.msra.mxu0 0.0
        %886 = vmatprep.subr.mxu0 0.0
        %887 = vmatpush1.msra.mxu0 0.0
        %888 = vmatprep.subr.mxu0 0.0
        %889 = vmatpush1.msra.mxu0 0.0
        %890 = vmatprep.subr.mxu0 0.0
        %891 = vmatpush1.msra.mxu0 0.0
        %892 = vmatprep.subr.mxu0 0.0
        %893 = vmatpush1.msra.mxu0 0.0
        %894 = vmatprep.subr.mxu0 0.0
        %895 = vmatpush1.msra.mxu0 0.0
        %896 = vmatprep.subr.mxu0 0.0
        %897 = vmatpush1.msra.mxu0 0.0
        %898 = vmatprep.subr.mxu0 0.0
        %899 = vmatpush1.msra.mxu0 0.0
        %900 = vmatprep.subr.mxu0 0.0
        %901 = vmatpush1.msra.mxu0 0.0
        %902 = vmatprep.subr.mxu0 0.0
        %903 = vmatpush1.msra.mxu0 0.0
        %904 = vmatprep.subr.mxu0 0.0
        %905 = vmatpush1.msra.mxu0 0.0
        %906 = vmatprep.subr.mxu0 0.0
        %907 = vmatpush1.msra.mxu0 0.0
        %908 = vmatprep.subr.mxu0 0.0
        %909 = vmatpush1.msra.mxu0 0.0
        %910 = vmatprep.mubr.f32.mxu0 0.0
        %911 = vmatmul.mubr.f32.gmra.mrb[0].mxu0 %v844
        %v912 = vpop.f32.mrb[0].mxu0
        %v913 = vadd.f32 0.0, %v912
        %v914 = vpop.f32.mrb[0].mxu0
        %915 = vdwg.mxu0
        %917 = vrot.lane.b32.xlu0 %v484, 120
        %v918 = vpop.permute.xlu0 %917
        %v921 = vsel %vm490, %v838, 0
        %923 = vmatprep.subr.mxu0 0.0
        %924 = vmatpush1.msra.mxu0 %v918
        %925 = vmatprep.subr.mxu0 0.0
        %926 = vmatpush1.msra.mxu0 0.0
        %927 = vmatprep.subr.mxu0 0.0
        %928 = vmatpush1.msra.mxu0 0.0
        %929 = vmatprep.subr.mxu0 0.0
        %930 = vmatpush1.msra.mxu0 0.0
        %931 = vmatprep.subr.mxu0 0.0
        %932 = vmatpush1.msra.mxu0 0.0
        %933 = vmatprep.subr.mxu0 0.0
        %934 = vmatpush1.msra.mxu0 0.0
        %935 = vmatprep.subr.mxu0 0.0
        %936 = vmatpush1.msra.mxu0 0.0
        %937 = vmatprep.subr.mxu0 0.0
        %938 = vmatpush1.msra.mxu0 0.0
        %939 = vmatprep.subr.mxu0 0.0
        %940 = vmatpush1.msra.mxu0 0.0
        %941 = vmatprep.subr.mxu0 0.0
        %942 = vmatpush1.msra.mxu0 0.0
        %943 = vmatprep.subr.mxu0 0.0
        %944 = vmatpush1.msra.mxu0 0.0
        %945 = vmatprep.subr.mxu0 0.0
        %946 = vmatpush1.msra.mxu0 0.0
        %947 = vmatprep.subr.mxu0 0.0
        %948 = vmatpush1.msra.mxu0 0.0
        %949 = vmatprep.subr.mxu0 0.0
        %950 = vmatpush1.msra.mxu0 0.0
        %951 = vmatprep.subr.mxu0 0.0
        %952 = vmatpush1.msra.mxu0 0.0
        %953 = vmatprep.subr.mxu0 0.0
        %954 = vmatpush1.msra.mxu0 0.0
        %955 = vmatprep.subr.mxu0 0.0
        %956 = vmatpush1.msra.mxu0 0.0
        %957 = vmatprep.subr.mxu0 0.0
        %958 = vmatpush1.msra.mxu0 0.0
        %959 = vmatprep.subr.mxu0 0.0
        %960 = vmatpush1.msra.mxu0 0.0
        %961 = vmatprep.subr.mxu0 0.0
        %962 = vmatpush1.msra.mxu0 0.0
        %963 = vmatprep.subr.mxu0 0.0
        %964 = vmatpush1.msra.mxu0 0.0
        %965 = vmatprep.subr.mxu0 0.0
        %966 = vmatpush1.msra.mxu0 0.0
        %967 = vmatprep.subr.mxu0 0.0
        %968 = vmatpush1.msra.mxu0 0.0
        %969 = vmatprep.subr.mxu0 0.0
        %970 = vmatpush1.msra.mxu0 0.0
        %971 = vmatprep.subr.mxu0 0.0
        %972 = vmatpush1.msra.mxu0 0.0
        %973 = vmatprep.subr.mxu0 0.0
        %974 = vmatpush1.msra.mxu0 0.0
        %975 = vmatprep.subr.mxu0 0.0
        %976 = vmatpush1.msra.mxu0 0.0
        %977 = vmatprep.subr.mxu0 0.0
        %978 = vmatpush1.msra.mxu0 0.0
        %979 = vmatprep.subr.mxu0 0.0
        %980 = vmatpush1.msra.mxu0 0.0
        %981 = vmatprep.subr.mxu0 0.0
        %982 = vmatpush1.msra.mxu0 0.0
        %983 = vmatprep.subr.mxu0 0.0
        %984 = vmatpush1.msra.mxu0 0.0
        %985 = vmatprep.subr.mxu0 0.0
        %986 = vmatpush1.msra.mxu0 0.0
        %987 = vmatprep.mubr.f32.mxu0 0.0
        %988 = vmatmul.mubr.f32.gmra.mrb[0].mxu0 %v921
        %v989 = vpop.f32.mrb[0].mxu0
        %v990 = vadd.f32 0.0, %v989
        %v991 = vpop.f32.mrb[0].mxu0
        %992 = vdwg.mxu0
        %993 = vrot.lane.b32.xlu0 %v484, 112
        %v994 = vpop.permute.xlu0 %993
        %v997 = vsel %vm490, %v840, 0
        %999 = vmatprep.subr.mxu0 0.0
        %1000 = vmatpush1.msra.mxu0 %v994
        %1001 = vmatprep.subr.mxu0 0.0
        %1002 = vmatpush1.msra.mxu0 0.0
        %1003 = vmatprep.subr.mxu0 0.0
        %1004 = vmatpush1.msra.mxu0 0.0
        %1005 = vmatprep.subr.mxu0 0.0
        %1006 = vmatpush1.msra.mxu0 0.0
        %1007 = vmatprep.subr.mxu0 0.0
        %1008 = vmatpush1.msra.mxu0 0.0
        %1009 = vmatprep.subr.mxu0 0.0
        %1010 = vmatpush1.msra.mxu0 0.0
        %1011 = vmatprep.subr.mxu0 0.0
        %1012 = vmatpush1.msra.mxu0 0.0
        %1013 = vmatprep.subr.mxu0 0.0
        %1014 = vmatpush1.msra.mxu0 0.0
        %1015 = vmatprep.subr.mxu0 0.0
        %1016 = vmatpush1.msra.mxu0 0.0
        %1017 = vmatprep.subr.mxu0 0.0
        %1018 = vmatpush1.msra.mxu0 0.0
        %1019 = vmatprep.subr.mxu0 0.0
        %1020 = vmatpush1.msra.mxu0 0.0
        %1021 = vmatprep.subr.mxu0 0.0
        %1022 = vmatpush1.msra.mxu0 0.0
        %1023 = vmatprep.subr.mxu0 0.0
        %1024 = vmatpush1.msra.mxu0 0.0
        %1025 = vmatprep.subr.mxu0 0.0
        %1026 = vmatpush1.msra.mxu0 0.0
        %1027 = vmatprep.subr.mxu0 0.0
        %1028 = vmatpush1.msra.mxu0 0.0
        %1029 = vmatprep.subr.mxu0 0.0
        %1030 = vmatpush1.msra.mxu0 0.0
        %1031 = vmatprep.subr.mxu0 0.0
        %1032 = vmatpush1.msra.mxu0 0.0
        %1033 = vmatprep.subr.mxu0 0.0
        %1034 = vmatpush1.msra.mxu0 0.0
        %1035 = vmatprep.subr.mxu0 0.0
        %1036 = vmatpush1.msra.mxu0 0.0
        %1037 = vmatprep.subr.mxu0 0.0
        %1038 = vmatpush1.msra.mxu0 0.0
        %1039 = vmatprep.subr.mxu0 0.0
        %1040 = vmatpush1.msra.mxu0 0.0
        %1041 = vmatprep.subr.mxu0 0.0
        %1042 = vmatpush1.msra.mxu0 0.0
        %1043 = vmatprep.subr.mxu0 0.0
        %1044 = vmatpush1.msra.mxu0 0.0
        %1045 = vmatprep.subr.mxu0 0.0
        %1046 = vmatpush1.msra.mxu0 0.0
        %1047 = vmatprep.subr.mxu0 0.0
        %1048 = vmatpush1.msra.mxu0 0.0
        %1049 = vmatprep.subr.mxu0 0.0
        %1050 = vmatpush1.msra.mxu0 0.0
        %1051 = vmatprep.subr.mxu0 0.0
        %1052 = vmatpush1.msra.mxu0 0.0
        %1053 = vmatprep.subr.mxu0 0.0
        %1054 = vmatpush1.msra.mxu0 0.0
        %1055 = vmatprep.subr.mxu0 0.0
        %1056 = vmatpush1.msra.mxu0 0.0
        %1057 = vmatprep.subr.mxu0 0.0
        %1058 = vmatpush1.msra.mxu0 0.0
        %1059 = vmatprep.subr.mxu0 0.0
        %1060 = vmatpush1.msra.mxu0 0.0
        %1061 = vmatprep.subr.mxu0 0.0
        %1062 = vmatpush1.msra.mxu0 0.0
        %1063 = vmatprep.mubr.f32.mxu0 0.0
        %1064 = vmatmul.mubr.f32.gmra.mrb[0].mxu0 %v997
        %v1065 = vpop.f32.mrb[0].mxu0
        %v1066 = vadd.f32 0.0, %v1065
        %v1067 = vpop.f32.mrb[0].mxu0
        %1068 = vdwg.mxu0
        %1069 = vrot.lane.b32.xlu0 %v484, 104
        %v1070 = vpop.permute.xlu0 %1069
        %v1073 = vsel %vm490, %v842, 0
        %1075 = vmatprep.subr.mxu0 0.0
        %1076 = vmatpush1.msra.mxu0 %v1070
        %1077 = vmatprep.subr.mxu0 0.0
        %1078 = vmatpush1.msra.mxu0 0.0
        %1079 = vmatprep.subr.mxu0 0.0
        %1080 = vmatpush1.msra.mxu0 0.0
        %1081 = vmatprep.subr.mxu0 0.0
        %1082 = vmatpush1.msra.mxu0 0.0
        %1083 = vmatprep.subr.mxu0 0.0
        %1084 = vmatpush1.msra.mxu0 0.0
        %1085 = vmatprep.subr.mxu0 0.0
        %1086 = vmatpush1.msra.mxu0 0.0
        %1087 = vmatprep.subr.mxu0 0.0
        %1088 = vmatpush1.msra.mxu0 0.0
        %1089 = vmatprep.subr.mxu0 0.0
        %1090 = vmatpush1.msra.mxu0 0.0
        %1091 = vmatprep.subr.mxu0 0.0
        %1092 = vmatpush1.msra.mxu0 0.0
        %1093 = vmatprep.subr.mxu0 0.0
        %1094 = vmatpush1.msra.mxu0 0.0
        %1095 = vmatprep.subr.mxu0 0.0
        %1096 = vmatpush1.msra.mxu0 0.0
        %1097 = vmatprep.subr.mxu0 0.0
        %1098 = vmatpush1.msra.mxu0 0.0
        %1099 = vmatprep.subr.mxu0 0.0
        %1100 = vmatpush1.msra.mxu0 0.0
        %1101 = vmatprep.subr.mxu0 0.0
        %1102 = vmatpush1.msra.mxu0 0.0
        %1103 = vmatprep.subr.mxu0 0.0
        %1104 = vmatpush1.msra.mxu0 0.0
        %1105 = vmatprep.subr.mxu0 0.0
        %1106 = vmatpush1.msra.mxu0 0.0
        %1107 = vmatprep.subr.mxu0 0.0
        %1108 = vmatpush1.msra.mxu0 0.0
        %1109 = vmatprep.subr.mxu0 0.0
        %1110 = vmatpush1.msra.mxu0 0.0
        %1111 = vmatprep.subr.mxu0 0.0
        %1112 = vmatpush1.msra.mxu0 0.0
        %1113 = vmatprep.subr.mxu0 0.0
        %1114 = vmatpush1.msra.mxu0 0.0
        %1115 = vmatprep.subr.mxu0 0.0
        %1116 = vmatpush1.msra.mxu0 0.0
        %1117 = vmatprep.subr.mxu0 0.0
        %1118 = vmatpush1.msra.mxu0 0.0
        %1119 = vmatprep.subr.mxu0 0.0
        %1120 = vmatpush1.msra.mxu0 0.0
        %1121 = vmatprep.subr.mxu0 0.0
        %1122 = vmatpush1.msra.mxu0 0.0
        %1123 = vmatprep.subr.mxu0 0.0
        %1124 = vmatpush1.msra.mxu0 0.0
        %1125 = vmatprep.subr.mxu0 0.0
        %1126 = vmatpush1.msra.mxu0 0.0
        %1127 = vmatprep.subr.mxu0 0.0
        %1128 = vmatpush1.msra.mxu0 0.0
        %1129 = vmatprep.subr.mxu0 0.0
        %1130 = vmatpush1.msra.mxu0 0.0
        %1131 = vmatprep.subr.mxu0 0.0
        %1132 = vmatpush1.msra.mxu0 0.0
        %1133 = vmatprep.subr.mxu0 0.0
        %1134 = vmatpush1.msra.mxu0 0.0
        %1135 = vmatprep.subr.mxu0 0.0
        %1136 = vmatpush1.msra.mxu0 0.0
        %1137 = vmatprep.subr.mxu0 0.0
        %1138 = vmatpush1.msra.mxu0 0.0
        %1139 = vmatprep.mubr.f32.mxu0 0.0
        %1140 = vmatmul.mubr.f32.gmra.mrb[0].mxu0 %v1073
        %v1141 = vpop.f32.mrb[0].mxu0
        %v1142 = vadd.f32 0.0, %v1141
        %v1143 = vpop.f32.mrb[0].mxu0
        %1144 = vdwg.mxu0
        %1146 = vrot.lane.b32.xlu0 %v990, 8
        %v1147 = vpop.permute.xlu0 %1146
        %1150 = vrot.lane.b32.xlu0 %v1066, 16
        %v1151 = vpop.permute.xlu0 %1150
        %1154 = vrot.lane.b32.xlu0 %v1142, 24
        %v1155 = vpop.permute.xlu0 %1154
        %v1157 = vsel %vm490, %v913, %v1147
        %vm1158 = vcmask 130048
        %v1159 = vsel %vm1158, %v1157, %v1151
        %vm1160 = vcmask 195584
        %v1161 = vsel %vm1160, %v1159, %v1155
        %v1162 = vld [vmem:[%s6 + $0x2] sm:$0x1]
        %v1163 = vlaneseq
        %v1164 = vshrl.u32 %v1163, 7
        %v1165 = vsub.s32 0, %v1164
        %v1166 = vrot.slane %v1162, %v1165
        %v1168 = vsel %vm335, %v1161, 0
        %1170 = vmatprep.subr.mxu0 0.0
        %1171 = vmatpush1.msra.mxu0 %v325
        %1172 = vmatprep.subr.mxu0 0.0
        %1173 = vmatpush1.msra.mxu0 %v326
        %1174 = vmatprep.subr.mxu0 0.0
        %1175 = vmatpush1.msra.mxu0 %v327
        %1176 = vmatprep.subr.mxu0 0.0
        %1177 = vmatpush1.msra.mxu0 %v328
        %1178 = vmatprep.subr.mxu0 0.0
        %1179 = vmatpush1.msra.mxu0 0.0
        %1180 = vmatprep.subr.mxu0 0.0
        %1181 = vmatpush1.msra.mxu0 0.0
        %1182 = vmatprep.subr.mxu0 0.0
        %1183 = vmatpush1.msra.mxu0 0.0
        %1184 = vmatprep.subr.mxu0 0.0
        %1185 = vmatpush1.msra.mxu0 0.0
        %1186 = vmatprep.subr.mxu0 0.0
        %1187 = vmatpush1.msra.mxu0 0.0
        %1188 = vmatprep.subr.mxu0 0.0
        %1189 = vmatpush1.msra.mxu0 0.0
        %1190 = vmatprep.subr.mxu0 0.0
        %1191 = vmatpush1.msra.mxu0 0.0
        %1192 = vmatprep.subr.mxu0 0.0
        %1193 = vmatpush1.msra.mxu0 0.0
        %1194 = vmatprep.subr.mxu0 0.0
        %1195 = vmatpush1.msra.mxu0 0.0
        %1196 = vmatprep.subr.mxu0 0.0
        %1197 = vmatpush1.msra.mxu0 0.0
        %1198 = vmatprep.subr.mxu0 0.0
        %1199 = vmatpush1.msra.mxu0 0.0
        %1200 = vmatprep.subr.mxu0 0.0
        %1201 = vmatpush1.msra.mxu0 0.0
        %1202 = vmatprep.subr.mxu0 0.0
        %1203 = vmatpush1.msra.mxu0 0.0
        %1204 = vmatprep.subr.mxu0 0.0
        %1205 = vmatpush1.msra.mxu0 0.0
        %1206 = vmatprep.subr.mxu0 0.0
        %1207 = vmatpush1.msra.mxu0 0.0
        %1208 = vmatprep.subr.mxu0 0.0
        %1209 = vmatpush1.msra.mxu0 0.0
        %1210 = vmatprep.subr.mxu0 0.0
        %1211 = vmatpush1.msra.mxu0 0.0
        %1212 = vmatprep.subr.mxu0 0.0
        %1213 = vmatpush1.msra.mxu0 0.0
        %1214 = vmatprep.subr.mxu0 0.0
        %1215 = vmatpush1.msra.mxu0 0.0
        %1216 = vmatprep.subr.mxu0 0.0
        %1217 = vmatpush1.msra.mxu0 0.0
        %1218 = vmatprep.subr.mxu0 0.0
        %1219 = vmatpush1.msra.mxu0 0.0
        %1220 = vmatprep.subr.mxu0 0.0
        %1221 = vmatpush1.msra.mxu0 0.0
        %1222 = vmatprep.subr.mxu0 0.0
        %1223 = vmatpush1.msra.mxu0 0.0
        %1224 = vmatprep.subr.mxu0 0.0
        %1225 = vmatpush1.msra.mxu0 0.0
        %1226 = vmatprep.subr.mxu0 0.0
        %1227 = vmatpush1.msra.mxu0 0.0
        %1228 = vmatprep.subr.mxu0 0.0
        %1229 = vmatpush1.msra.mxu0 0.0
        %1230 = vmatprep.subr.mxu0 0.0
        %1231 = vmatpush1.msra.mxu0 0.0
        %1232 = vmatprep.subr.mxu0 0.0
        %1233 = vmatpush1.msra.mxu0 0.0
        %1234 = vmatprep.mubr.f32.mxu0 0.0
        %1235 = vmatmul.mubr.f32.gmra.mrb[0].mxu0 %v1168
        %v1236 = vpop.f32.mrb[0].mxu0
        %v1237 = vadd.f32 %v1166, %v1236
        %v1238 = vpop.f32.mrb[0].mxu0
        %1239 = vdwg.mxu0
        %v1240 = vadd.f32 %v1237, 0.0
        %v1241 = vld [vmem:[%s6 + $0x3] sm:$0x1]
        %v1242 = vld [vmem:[%s6 + $0x4] sm:$0x1]
        %v1243 = vsel %vm335, %v1240, 0.0
        %1244 = vadd.xlane.f32.xlu0 %v1243
        %v1245 = vpop.xlane.xlu0 %1244
        %v1246 = vrcp.pop 32.0
        %v1247 = vmul.f32 %v1245, %v1246
        %v1248 = vmul.f32 %v1240, %v1240
        %v1249 = vsel %vm335, %v1248, 0.0
        %1250 = vadd.xlane.f32.xlu0 %v1249
        %v1251 = vpop.xlane.xlu0 %1250
        %v1252 = vmul.f32 %v1251, %v1246
        %v1253 = vmul.f32 %v1247, %v1247
        %v1254 = vsub.f32 %v1252, %v1253
        %v1255 = vmax.f32 %v1254, 0.0
        %v1256 = vsub.f32 %v1240, %v1247
        %v1257 = vadd.f32 %v1255, 1e-05
        %v1258 = vrsqrt.pop %v1257
        %v1259 = vmul.f32 %v1256, %v1258
        %v1260 = vlaneseq
        %v1261 = vshrl.u32 %v1260, 7
        %v1262 = vsub.s32 0, %v1261
        %v1263 = vrot.slane %v1241, %v1262
        %v1264 = vmul.f32 %v1259, %v1263
        %v1265 = vlaneseq
        %v1266 = vshrl.u32 %v1265, 7
        %v1267 = vsub.s32 0, %v1266
        %v1268 = vrot.slane %v1242, %v1267
        %v1269 = vadd.f32 %v1264, %v1268
        %s1270 = scalar_lea.vmem %s4, 64
        %v1271 = vld [vmem:[%s1270] sm:$0xff]
        %v1272 = vld [vmem:[%s1270 + $0x8] sm:$0xff]
        %v1273 = vld [vmem:[%s1270 + $0x10] sm:$0xff]
        %v1274 = vld [vmem:[%s1270 + $0x18] sm:$0xff]
        %s1275 = scalar_lea.vmem %s4, 96
        %v1276 = vld [vmem:[%s1275] sm:$0xff]
        %v1277 = vld [vmem:[%s1275 + $0x8] sm:$0xff]
        %v1278 = vld [vmem:[%s1275 + $0x10] sm:$0xff]
        %v1279 = vld [vmem:[%s1275 + $0x18] sm:$0xff]
        %v1280 = vld [vmem:[%s3] sm:$0xff]
        %v1281 = vld [vmem:[%s3 + $0x8] sm:$0xff]
        %v1282 = vld [vmem:[%s3 + $0x10] sm:$0xff]
        %v1283 = vld [vmem:[%s3 + $0x18] sm:$0xff]
        %v1284 = vld [vmem:[%s3 + $0x20] sm:$0xff]
        %v1285 = vld [vmem:[%s3 + $0x28] sm:$0xff]
        %v1286 = vld [vmem:[%s3 + $0x30] sm:$0xff]
        %v1287 = vld [vmem:[%s3 + $0x38] sm:$0xff]
        %v1288 = vld [vmem:[%s5] sm:$0xff]
        %v1289 = vld [vmem:[%s5 + $0x8] sm:$0xff]
        %v1290 = vld [vmem:[%s5 + $0x10] sm:$0xff]
        %v1291 = vld [vmem:[%s5 + $0x18] sm:$0xff]
        %v1292 = vld [vmem:[%s5 + $0x20] sm:$0xff]
        %v1293 = vld [vmem:[%s5 + $0x28] sm:$0xff]
        %v1294 = vld [vmem:[%s5 + $0x30] sm:$0xff]
        %v1295 = vld [vmem:[%s5 + $0x38] sm:$0xff]
        %v1296 = vadd.f32 %v1269, %v315
        %v1297 = vld [vmem:[%s6 + $0x5] sm:$0x1]
        %v1298 = vlaneseq
        %v1299 = vshrl.u32 %v1298, 7
        %v1300 = vsub.s32 0, %v1299
        %v1301 = vrot.slane %v1297, %v1300
        %v1303 = vsel %vm335, %v1296, 0
        %1305 = vmatprep.subr.mxu0 0.0
        %1306 = vmatpush1.msra.mxu0 %v1271
        %1307 = vmatprep.subr.mxu0 0.0
        %1308 = vmatpush1.msra.mxu0 %v1272
        %1309 = vmatprep.subr.mxu0 0.0
        %1310 = vmatpush1.msra.mxu0 %v1273
        %1311 = vmatprep.subr.mxu0 0.0
        %1312 = vmatpush1.msra.mxu0 %v1274
        %1313 = vmatprep.subr.mxu0 0.0
        %1314 = vmatpush1.msra.mxu0 0.0
        %1315 = vmatprep.subr.mxu0 0.0
        %1316 = vmatpush1.msra.mxu0 0.0
        %1317 = vmatprep.subr.mxu0 0.0
        %1318 = vmatpush1.msra.mxu0 0.0
        %1319 = vmatprep.subr.mxu0 0.0
        %1320 = vmatpush1.msra.mxu0 0.0
        %1321 = vmatprep.subr.mxu0 0.0
        %1322 = vmatpush1.msra.mxu0 0.0
        %1323 = vmatprep.subr.mxu0 0.0
        %1324 = vmatpush1.msra.mxu0 0.0
        %1325 = vmatprep.subr.mxu0 0.0
        %1326 = vmatpush1.msra.mxu0 0.0
        %1327 = vmatprep.subr.mxu0 0.0
        %1328 = vmatpush1.msra.mxu0 0.0
        %1329 = vmatprep.subr.mxu0 0.0
        %1330 = vmatpush1.msra.mxu0 0.0
        %1331 = vmatprep.subr.mxu0 0.0
        %1332 = vmatpush1.msra.mxu0 0.0
        %1333 = vmatprep.subr.mxu0 0.0
        %1334 = vmatpush1.msra.mxu0 0.0
        %1335 = vmatprep.subr.mxu0 0.0
        %1336 = vmatpush1.msra.mxu0 0.0
        %1337 = vmatprep.subr.mxu0 0.0
        %1338 = vmatpush1.msra.mxu0 0.0
        %1339 = vmatprep.subr.mxu0 0.0
        %1340 = vmatpush1.msra.mxu0 0.0
        %1341 = vmatprep.subr.mxu0 0.0
        %1342 = vmatpush1.msra.mxu0 0.0
        %1343 = vmatprep.subr.mxu0 0.0
        %1344 = vmatpush1.msra.mxu0 0.0
        %1345 = vmatprep.subr.mxu0 0.0
        %1346 = vmatpush1.msra.mxu0 0.0
        %1347 = vmatprep.subr.mxu0 0.0
        %1348 = vmatpush1.msra.mxu0 0.0
        %1349 = vmatprep.subr.mxu0 0.0
        %1350 = vmatpush1.msra.mxu0 0.0
        %1351 = vmatprep.subr.mxu0 0.0
        %1352 = vmatpush1.msra.mxu0 0.0
        %1353 = vmatprep.subr.mxu0 0.0
        %1354 = vmatpush1.msra.mxu0 0.0
        %1355 = vmatprep.subr.mxu0 0.0
        %1356 = vmatpush1.msra.mxu0 0.0
        %1357 = vmatprep.subr.mxu0 0.0
        %1358 = vmatpush1.msra.mxu0 0.0
        %1359 = vmatprep.subr.mxu0 0.0
        %1360 = vmatpush1.msra.mxu0 0.0
        %1361 = vmatprep.subr.mxu0 0.0
        %1362 = vmatpush1.msra.mxu0 0.0
        %1363 = vmatprep.subr.mxu0 0.0
        %1364 = vmatpush1.msra.mxu0 0.0
        %1365 = vmatprep.subr.mxu0 0.0
        %1366 = vmatpush1.msra.mxu0 0.0
        %1367 = vmatprep.subr.mxu0 0.0
        %1368 = vmatpush1.msra.mxu0 0.0
        %1369 = vmatprep.mubr.f32.mxu0 0.0
        %1370 = vmatmul.mubr.f32.gmra.mrb[0].mxu0 %v1303
        %v1371 = vpop.f32.mrb[0].mxu0
        %v1372 = vadd.f32 %v1301, %v1371
        %v1373 = vpop.f32.mrb[0].mxu0
        %1374 = vdwg.mxu0
        %v1375 = vld [vmem:[%s314] sm:$0xff]
        %v1376 = vld [vmem:[%s314 + $0x8] sm:$0xff]
        %v1377 = vld [vmem:[%s314 + $0x10] sm:$0xff]
        %v1378 = vld [vmem:[%s314 + $0x18] sm:$0xff]
        %1380 = vset.pattern.permute.xlu0 0
        %1381 = vperm.xlu0 %1380, %v1288
        %v1382 = vpop.permute.xlu0 %1381
        %1385 = vset.pattern.permute.xlu0 0
        %1386 = vperm.xlu0 %1385, %v1289
        %v1387 = vpop.permute.xlu0 %1386
        %1390 = vset.pattern.permute.xlu0 0
        %1391 = vperm.xlu0 %1390, %v1290
        %v1392 = vpop.permute.xlu0 %1391
        %1395 = vset.pattern.permute.xlu0 0
        %1396 = vperm.xlu0 %1395, %v1291
        %v1397 = vpop.permute.xlu0 %1396
        %1400 = vset.pattern.permute.xlu0 0
        %1401 = vperm.xlu0 %1400, %v1292
        %v1402 = vpop.permute.xlu0 %1401
        %1405 = vset.pattern.permute.xlu0 0
        %1406 = vperm.xlu0 %1405, %v1293
        %v1407 = vpop.permute.xlu0 %1406
        %1410 = vset.pattern.permute.xlu0 0
        %1411 = vperm.xlu0 %1410, %v1294
        %v1412 = vpop.permute.xlu0 %1411
        %1415 = vset.pattern.permute.xlu0 0
        %1416 = vperm.xlu0 %1415, %v1295
        %v1417 = vpop.permute.xlu0 %1416
        %v1420 = vsel %vm335, %v1280, 0
        %v1423 = vsel %vm335, %v1281, 0
        %v1426 = vsel %vm335, %v1282, 0
        %v1429 = vsel %vm335, %v1283, 0
        %v1432 = vsel %vm335, %v1284, 0
        %v1435 = vsel %vm335, %v1285, 0
        %v1438 = vsel %vm335, %v1286, 0
        %v1441 = vsel %vm335, %v1287, 0
        %1443 = vmatprep.subr.mxu0 0.0
        %1444 = vmatpush1.msra.mxu0 %v1375
        %1445 = vmatprep.subr.mxu0 0.0
        %1446 = vmatpush1.msra.mxu0 %v1376
        %1447 = vmatprep.subr.mxu0 0.0
        %1448 = vmatpush1.msra.mxu0 %v1377
        %1449 = vmatprep.subr.mxu0 0.0
        %1450 = vmatpush1.msra.mxu0 %v1378
        %1451 = vmatprep.subr.mxu0 0.0
        %1452 = vmatpush1.msra.mxu0 0.0
        %1453 = vmatprep.subr.mxu0 0.0
        %1454 = vmatpush1.msra.mxu0 0.0
        %1455 = vmatprep.subr.mxu0 0.0
        %1456 = vmatpush1.msra.mxu0 0.0
        %1457 = vmatprep.subr.mxu0 0.0
        %1458 = vmatpush1.msra.mxu0 0.0
        %1459 = vmatprep.subr.mxu0 0.0
        %1460 = vmatpush1.msra.mxu0 0.0
        %1461 = vmatprep.subr.mxu0 0.0
        %1462 = vmatpush1.msra.mxu0 0.0
        %1463 = vmatprep.subr.mxu0 0.0
        %1464 = vmatpush1.msra.mxu0 0.0
        %1465 = vmatprep.subr.mxu0 0.0
        %1466 = vmatpush1.msra.mxu0 0.0
        %1467 = vmatprep.subr.mxu0 0.0
        %1468 = vmatpush1.msra.mxu0 0.0
        %1469 = vmatprep.subr.mxu0 0.0
        %1470 = vmatpush1.msra.mxu0 0.0
        %1471 = vmatprep.subr.mxu0 0.0
        %1472 = vmatpush1.msra.mxu0 0.0
        %1473 = vmatprep.subr.mxu0 0.0
        %1474 = vmatpush1.msra.mxu0 0.0
        %1475 = vmatprep.subr.mxu0 0.0
        %1476 = vmatpush1.msra.mxu0 0.0
        %1477 = vmatprep.subr.mxu0 0.0
        %1478 = vmatpush1.msra.mxu0 0.0
        %1479 = vmatprep.subr.mxu0 0.0
        %1480 = vmatpush1.msra.mxu0 0.0
        %1481 = vmatprep.subr.mxu0 0.0
        %1482 = vmatpush1.msra.mxu0 0.0
        %1483 = vmatprep.subr.mxu0 0.0
        %1484 = vmatpush1.msra.mxu0 0.0
        %1485 = vmatprep.subr.mxu0 0.0
        %1486 = vmatpush1.msra.mxu0 0.0
        %1487 = vmatprep.subr.mxu0 0.0
        %1488 = vmatpush1.msra.mxu0 0.0
        %1489 = vmatprep.subr.mxu0 0.0
        %1490 = vmatpush1.msra.mxu0 0.0
        %1491 = vmatprep.subr.mxu0 0.0
        %1492 = vmatpush1.msra.mxu0 0.0
        %1493 = vmatprep.subr.mxu0 0.0
        %1494 = vmatpush1.msra.mxu0 0.0
        %1495 = vmatprep.subr.mxu0 0.0
        %1496 = vmatpush1.msra.mxu0 0.0
        %1497 = vmatprep.subr.mxu0 0.0
        %1498 = vmatpush1.msra.mxu0 0.0
        %1499 = vmatprep.subr.mxu0 0.0
        %1500 = vmatpush1.msra.mxu0 0.0
        %1501 = vmatprep.subr.mxu0 0.0
        %1502 = vmatpush1.msra.mxu0 0.0
        %1503 = vmatprep.subr.mxu0 0.0
        %1504 = vmatpush1.msra.mxu0 0.0
        %1505 = vmatprep.subr.mxu0 0.0
        %1506 = vmatpush1.msra.mxu0 0.0
        %1507 = vmatprep.mubr.f32.mxu0 0.0
        %1508 = vmatmul.mubr.f32.gmra.mrb[0].mxu0 %v1420
        %v1509 = vpop.f32.mrb[0].mxu0
        %v1510 = vadd.f32 %v1382, %v1509
        %v1511 = vpop.f32.mrb[0].mxu0
        %1512 = vmatprep.mubr.f32.mxu0 0.0
        %1513 = vmatmul.mubr.f32.gmra.mrb[0].mxu0 %v1423
        %v1514 = vpop.f32.mrb[0].mxu0
        %v1515 = vadd.f32 %v1387, %v1514
        %v1516 = vpop.f32.mrb[0].mxu0
        %1517 = vmatprep.mubr.f32.mxu0 0.0
        %1518 = vmatmul.mubr.f32.gmra.mrb[0].mxu0 %v1426
        %v1519 = vpop.f32.mrb[0].mxu0
        %v1520 = vadd.f32 %v1392, %v1519
        %v1521 = vpop.f32.mrb[0].mxu0
        %1522 = vmatprep.mubr.f32.mxu0 0.0
        %1523 = vmatmul.mubr.f32.gmra.mrb[0].mxu0 %v1429
        %v1524 = vpop.f32.mrb[0].mxu0
        %v1525 = vadd.f32 %v1397, %v1524
        %v1526 = vpop.f32.mrb[0].mxu0
        %1527 = vmatprep.mubr.f32.mxu0 0.0
        %1528 = vmatmul.mubr.f32.gmra.mrb[0].mxu0 %v1432
        %v1529 = vpop.f32.mrb[0].mxu0
        %v1530 = vadd.f32 %v1402, %v1529
        %v1531 = vpop.f32.mrb[0].mxu0
        %1532 = vmatprep.mubr.f32.mxu0 0.0
        %1533 = vmatmul.mubr.f32.gmra.mrb[0].mxu0 %v1435
        %v1534 = vpop.f32.mrb[0].mxu0
        %v1535 = vadd.f32 %v1407, %v1534
        %v1536 = vpop.f32.mrb[0].mxu0
        %1537 = vmatprep.mubr.f32.mxu0 0.0
        %1538 = vmatmul.mubr.f32.gmra.mrb[0].mxu0 %v1438
        %v1539 = vpop.f32.mrb[0].mxu0
        %v1540 = vadd.f32 %v1412, %v1539
        %v1541 = vpop.f32.mrb[0].mxu0
        %1542 = vmatprep.mubr.f32.mxu0 0.0
        %1543 = vmatmul.mubr.f32.gmra.mrb[0].mxu0 %v1441
        %v1544 = vpop.f32.mrb[0].mxu0
        %v1545 = vadd.f32 %v1417, %v1544
        %v1546 = vpop.f32.mrb[0].mxu0
        %1547 = vdwg.mxu0
        %v1549 = vsel %vm490, %v1372, 0
        %1551 = vmatprep.subr.mxu0 0.0
        %1552 = vmatpush1.msra.mxu0 %v1510
        %1553 = vmatprep.subr.mxu0 0.0
        %1554 = vmatpush1.msra.mxu0 0.0
        %1555 = vmatprep.subr.mxu0 0.0
        %1556 = vmatpush1.msra.mxu0 0.0
        %1557 = vmatprep.subr.mxu0 0.0
        %1558 = vmatpush1.msra.mxu0 0.0
        %1559 = vmatprep.subr.mxu0 0.0
        %1560 = vmatpush1.msra.mxu0 0.0
        %1561 = vmatprep.subr.mxu0 0.0
        %1562 = vmatpush1.msra.mxu0 0.0
        %1563 = vmatprep.subr.mxu0 0.0
        %1564 = vmatpush1.msra.mxu0 0.0
        %1565 = vmatprep.subr.mxu0 0.0
        %1566 = vmatpush1.msra.mxu0 0.0
        %1567 = vmatprep.subr.mxu0 0.0
        %1568 = vmatpush1.msra.mxu0 0.0
        %1569 = vmatprep.subr.mxu0 0.0
        %1570 = vmatpush1.msra.mxu0 0.0
        %1571 = vmatprep.subr.mxu0 0.0
        %1572 = vmatpush1.msra.mxu0 0.0
        %1573 = vmatprep.subr.mxu0 0.0
        %1574 = vmatpush1.msra.mxu0 0.0
        %1575 = vmatprep.subr.mxu0 0.0
        %1576 = vmatpush1.msra.mxu0 0.0
        %1577 = vmatprep.subr.mxu0 0.0
        %1578 = vmatpush1.msra.mxu0 0.0
        %1579 = vmatprep.subr.mxu0 0.0
        %1580 = vmatpush1.msra.mxu0 0.0
        %1581 = vmatprep.subr.mxu0 0.0
        %1582 = vmatpush1.msra.mxu0 0.0
        %1583 = vmatprep.subr.mxu0 0.0
        %1584 = vmatpush1.msra.mxu0 0.0
        %1585 = vmatprep.subr.mxu0 0.0
        %1586 = vmatpush1.msra.mxu0 0.0
        %1587 = vmatprep.subr.mxu0 0.0
        %1588 = vmatpush1.msra.mxu0 0.0
        %1589 = vmatprep.subr.mxu0 0.0
        %1590 = vmatpush1.msra.mxu0 0.0
        %1591 = vmatprep.subr.mxu0 0.0
        %1592 = vmatpush1.msra.mxu0 0.0
        %1593 = vmatprep.subr.mxu0 0.0
        %1594 = vmatpush1.msra.mxu0 0.0
        %1595 = vmatprep.subr.mxu0 0.0
        %1596 = vmatpush1.msra.mxu0 0.0
        %1597 = vmatprep.subr.mxu0 0.0
        %1598 = vmatpush1.msra.mxu0 0.0
        %1599 = vmatprep.subr.mxu0 0.0
        %1600 = vmatpush1.msra.mxu0 0.0
        %1601 = vmatprep.subr.mxu0 0.0
        %1602 = vmatpush1.msra.mxu0 0.0
        %1603 = vmatprep.subr.mxu0 0.0
        %1604 = vmatpush1.msra.mxu0 0.0
        %1605 = vmatprep.subr.mxu0 0.0
        %1606 = vmatpush1.msra.mxu0 0.0
        %1607 = vmatprep.subr.mxu0 0.0
        %1608 = vmatpush1.msra.mxu0 0.0
        %1609 = vmatprep.subr.mxu0 0.0
        %1610 = vmatpush1.msra.mxu0 0.0
        %1611 = vmatprep.subr.mxu0 0.0
        %1612 = vmatpush1.msra.mxu0 0.0
        %1613 = vmatprep.subr.mxu0 0.0
        %1614 = vmatpush1.msra.mxu0 0.0
        %1615 = vmatprep.mubr.f32.mxu0 0.0
        %1616 = vmatmul.mubr.f32.gmra.mrb[0].mxu0 %v1549
        %v1617 = vpop.f32.mrb[0].mxu0
        %v1618 = vadd.f32 0.0, %v1617
        %v1619 = vpop.f32.mrb[0].mxu0
        %1620 = vdwg.mxu0
        %1621 = vrot.lane.b32.xlu0 %v1372, 120
        %v1622 = vpop.permute.xlu0 %1621
        %v1623 = vsel %vm490, %v1622, 0
        %1625 = vmatprep.subr.mxu0 0.0
        %1626 = vmatpush1.msra.mxu0 %v1515
        %1627 = vmatprep.subr.mxu0 0.0
        %1628 = vmatpush1.msra.mxu0 0.0
        %1629 = vmatprep.subr.mxu0 0.0
        %1630 = vmatpush1.msra.mxu0 0.0
        %1631 = vmatprep.subr.mxu0 0.0
        %1632 = vmatpush1.msra.mxu0 0.0
        %1633 = vmatprep.subr.mxu0 0.0
        %1634 = vmatpush1.msra.mxu0 0.0
        %1635 = vmatprep.subr.mxu0 0.0
        %1636 = vmatpush1.msra.mxu0 0.0
        %1637 = vmatprep.subr.mxu0 0.0
        %1638 = vmatpush1.msra.mxu0 0.0
        %1639 = vmatprep.subr.mxu0 0.0
        %1640 = vmatpush1.msra.mxu0 0.0
        %1641 = vmatprep.subr.mxu0 0.0
        %1642 = vmatpush1.msra.mxu0 0.0
        %1643 = vmatprep.subr.mxu0 0.0
        %1644 = vmatpush1.msra.mxu0 0.0
        %1645 = vmatprep.subr.mxu0 0.0
        %1646 = vmatpush1.msra.mxu0 0.0
        %1647 = vmatprep.subr.mxu0 0.0
        %1648 = vmatpush1.msra.mxu0 0.0
        %1649 = vmatprep.subr.mxu0 0.0
        %1650 = vmatpush1.msra.mxu0 0.0
        %1651 = vmatprep.subr.mxu0 0.0
        %1652 = vmatpush1.msra.mxu0 0.0
        %1653 = vmatprep.subr.mxu0 0.0
        %1654 = vmatpush1.msra.mxu0 0.0
        %1655 = vmatprep.subr.mxu0 0.0
        %1656 = vmatpush1.msra.mxu0 0.0
        %1657 = vmatprep.subr.mxu0 0.0
        %1658 = vmatpush1.msra.mxu0 0.0
        %1659 = vmatprep.subr.mxu0 0.0
        %1660 = vmatpush1.msra.mxu0 0.0
        %1661 = vmatprep.subr.mxu0 0.0
        %1662 = vmatpush1.msra.mxu0 0.0
        %1663 = vmatprep.subr.mxu0 0.0
        %1664 = vmatpush1.msra.mxu0 0.0
        %1665 = vmatprep.subr.mxu0 0.0
        %1666 = vmatpush1.msra.mxu0 0.0
        %1667 = vmatprep.subr.mxu0 0.0
        %1668 = vmatpush1.msra.mxu0 0.0
        %1669 = vmatprep.subr.mxu0 0.0
        %1670 = vmatpush1.msra.mxu0 0.0
        %1671 = vmatprep.subr.mxu0 0.0
        %1672 = vmatpush1.msra.mxu0 0.0
        %1673 = vmatprep.subr.mxu0 0.0
        %1674 = vmatpush1.msra.mxu0 0.0
        %1675 = vmatprep.subr.mxu0 0.0
        %1676 = vmatpush1.msra.mxu0 0.0
        %1677 = vmatprep.subr.mxu0 0.0
        %1678 = vmatpush1.msra.mxu0 0.0
        %1679 = vmatprep.subr.mxu0 0.0
        %1680 = vmatpush1.msra.mxu0 0.0
        %1681 = vmatprep.subr.mxu0 0.0
        %1682 = vmatpush1.msra.mxu0 0.0
        %1683 = vmatprep.subr.mxu0 0.0
        %1684 = vmatpush1.msra.mxu0 0.0
        %1685 = vmatprep.subr.mxu0 0.0
        %1686 = vmatpush1.msra.mxu0 0.0
        %1687 = vmatprep.subr.mxu0 0.0
        %1688 = vmatpush1.msra.mxu0 0.0
        %1689 = vmatprep.mubr.f32.mxu0 0.0
        %1690 = vmatmul.mubr.f32.gmra.mrb[0].mxu0 %v1623
        %v1691 = vpop.f32.mrb[0].mxu0
        %v1692 = vadd.f32 0.0, %v1691
        %v1693 = vpop.f32.mrb[0].mxu0
        %1694 = vdwg.mxu0
        %1695 = vrot.lane.b32.xlu0 %v1372, 112
        %v1696 = vpop.permute.xlu0 %1695
        %v1697 = vsel %vm490, %v1696, 0
        %1699 = vmatprep.subr.mxu0 0.0
        %1700 = vmatpush1.msra.mxu0 %v1520
        %1701 = vmatprep.subr.mxu0 0.0
        %1702 = vmatpush1.msra.mxu0 0.0
        %1703 = vmatprep.subr.mxu0 0.0
        %1704 = vmatpush1.msra.mxu0 0.0
        %1705 = vmatprep.subr.mxu0 0.0
        %1706 = vmatpush1.msra.mxu0 0.0
        %1707 = vmatprep.subr.mxu0 0.0
        %1708 = vmatpush1.msra.mxu0 0.0
        %1709 = vmatprep.subr.mxu0 0.0
        %1710 = vmatpush1.msra.mxu0 0.0
        %1711 = vmatprep.subr.mxu0 0.0
        %1712 = vmatpush1.msra.mxu0 0.0
        %1713 = vmatprep.subr.mxu0 0.0
        %1714 = vmatpush1.msra.mxu0 0.0
        %1715 = vmatprep.subr.mxu0 0.0
        %1716 = vmatpush1.msra.mxu0 0.0
        %1717 = vmatprep.subr.mxu0 0.0
        %1718 = vmatpush1.msra.mxu0 0.0
        %1719 = vmatprep.subr.mxu0 0.0
        %1720 = vmatpush1.msra.mxu0 0.0
        %1721 = vmatprep.subr.mxu0 0.0
        %1722 = vmatpush1.msra.mxu0 0.0
        %1723 = vmatprep.subr.mxu0 0.0
        %1724 = vmatpush1.msra.mxu0 0.0
        %1725 = vmatprep.subr.mxu0 0.0
        %1726 = vmatpush1.msra.mxu0 0.0
        %1727 = vmatprep.subr.mxu0 0.0
        %1728 = vmatpush1.msra.mxu0 0.0
        %1729 = vmatprep.subr.mxu0 0.0
        %1730 = vmatpush1.msra.mxu0 0.0
        %1731 = vmatprep.subr.mxu0 0.0
        %1732 = vmatpush1.msra.mxu0 0.0
        %1733 = vmatprep.subr.mxu0 0.0
        %1734 = vmatpush1.msra.mxu0 0.0
        %1735 = vmatprep.subr.mxu0 0.0
        %1736 = vmatpush1.msra.mxu0 0.0
        %1737 = vmatprep.subr.mxu0 0.0
        %1738 = vmatpush1.msra.mxu0 0.0
        %1739 = vmatprep.subr.mxu0 0.0
        %1740 = vmatpush1.msra.mxu0 0.0
        %1741 = vmatprep.subr.mxu0 0.0
        %1742 = vmatpush1.msra.mxu0 0.0
        %1743 = vmatprep.subr.mxu0 0.0
        %1744 = vmatpush1.msra.mxu0 0.0
        %1745 = vmatprep.subr.mxu0 0.0
        %1746 = vmatpush1.msra.mxu0 0.0
        %1747 = vmatprep.subr.mxu0 0.0
        %1748 = vmatpush1.msra.mxu0 0.0
        %1749 = vmatprep.subr.mxu0 0.0
        %1750 = vmatpush1.msra.mxu0 0.0
        %1751 = vmatprep.subr.mxu0 0.0
        %1752 = vmatpush1.msra.mxu0 0.0
        %1753 = vmatprep.subr.mxu0 0.0
        %1754 = vmatpush1.msra.mxu0 0.0
        %1755 = vmatprep.subr.mxu0 0.0
        %1756 = vmatpush1.msra.mxu0 0.0
        %1757 = vmatprep.subr.mxu0 0.0
        %1758 = vmatpush1.msra.mxu0 0.0
        %1759 = vmatprep.subr.mxu0 0.0
        %1760 = vmatpush1.msra.mxu0 0.0
        %1761 = vmatprep.subr.mxu0 0.0
        %1762 = vmatpush1.msra.mxu0 0.0
        %1763 = vmatprep.mubr.f32.mxu0 0.0
        %1764 = vmatmul.mubr.f32.gmra.mrb[0].mxu0 %v1697
        %v1765 = vpop.f32.mrb[0].mxu0
        %v1766 = vadd.f32 0.0, %v1765
        %v1767 = vpop.f32.mrb[0].mxu0
        %1768 = vdwg.mxu0
        %1769 = vrot.lane.b32.xlu0 %v1372, 104
        %v1770 = vpop.permute.xlu0 %1769
        %v1771 = vsel %vm490, %v1770, 0
        %1773 = vmatprep.subr.mxu0 0.0
        %1774 = vmatpush1.msra.mxu0 %v1525
        %1775 = vmatprep.subr.mxu0 0.0
        %1776 = vmatpush1.msra.mxu0 0.0
        %1777 = vmatprep.subr.mxu0 0.0
        %1778 = vmatpush1.msra.mxu0 0.0
        %1779 = vmatprep.subr.mxu0 0.0
        %1780 = vmatpush1.msra.mxu0 0.0
        %1781 = vmatprep.subr.mxu0 0.0
        %1782 = vmatpush1.msra.mxu0 0.0
        %1783 = vmatprep.subr.mxu0 0.0
        %1784 = vmatpush1.msra.mxu0 0.0
        %1785 = vmatprep.subr.mxu0 0.0
        %1786 = vmatpush1.msra.mxu0 0.0
        %1787 = vmatprep.subr.mxu0 0.0
        %1788 = vmatpush1.msra.mxu0 0.0
        %1789 = vmatprep.subr.mxu0 0.0
        %1790 = vmatpush1.msra.mxu0 0.0
        %1791 = vmatprep.subr.mxu0 0.0
        %1792 = vmatpush1.msra.mxu0 0.0
        %1793 = vmatprep.subr.mxu0 0.0
        %1794 = vmatpush1.msra.mxu0 0.0
        %1795 = vmatprep.subr.mxu0 0.0
        %1796 = vmatpush1.msra.mxu0 0.0
        %1797 = vmatprep.subr.mxu0 0.0
        %1798 = vmatpush1.msra.mxu0 0.0
        %1799 = vmatprep.subr.mxu0 0.0
        %1800 = vmatpush1.msra.mxu0 0.0
        %1801 = vmatprep.subr.mxu0 0.0
        %1802 = vmatpush1.msra.mxu0 0.0
        %1803 = vmatprep.subr.mxu0 0.0
        %1804 = vmatpush1.msra.mxu0 0.0
        %1805 = vmatprep.subr.mxu0 0.0
        %1806 = vmatpush1.msra.mxu0 0.0
        %1807 = vmatprep.subr.mxu0 0.0
        %1808 = vmatpush1.msra.mxu0 0.0
        %1809 = vmatprep.subr.mxu0 0.0
        %1810 = vmatpush1.msra.mxu0 0.0
        %1811 = vmatprep.subr.mxu0 0.0
        %1812 = vmatpush1.msra.mxu0 0.0
        %1813 = vmatprep.subr.mxu0 0.0
        %1814 = vmatpush1.msra.mxu0 0.0
        %1815 = vmatprep.subr.mxu0 0.0
        %1816 = vmatpush1.msra.mxu0 0.0
        %1817 = vmatprep.subr.mxu0 0.0
        %1818 = vmatpush1.msra.mxu0 0.0
        %1819 = vmatprep.subr.mxu0 0.0
        %1820 = vmatpush1.msra.mxu0 0.0
        %1821 = vmatprep.subr.mxu0 0.0
        %1822 = vmatpush1.msra.mxu0 0.0
        %1823 = vmatprep.subr.mxu0 0.0
        %1824 = vmatpush1.msra.mxu0 0.0
        %1825 = vmatprep.subr.mxu0 0.0
        %1826 = vmatpush1.msra.mxu0 0.0
        %1827 = vmatprep.subr.mxu0 0.0
        %1828 = vmatpush1.msra.mxu0 0.0
        %1829 = vmatprep.subr.mxu0 0.0
        %1830 = vmatpush1.msra.mxu0 0.0
        %1831 = vmatprep.subr.mxu0 0.0
        %1832 = vmatpush1.msra.mxu0 0.0
        %1833 = vmatprep.subr.mxu0 0.0
        %1834 = vmatpush1.msra.mxu0 0.0
        %1835 = vmatprep.subr.mxu0 0.0
        %1836 = vmatpush1.msra.mxu0 0.0
        %1837 = vmatprep.mubr.f32.mxu0 0.0
        %1838 = vmatmul.mubr.f32.gmra.mrb[0].mxu0 %v1771
        %v1839 = vpop.f32.mrb[0].mxu0
        %v1840 = vadd.f32 0.0, %v1839
        %v1841 = vpop.f32.mrb[0].mxu0
        %1842 = vdwg.mxu0
        %v1843 = vsel %vm1158, %v1618, -inf
        %1844 = vmax.xlane.f32.xlu0 %v1843
        %v1845 = vpop.xlane.xlu0 %1844
        %v1846 = vsel %vm1158, %v1692, -inf
        %1847 = vmax.xlane.f32.xlu0 %v1846
        %v1848 = vpop.xlane.xlu0 %1847
        %v1849 = vsel %vm1158, %v1766, -inf
        %1850 = vmax.xlane.f32.xlu0 %v1849
        %v1851 = vpop.xlane.xlu0 %1850
        %v1852 = vsel %vm1158, %v1840, -inf
        %1853 = vmax.xlane.f32.xlu0 %v1852
        %v1854 = vpop.xlane.xlu0 %1853
        %v1855 = vsub.f32 %v1618, %v1845
        %v1856 = vsub.f32 %v1692, %v1848
        %v1857 = vsub.f32 %v1766, %v1851
        %v1858 = vsub.f32 %v1840, %v1854
        %v1859 = vmul.f32 %v1855, 1.442695
        %v1860 = vpow.pop %v1859
        %v1861 = vmul.f32 %v1856, 1.442695
        %v1862 = vpow.pop %v1861
        %v1863 = vmul.f32 %v1857, 1.442695
        %v1864 = vpow.pop %v1863
        %v1865 = vmul.f32 %v1858, 1.442695
        %v1866 = vpow.pop %v1865
        %v1867 = vsel %vm1158, %v1860, 0.0
        %1868 = vadd.xlane.f32.xlu0 %v1867
        %v1869 = vpop.xlane.xlu0 %1868
        %v1870 = vsel %vm1158, %v1862, 0.0
        %1871 = vadd.xlane.f32.xlu0 %v1870
        %v1872 = vpop.xlane.xlu0 %1871
        %v1873 = vsel %vm1158, %v1864, 0.0
        %1874 = vadd.xlane.f32.xlu0 %v1873
        %v1875 = vpop.xlane.xlu0 %1874
        %v1876 = vsel %vm1158, %v1866, 0.0
        %1877 = vadd.xlane.f32.xlu0 %v1876
        %v1878 = vpop.xlane.xlu0 %1877
        %v1879 = vrcp.pop %v1869
        %v1880 = vmul.f32 %v1860, %v1879
        %v1881 = vrcp.pop %v1872
        %v1882 = vmul.f32 %v1862, %v1881
        %v1883 = vrcp.pop %v1875
        %v1884 = vmul.f32 %v1864, %v1883
        %v1885 = vrcp.pop %v1878
        %v1886 = vmul.f32 %v1866, %v1885
        %v1888 = vsel %vm1158, %v1880, 0
        %v1891 = vsel %vm1158, %v1530, 0
        %1893 = vmatprep.subr.mxu0 0.0
        %1894 = vmatpush1.xpose.msra.mxu0 %v1891
        %1895 = vmatprep.subr.mxu0 0.0
        %1896 = vmatpush1.xpose.msra.mxu0 0.0
        %1897 = vmatprep.subr.mxu0 0.0
        %1898 = vmatpush1.xpose.msra.mxu0 0.0
        %1899 = vmatprep.subr.mxu0 0.0
        %1900 = vmatpush1.xpose.msra.mxu0 0.0
        %1901 = vmatprep.subr.mxu0 0.0
        %1902 = vmatpush1.xpose.msra.mxu0 0.0
        %1903 = vmatprep.subr.mxu0 0.0
        %1904 = vmatpush1.xpose.msra.mxu0 0.0
        %1905 = vmatprep.subr.mxu0 0.0
        %1906 = vmatpush1.xpose.msra.mxu0 0.0
        %1907 = vmatprep.subr.mxu0 0.0
        %1908 = vmatpush1.xpose.msra.mxu0 0.0
        %1909 = vmatprep.subr.mxu0 0.0
        %1910 = vmatpush1.xpose.msra.mxu0 0.0
        %1911 = vmatprep.subr.mxu0 0.0
        %1912 = vmatpush1.xpose.msra.mxu0 0.0
        %1913 = vmatprep.subr.mxu0 0.0
        %1914 = vmatpush1.xpose.msra.mxu0 0.0
        %1915 = vmatprep.subr.mxu0 0.0
        %1916 = vmatpush1.xpose.msra.mxu0 0.0
        %1917 = vmatprep.subr.mxu0 0.0
        %1918 = vmatpush1.xpose.msra.mxu0 0.0
        %1919 = vmatprep.subr.mxu0 0.0
        %1920 = vmatpush1.xpose.msra.mxu0 0.0
        %1921 = vmatprep.subr.mxu0 0.0
        %1922 = vmatpush1.xpose.msra.mxu0 0.0
        %1923 = vmatprep.subr.mxu0 0.0
        %1924 = vmatpush1.xpose.msra.mxu0 0.0
        %1925 = vmatprep.subr.mxu0 0.0
        %1926 = vmatpush1.xpose.msra.mxu0 0.0
        %1927 = vmatprep.subr.mxu0 0.0
        %1928 = vmatpush1.xpose.msra.mxu0 0.0
        %1929 = vmatprep.subr.mxu0 0.0
        %1930 = vmatpush1.xpose.msra.mxu0 0.0
        %1931 = vmatprep.subr.mxu0 0.0
        %1932 = vmatpush1.xpose.msra.mxu0 0.0
        %1933 = vmatprep.subr.mxu0 0.0
        %1934 = vmatpush1.xpose.msra.mxu0 0.0
        %1935 = vmatprep.subr.mxu0 0.0
        %1936 = vmatpush1.xpose.msra.mxu0 0.0
        %1937 = vmatprep.subr.mxu0 0.0
        %1938 = vmatpush1.xpose.msra.mxu0 0.0
        %1939 = vmatprep.subr.mxu0 0.0
        %1940 = vmatpush1.xpose.msra.mxu0 0.0
        %1941 = vmatprep.subr.mxu0 0.0
        %1942 = vmatpush1.xpose.msra.mxu0 0.0
        %1943 = vmatprep.subr.mxu0 0.0
        %1944 = vmatpush1.xpose.msra.mxu0 0.0
        %1945 = vmatprep.subr.mxu0 0.0
        %1946 = vmatpush1.xpose.msra.mxu0 0.0
        %1947 = vmatprep.subr.mxu0 0.0
        %1948 = vmatpush1.xpose.msra.mxu0 0.0
        %1949 = vmatprep.subr.mxu0 0.0
        %1950 = vmatpush1.xpose.msra.mxu0 0.0
        %1951 = vmatprep.subr.mxu0 0.0
        %1952 = vmatpush1.xpose.msra.mxu0 0.0
        %1953 = vmatprep.subr.mxu0 0.0
        %1954 = vmatpush1.xpose.msra.mxu0 0.0
        %1955 = vmatprep.subr.mxu0 0.0
        %1956 = vmatpush1.xpose.msra.mxu0 0.0
        %1957 = vmatprep.mubr.f32.mxu0 0.0
        %1958 = vmatmul.mubr.f32.gmra.mrb[0].mxu0 %v1888
        %v1959 = vpop.f32.mrb[0].mxu0
        %v1960 = vadd.f32 0.0, %v1959
        %v1961 = vpop.f32.mrb[0].mxu0
        %1962 = vdwg.mxu0
        %v1964 = vsel %vm1158, %v1882, 0
        %v1967 = vsel %vm1158, %v1535, 0
        %1969 = vmatprep.subr.mxu0 0.0
        %1970 = vmatpush1.xpose.msra.mxu0 %v1967
        %1971 = vmatprep.subr.mxu0 0.0
        %1972 = vmatpush1.xpose.msra.mxu0 0.0
        %1973 = vmatprep.subr.mxu0 0.0
        %1974 = vmatpush1.xpose.msra.mxu0 0.0
        %1975 = vmatprep.subr.mxu0 0.0
        %1976 = vmatpush1.xpose.msra.mxu0 0.0
        %1977 = vmatprep.subr.mxu0 0.0
        %1978 = vmatpush1.xpose.msra.mxu0 0.0
        %1979 = vmatprep.subr.mxu0 0.0
        %1980 = vmatpush1.xpose.msra.mxu0 0.0
        %1981 = vmatprep.subr.mxu0 0.0
        %1982 = vmatpush1.xpose.msra.mxu0 0.0
        %1983 = vmatprep.subr.mxu0 0.0
        %1984 = vmatpush1.xpose.msra.mxu0 0.0
        %1985 = vmatprep.subr.mxu0 0.0
        %1986 = vmatpush1.xpose.msra.mxu0 0.0
        %1987 = vmatprep.subr.mxu0 0.0
        %1988 = vmatpush1.xpose.msra.mxu0 0.0
        %1989 = vmatprep.subr.mxu0 0.0
        %1990 = vmatpush1.xpose.msra.mxu0 0.0
        %1991 = vmatprep.subr.mxu0 0.0
        %1992 = vmatpush1.xpose.msra.mxu0 0.0
        %1993 = vmatprep.subr.mxu0 0.0
        %1994 = vmatpush1.xpose.msra.mxu0 0.0
        %1995 = vmatprep.subr.mxu0 0.0
        %1996 = vmatpush1.xpose.msra.mxu0 0.0
        %1997 = vmatprep.subr.mxu0 0.0
        %1998 = vmatpush1.xpose.msra.mxu0 0.0
        %1999 = vmatprep.subr.mxu0 0.0
        %2000 = vmatpush1.xpose.msra.mxu0 0.0
        %2001 = vmatprep.subr.mxu0 0.0
        %2002 = vmatpush1.xpose.msra.mxu0 0.0
        %2003 = vmatprep.subr.mxu0 0.0
        %2004 = vmatpush1.xpose.msra.mxu0 0.0
        %2005 = vmatprep.subr.mxu0 0.0
        %2006 = vmatpush1.xpose.msra.mxu0 0.0
        %2007 = vmatprep.subr.mxu0 0.0
        %2008 = vmatpush1.xpose.msra.mxu0 0.0
        %2009 = vmatprep.subr.mxu0 0.0
        %2010 = vmatpush1.xpose.msra.mxu0 0.0
        %2011 = vmatprep.subr.mxu0 0.0
        %2012 = vmatpush1.xpose.msra.mxu0 0.0
        %2013 = vmatprep.subr.mxu0 0.0
        %2014 = vmatpush1.xpose.msra.mxu0 0.0
        %2015 = vmatprep.subr.mxu0 0.0
        %2016 = vmatpush1.xpose.msra.mxu0 0.0
        %2017 = vmatprep.subr.mxu0 0.0
        %2018 = vmatpush1.xpose.msra.mxu0 0.0
        %2019 = vmatprep.subr.mxu0 0.0
        %2020 = vmatpush1.xpose.msra.mxu0 0.0
        %2021 = vmatprep.subr.mxu0 0.0
        %2022 = vmatpush1.xpose.msra.mxu0 0.0
        %2023 = vmatprep.subr.mxu0 0.0
        %2024 = vmatpush1.xpose.msra.mxu0 0.0
        %2025 = vmatprep.subr.mxu0 0.0
        %2026 = vmatpush1.xpose.msra.mxu0 0.0
        %2027 = vmatprep.subr.mxu0 0.0
        %2028 = vmatpush1.xpose.msra.mxu0 0.0
        %2029 = vmatprep.subr.mxu0 0.0
        %2030 = vmatpush1.xpose.msra.mxu0 0.0
        %2031 = vmatprep.subr.mxu0 0.0
        %2032 = vmatpush1.xpose.msra.mxu0 0.0
        %2033 = vmatprep.mubr.f32.mxu0 0.0
        %2034 = vmatmul.mubr.f32.gmra.mrb[0].mxu0 %v1964
        %v2035 = vpop.f32.mrb[0].mxu0
        %v2036 = vadd.f32 0.0, %v2035
        %v2037 = vpop.f32.mrb[0].mxu0
        %2038 = vdwg.mxu0
        %v2040 = vsel %vm1158, %v1884, 0
        %v2043 = vsel %vm1158, %v1540, 0
        %2045 = vmatprep.subr.mxu0 0.0
        %2046 = vmatpush1.xpose.msra.mxu0 %v2043
        %2047 = vmatprep.subr.mxu0 0.0
        %2048 = vmatpush1.xpose.msra.mxu0 0.0
        %2049 = vmatprep.subr.mxu0 0.0
        %2050 = vmatpush1.xpose.msra.mxu0 0.0
        %2051 = vmatprep.subr.mxu0 0.0
        %2052 = vmatpush1.xpose.msra.mxu0 0.0
        %2053 = vmatprep.subr.mxu0 0.0
        %2054 = vmatpush1.xpose.msra.mxu0 0.0
        %2055 = vmatprep.subr.mxu0 0.0
        %2056 = vmatpush1.xpose.msra.mxu0 0.0
        %2057 = vmatprep.subr.mxu0 0.0
        %2058 = vmatpush1.xpose.msra.mxu0 0.0
        %2059 = vmatprep.subr.mxu0 0.0
        %2060 = vmatpush1.xpose.msra.mxu0 0.0
        %2061 = vmatprep.subr.mxu0 0.0
        %2062 = vmatpush1.xpose.msra.mxu0 0.0
        %2063 = vmatprep.subr.mxu0 0.0
        %2064 = vmatpush1.xpose.msra.mxu0 0.0
        %2065 = vmatprep.subr.mxu0 0.0
        %2066 = vmatpush1.xpose.msra.mxu0 0.0
        %2067 = vmatprep.subr.mxu0 0.0
        %2068 = vmatpush1.xpose.msra.mxu0 0.0
        %2069 = vmatprep.subr.mxu0 0.0
        %2070 = vmatpush1.xpose.msra.mxu0 0.0
        %2071 = vmatprep.subr.mxu0 0.0
        %2072 = vmatpush1.xpose.msra.mxu0 0.0
        %2073 = vmatprep.subr.mxu0 0.0
        %2074 = vmatpush1.xpose.msra.mxu0 0.0
        %2075 = vmatprep.subr.mxu0 0.0
        %2076 = vmatpush1.xpose.msra.mxu0 0.0
        %2077 = vmatprep.subr.mxu0 0.0
        %2078 = vmatpush1.xpose.msra.mxu0 0.0
        %2079 = vmatprep.subr.mxu0 0.0
        %2080 = vmatpush1.xpose.msra.mxu0 0.0
        %2081 = vmatprep.subr.mxu0 0.0
        %2082 = vmatpush1.xpose.msra.mxu0 0.0
        %2083 = vmatprep.subr.mxu0 0.0
        %2084 = vmatpush1.xpose.msra.mxu0 0.0
        %2085 = vmatprep.subr.mxu0 0.0
        %2086 = vmatpush1.xpose.msra.mxu0 0.0
        %2087 = vmatprep.subr.mxu0 0.0
        %2088 = vmatpush1.xpose.msra.mxu0 0.0
        %2089 = vmatprep.subr.mxu0 0.0
        %2090 = vmatpush1.xpose.msra.mxu0 0.0
        %2091 = vmatprep.subr.mxu0 0.0
        %2092 = vmatpush1.xpose.msra.mxu0 0.0
        %2093 = vmatprep.subr.mxu0 0.0
        %2094 = vmatpush1.xpose.msra.mxu0 0.0
        %2095 = vmatprep.subr.mxu0 0.0
        %2096 = vmatpush1.xpose.msra.mxu0 0.0
        %2097 = vmatprep.subr.mxu0 0.0
        %2098 = vmatpush1.xpose.msra.mxu0 0.0
        %2099 = vmatprep.subr.mxu0 0.0
        %2100 = vmatpush1.xpose.msra.mxu0 0.0
        %2101 = vmatprep.subr.mxu0 0.0
        %2102 = vmatpush1.xpose.msra.mxu0 0.0
        %2103 = vmatprep.subr.mxu0 0.0
        %2104 = vmatpush1.xpose.msra.mxu0 0.0
        %2105 = vmatprep.subr.mxu0 0.0
        %2106 = vmatpush1.xpose.msra.mxu0 0.0
        %2107 = vmatprep.subr.mxu0 0.0
        %2108 = vmatpush1.xpose.msra.mxu0 0.0
        %2109 = vmatprep.mubr.f32.mxu0 0.0
        %2110 = vmatmul.mubr.f32.gmra.mrb[0].mxu0 %v2040
        %v2111 = vpop.f32.mrb[0].mxu0
        %v2112 = vadd.f32 0.0, %v2111
        %v2113 = vpop.f32.mrb[0].mxu0
        %2114 = vdwg.mxu0
        %v2116 = vsel %vm1158, %v1886, 0
        %v2119 = vsel %vm1158, %v1545, 0
        %2121 = vmatprep.subr.mxu0 0.0
        %2122 = vmatpush1.xpose.msra.mxu0 %v2119
        %2123 = vmatprep.subr.mxu0 0.0
        %2124 = vmatpush1.xpose.msra.mxu0 0.0
        %2125 = vmatprep.subr.mxu0 0.0
        %2126 = vmatpush1.xpose.msra.mxu0 0.0
        %2127 = vmatprep.subr.mxu0 0.0
        %2128 = vmatpush1.xpose.msra.mxu0 0.0
        %2129 = vmatprep.subr.mxu0 0.0
        %2130 = vmatpush1.xpose.msra.mxu0 0.0
        %2131 = vmatprep.subr.mxu0 0.0
        %2132 = vmatpush1.xpose.msra.mxu0 0.0
        %2133 = vmatprep.subr.mxu0 0.0
        %2134 = vmatpush1.xpose.msra.mxu0 0.0
        %2135 = vmatprep.subr.mxu0 0.0
        %2136 = vmatpush1.xpose.msra.mxu0 0.0
        %2137 = vmatprep.subr.mxu0 0.0
        %2138 = vmatpush1.xpose.msra.mxu0 0.0
        %2139 = vmatprep.subr.mxu0 0.0
        %2140 = vmatpush1.xpose.msra.mxu0 0.0
        %2141 = vmatprep.subr.mxu0 0.0
        %2142 = vmatpush1.xpose.msra.mxu0 0.0
        %2143 = vmatprep.subr.mxu0 0.0
        %2144 = vmatpush1.xpose.msra.mxu0 0.0
        %2145 = vmatprep.subr.mxu0 0.0
        %2146 = vmatpush1.xpose.msra.mxu0 0.0
        %2147 = vmatprep.subr.mxu0 0.0
        %2148 = vmatpush1.xpose.msra.mxu0 0.0
        %2149 = vmatprep.subr.mxu0 0.0
        %2150 = vmatpush1.xpose.msra.mxu0 0.0
        %2151 = vmatprep.subr.mxu0 0.0
        %2152 = vmatpush1.xpose.msra.mxu0 0.0
        %2153 = vmatprep.subr.mxu0 0.0
        %2154 = vmatpush1.xpose.msra.mxu0 0.0
        %2155 = vmatprep.subr.mxu0 0.0
        %2156 = vmatpush1.xpose.msra.mxu0 0.0
        %2157 = vmatprep.subr.mxu0 0.0
        %2158 = vmatpush1.xpose.msra.mxu0 0.0
        %2159 = vmatprep.subr.mxu0 0.0
        %2160 = vmatpush1.xpose.msra.mxu0 0.0
        %2161 = vmatprep.subr.mxu0 0.0
        %2162 = vmatpush1.xpose.msra.mxu0 0.0
        %2163 = vmatprep.subr.mxu0 0.0
        %2164 = vmatpush1.xpose.msra.mxu0 0.0
        %2165 = vmatprep.subr.mxu0 0.0
        %2166 = vmatpush1.xpose.msra.mxu0 0.0
        %2167 = vmatprep.subr.mxu0 0.0
        %2168 = vmatpush1.xpose.msra.mxu0 0.0
        %2169 = vmatprep.subr.mxu0 0.0
        %2170 = vmatpush1.xpose.msra.mxu0 0.0
        %2171 = vmatprep.subr.mxu0 0.0
        %2172 = vmatpush1.xpose.msra.mxu0 0.0
        %2173 = vmatprep.subr.mxu0 0.0
        %2174 = vmatpush1.xpose.msra.mxu0 0.0
        %2175 = vmatprep.subr.mxu0 0.0
        %2176 = vmatpush1.xpose.msra.mxu0 0.0
        %2177 = vmatprep.subr.mxu0 0.0
        %2178 = vmatpush1.xpose.msra.mxu0 0.0
        %2179 = vmatprep.subr.mxu0 0.0
        %2180 = vmatpush1.xpose.msra.mxu0 0.0
        %2181 = vmatprep.subr.mxu0 0.0
        %2182 = vmatpush1.xpose.msra.mxu0 0.0
        %2183 = vmatprep.subr.mxu0 0.0
        %2184 = vmatpush1.xpose.msra.mxu0 0.0
        %2185 = vmatprep.mubr.f32.mxu0 0.0
        %2186 = vmatmul.mubr.f32.gmra.mrb[0].mxu0 %v2116
        %v2187 = vpop.f32.mrb[0].mxu0
        %v2188 = vadd.f32 0.0, %v2187
        %v2189 = vpop.f32.mrb[0].mxu0
        %2190 = vdwg.mxu0
        %2192 = vrot.lane.b32.xlu0 %v2036, 8
        %v2193 = vpop.permute.xlu0 %2192
        %2196 = vrot.lane.b32.xlu0 %v2112, 16
        %v2197 = vpop.permute.xlu0 %2196
        %2200 = vrot.lane.b32.xlu0 %v2188, 24
        %v2201 = vpop.permute.xlu0 %2200
        %v2203 = vsel %vm490, %v1960, %v2193
        %v2204 = vsel %vm1158, %v2203, %v2197
        %v2205 = vsel %vm1160, %v2204, %v2201
        %v2206 = vld [vmem:[%s6 + $0x6] sm:$0x1]
        %v2207 = vlaneseq
        %v2208 = vshrl.u32 %v2207, 7
        %v2209 = vsub.s32 0, %v2208
        %v2210 = vrot.slane %v2206, %v2209
        %v2212 = vsel %vm335, %v2205, 0
        %2214 = vmatprep.subr.mxu0 0.0
        %2215 = vmatpush1.msra.mxu0 %v1276
        %2216 = vmatprep.subr.mxu0 0.0
        %2217 = vmatpush1.msra.mxu0 %v1277
        %2218 = vmatprep.subr.mxu0 0.0
        %2219 = vmatpush1.msra.mxu0 %v1278
        %2220 = vmatprep.subr.mxu0 0.0
        %2221 = vmatpush1.msra.mxu0 %v1279
        %2222 = vmatprep.subr.mxu0 0.0
        %2223 = vmatpush1.msra.mxu0 0.0
        %2224 = vmatprep.subr.mxu0 0.0
        %2225 = vmatpush1.msra.mxu0 0.0
        %2226 = vmatprep.subr.mxu0 0.0
        %2227 = vmatpush1.msra.mxu0 0.0
        %2228 = vmatprep.subr.mxu0 0.0
        %2229 = vmatpush1.msra.mxu0 0.0
        %2230 = vmatprep.subr.mxu0 0.0
        %2231 = vmatpush1.msra.mxu0 0.0
        %2232 = vmatprep.subr.mxu0 0.0
        %2233 = vmatpush1.msra.mxu0 0.0
        %2234 = vmatprep.subr.mxu0 0.0
        %2235 = vmatpush1.msra.mxu0 0.0
        %2236 = vmatprep.subr.mxu0 0.0
        %2237 = vmatpush1.msra.mxu0 0.0
        %2238 = vmatprep.subr.mxu0 0.0
        %2239 = vmatpush1.msra.mxu0 0.0
        %2240 = vmatprep.subr.mxu0 0.0
        %2241 = vmatpush1.msra.mxu0 0.0
        %2242 = vmatprep.subr.mxu0 0.0
        %2243 = vmatpush1.msra.mxu0 0.0
        %2244 = vmatprep.subr.mxu0 0.0
        %2245 = vmatpush1.msra.mxu0 0.0
        %2246 = vmatprep.subr.mxu0 0.0
        %2247 = vmatpush1.msra.mxu0 0.0
        %2248 = vmatprep.subr.mxu0 0.0
        %2249 = vmatpush1.msra.mxu0 0.0
        %2250 = vmatprep.subr.mxu0 0.0
        %2251 = vmatpush1.msra.mxu0 0.0
        %2252 = vmatprep.subr.mxu0 0.0
        %2253 = vmatpush1.msra.mxu0 0.0
        %2254 = vmatprep.subr.mxu0 0.0
        %2255 = vmatpush1.msra.mxu0 0.0
        %2256 = vmatprep.subr.mxu0 0.0
        %2257 = vmatpush1.msra.mxu0 0.0
        %2258 = vmatprep.subr.mxu0 0.0
        %2259 = vmatpush1.msra.mxu0 0.0
        %2260 = vmatprep.subr.mxu0 0.0
        %2261 = vmatpush1.msra.mxu0 0.0
        %2262 = vmatprep.subr.mxu0 0.0
        %2263 = vmatpush1.msra.mxu0 0.0
        %2264 = vmatprep.subr.mxu0 0.0
        %2265 = vmatpush1.msra.mxu0 0.0
        %2266 = vmatprep.subr.mxu0 0.0
        %2267 = vmatpush1.msra.mxu0 0.0
        %2268 = vmatprep.subr.mxu0 0.0
        %2269 = vmatpush1.msra.mxu0 0.0
        %2270 = vmatprep.subr.mxu0 0.0
        %2271 = vmatpush1.msra.mxu0 0.0
        %2272 = vmatprep.subr.mxu0 0.0
        %2273 = vmatpush1.msra.mxu0 0.0
        %2274 = vmatprep.subr.mxu0 0.0
        %2275 = vmatpush1.msra.mxu0 0.0
        %2276 = vmatprep.subr.mxu0 0.0
        %2277 = vmatpush1.msra.mxu0 0.0
        %2278 = vmatprep.mubr.f32.mxu0 0.0
        %2279 = vmatmul.mubr.f32.gmra.mrb[0].mxu0 %v2212
        %v2280 = vpop.f32.mrb[0].mxu0
        %v2281 = vadd.f32 %v2210, %v2280
        %v2282 = vpop.f32.mrb[0].mxu0
        %2283 = vdwg.mxu0
        %v2284 = vadd.f32 %v1269, %v2281
        %v2285 = vld [vmem:[%s6 + $0x7] sm:$0x1]
        %v2286 = vld [vmem:[%s6 + $0x8] sm:$0x1]
        %v2287 = vsel %vm335, %v2284, 0.0
        %2288 = vadd.xlane.f32.xlu0 %v2287
        %v2289 = vpop.xlane.xlu0 %2288
        %v2290 = vmul.f32 %v2289, %v1246
        %v2291 = vmul.f32 %v2284, %v2284
        %v2292 = vsel %vm335, %v2291, 0.0
        %2293 = vadd.xlane.f32.xlu0 %v2292
        %v2294 = vpop.xlane.xlu0 %2293
        %v2295 = vmul.f32 %v2294, %v1246
        %v2296 = vmul.f32 %v2290, %v2290
        %v2297 = vsub.f32 %v2295, %v2296
        %v2298 = vmax.f32 %v2297, 0.0
        %v2299 = vsub.f32 %v2284, %v2290
        %v2300 = vadd.f32 %v2298, 1e-05
        %v2301 = vrsqrt.pop %v2300
        %v2302 = vmul.f32 %v2299, %v2301
        %v2303 = vlaneseq
        %v2304 = vshrl.u32 %v2303, 7
        %v2305 = vsub.s32 0, %v2304
        %v2306 = vrot.slane %v2285, %v2305
        %v2307 = vmul.f32 %v2302, %v2306
        %v2308 = vlaneseq
        %v2309 = vshrl.u32 %v2308, 7
        %v2310 = vsub.s32 0, %v2309
        %v2311 = vrot.slane %v2286, %v2310
        %v2312 = vadd.f32 %v2307, %v2311
        %s2313 = scalar_lea.vmem %s2, 32
        %v2314 = vld [vmem:[%s2313] sm:$0xff]
        %v2315 = vld [vmem:[%s2313 + $0x8] sm:$0xff]
        %v2316 = vld [vmem:[%s2313 + $0x10] sm:$0xff]
        %v2317 = vld [vmem:[%s2313 + $0x18] sm:$0xff]
        %s2318 = scalar_lea.vmem %s3, 64
        %v2319 = vld [vmem:[%s2318] sm:$0xff]
        %v2320 = vld [vmem:[%s2318 + $0x8] sm:$0xff]
        %v2321 = vld [vmem:[%s2318 + $0x10] sm:$0xff]
        %v2322 = vld [vmem:[%s2318 + $0x18] sm:$0xff]
        %v2323 = vld [vmem:[%s2318 + $0x20] sm:$0xff]
        %v2324 = vld [vmem:[%s2318 + $0x28] sm:$0xff]
        %v2325 = vld [vmem:[%s2318 + $0x30] sm:$0xff]
        %v2326 = vld [vmem:[%s2318 + $0x38] sm:$0xff]
        %v2327 = vld [vmem:[%s6 + $0x9] sm:$0x1]
        %v2328 = vlaneseq
        %v2329 = vshrl.u32 %v2328, 7
        %v2330 = vsub.s32 0, %v2329
        %v2331 = vrot.slane %v2327, %v2330
        %v2333 = vsel %vm335, %v2312, 0
        %2335 = vmatprep.subr.mxu0 0.0
        %2336 = vmatpush1.msra.mxu0 %v2314
        %2337 = vmatprep.subr.mxu0 0.0
        %2338 = vmatpush1.msra.mxu0 %v2315
        %2339 = vmatprep.subr.mxu0 0.0
        %2340 = vmatpush1.msra.mxu0 %v2316
        %2341 = vmatprep.subr.mxu0 0.0
        %2342 = vmatpush1.msra.mxu0 %v2317
        %2343 = vmatprep.subr.mxu0 0.0
        %2344 = vmatpush1.msra.mxu0 0.0
        %2345 = vmatprep.subr.mxu0 0.0
        %2346 = vmatpush1.msra.mxu0 0.0
        %2347 = vmatprep.subr.mxu0 0.0
        %2348 = vmatpush1.msra.mxu0 0.0
        %2349 = vmatprep.subr.mxu0 0.0
        %2350 = vmatpush1.msra.mxu0 0.0
        %2351 = vmatprep.subr.mxu0 0.0
        %2352 = vmatpush1.msra.mxu0 0.0
        %2353 = vmatprep.subr.mxu0 0.0
        %2354 = vmatpush1.msra.mxu0 0.0
        %2355 = vmatprep.subr.mxu0 0.0
        %2356 = vmatpush1.msra.mxu0 0.0
        %2357 = vmatprep.subr.mxu0 0.0
        %2358 = vmatpush1.msra.mxu0 0.0
        %2359 = vmatprep.subr.mxu0 0.0
        %2360 = vmatpush1.msra.mxu0 0.0
        %2361 = vmatprep.subr.mxu0 0.0
        %2362 = vmatpush1.msra.mxu0 0.0
        %2363 = vmatprep.subr.mxu0 0.0
        %2364 = vmatpush1.msra.mxu0 0.0
        %2365 = vmatprep.subr.mxu0 0.0
        %2366 = vmatpush1.msra.mxu0 0.0
        %2367 = vmatprep.subr.mxu0 0.0
        %2368 = vmatpush1.msra.mxu0 0.0
        %2369 = vmatprep.subr.mxu0 0.0
        %2370 = vmatpush1.msra.mxu0 0.0
        %2371 = vmatprep.subr.mxu0 0.0
        %2372 = vmatpush1.msra.mxu0 0.0
        %2373 = vmatprep.subr.mxu0 0.0
        %2374 = vmatpush1.msra.mxu0 0.0
        %2375 = vmatprep.subr.mxu0 0.0
        %2376 = vmatpush1.msra.mxu0 0.0
        %2377 = vmatprep.subr.mxu0 0.0
        %2378 = vmatpush1.msra.mxu0 0.0
        %2379 = vmatprep.subr.mxu0 0.0
        %2380 = vmatpush1.msra.mxu0 0.0
        %2381 = vmatprep.subr.mxu0 0.0
        %2382 = vmatpush1.msra.mxu0 0.0
        %2383 = vmatprep.subr.mxu0 0.0
        %2384 = vmatpush1.msra.mxu0 0.0
        %2385 = vmatprep.subr.mxu0 0.0
        %2386 = vmatpush1.msra.mxu0 0.0
        %2387 = vmatprep.subr.mxu0 0.0
        %2388 = vmatpush1.msra.mxu0 0.0
        %2389 = vmatprep.subr.mxu0 0.0
        %2390 = vmatpush1.msra.mxu0 0.0
        %2391 = vmatprep.subr.mxu0 0.0
        %2392 = vmatpush1.msra.mxu0 0.0
        %2393 = vmatprep.subr.mxu0 0.0
        %2394 = vmatpush1.msra.mxu0 0.0
        %2395 = vmatprep.subr.mxu0 0.0
        %2396 = vmatpush1.msra.mxu0 0.0
        %2397 = vmatprep.subr.mxu0 0.0
        %2398 = vmatpush1.msra.mxu0 0.0
        %2399 = vmatprep.mubr.f32.mxu0 0.0
        %2400 = vmatmul.mubr.f32.gmra.mrb[0].mxu0 %v2333
        %v2401 = vpop.f32.mrb[0].mxu0
        %v2402 = vadd.f32 %v2331, %v2401
        %v2403 = vpop.f32.mrb[0].mxu0
        %2404 = vdwg.mxu0
        %v2405 = vmax.f32 %v2402, 0.0
        %v2406 = vld [vmem:[%s6 + $0xa] sm:$0x1]
        %v2407 = vlaneseq
        %v2408 = vshrl.u32 %v2407, 7
        %v2409 = vsub.s32 0, %v2408
        %v2410 = vrot.slane %v2406, %v2409
        %vm2411 = vcmask 523264
        %v2413 = vsel %vm2411, %v2405, 0
        %2415 = vmatprep.subr.mxu0 0.0
        %2416 = vmatpush1.msra.mxu0 %v2319
        %2417 = vmatprep.subr.mxu0 0.0
        %2418 = vmatpush1.msra.mxu0 %v2320
        %2419 = vmatprep.subr.mxu0 0.0
        %2420 = vmatpush1.msra.mxu0 %v2321
        %2421 = vmatprep.subr.mxu0 0.0
        %2422 = vmatpush1.msra.mxu0 %v2322
        %2423 = vmatprep.subr.mxu0 0.0
        %2424 = vmatpush1.msra.mxu0 %v2323
        %2425 = vmatprep.subr.mxu0 0.0
        %2426 = vmatpush1.msra.mxu0 %v2324
        %2427 = vmatprep.subr.mxu0 0.0
        %2428 = vmatpush1.msra.mxu0 %v2325
        %2429 = vmatprep.subr.mxu0 0.0
        %2430 = vmatpush1.msra.mxu0 %v2326
        %2431 = vmatprep.subr.mxu0 0.0
        %2432 = vmatpush1.msra.mxu0 0.0
        %2433 = vmatprep.subr.mxu0 0.0
        %2434 = vmatpush1.msra.mxu0 0.0
        %2435 = vmatprep.subr.mxu0 0.0
        %2436 = vmatpush1.msra.mxu0 0.0
        %2437 = vmatprep.subr.mxu0 0.0
        %2438 = vmatpush1.msra.mxu0 0.0
        %2439 = vmatprep.subr.mxu0 0.0
        %2440 = vmatpush1.msra.mxu0 0.0
        %2441 = vmatprep.subr.mxu0 0.0
        %2442 = vmatpush1.msra.mxu0 0.0
        %2443 = vmatprep.subr.mxu0 0.0
        %2444 = vmatpush1.msra.mxu0 0.0
        %2445 = vmatprep.subr.mxu0 0.0
        %2446 = vmatpush1.msra.mxu0 0.0
        %2447 = vmatprep.subr.mxu0 0.0
        %2448 = vmatpush1.msra.mxu0 0.0
        %2449 = vmatprep.subr.mxu0 0.0
        %2450 = vmatpush1.msra.mxu0 0.0
        %2451 = vmatprep.subr.mxu0 0.0
        %2452 = vmatpush1.msra.mxu0 0.0
        %2453 = vmatprep.subr.mxu0 0.0
        %2454 = vmatpush1.msra.mxu0 0.0
        %2455 = vmatprep.subr.mxu0 0.0
        %2456 = vmatpush1.msra.mxu0 0.0
        %2457 = vmatprep.subr.mxu0 0.0
        %2458 = vmatpush1.msra.mxu0 0.0
        %2459 = vmatprep.subr.mxu0 0.0
        %2460 = vmatpush1.msra.mxu0 0.0
        %2461 = vmatprep.subr.mxu0 0.0
        %2462 = vmatpush1.msra.mxu0 0.0
        %2463 = vmatprep.subr.mxu0 0.0
        %2464 = vmatpush1.msra.mxu0 0.0
        %2465 = vmatprep.subr.mxu0 0.0
        %2466 = vmatpush1.msra.mxu0 0.0
        %2467 = vmatprep.subr.mxu0 0.0
        %2468 = vmatpush1.msra.mxu0 0.0
        %2469 = vmatprep.subr.mxu0 0.0
        %2470 = vmatpush1.msra.mxu0 0.0
        %2471 = vmatprep.subr.mxu0 0.0
        %2472 = vmatpush1.msra.mxu0 0.0
        %2473 = vmatprep.subr.mxu0 0.0
        %2474 = vmatpush1.msra.mxu0 0.0
        %2475 = vmatprep.subr.mxu0 0.0
        %2476 = vmatpush1.msra.mxu0 0.0
        %2477 = vmatprep.subr.mxu0 0.0
        %2478 = vmatpush1.msra.mxu0 0.0
        %2479 = vmatprep.mubr.f32.mxu0 0.0
        %2480 = vmatmul.mubr.f32.gmra.mrb[0].mxu0 %v2413
        %v2481 = vpop.f32.mrb[0].mxu0
        %v2482 = vadd.f32 %v2410, %v2481
        %v2483 = vpop.f32.mrb[0].mxu0
        %2484 = vdwg.mxu0
        %v2485 = vadd.f32 %v2312, %v2482
        %v2486 = vld [vmem:[%s6 + $0xb] sm:$0x1]
        %v2487 = vld [vmem:[%s6 + $0xc] sm:$0x1]
        %v2488 = vsel %vm335, %v2485, 0.0
        %2489 = vadd.xlane.f32.xlu0 %v2488
        %v2490 = vpop.xlane.xlu0 %2489
        %v2491 = vmul.f32 %v2490, %v1246
        %v2492 = vmul.f32 %v2485, %v2485
        %v2493 = vsel %vm335, %v2492, 0.0
        %2494 = vadd.xlane.f32.xlu0 %v2493
        %v2495 = vpop.xlane.xlu0 %2494
        %v2496 = vmul.f32 %v2495, %v1246
        %v2497 = vmul.f32 %v2491, %v2491
        %v2498 = vsub.f32 %v2496, %v2497
        %v2499 = vmax.f32 %v2498, 0.0
        %v2500 = vsub.f32 %v2485, %v2491
        %v2501 = vadd.f32 %v2499, 1e-05
        %v2502 = vrsqrt.pop %v2501
        %v2503 = vmul.f32 %v2500, %v2502
        %v2504 = vlaneseq
        %v2505 = vshrl.u32 %v2504, 7
        %v2506 = vsub.s32 0, %v2505
        %v2507 = vrot.slane %v2486, %v2506
        %v2508 = vmul.f32 %v2503, %v2507
        %v2509 = vlaneseq
        %v2510 = vshrl.u32 %v2509, 7
        %v2511 = vsub.s32 0, %v2510
        %v2512 = vrot.slane %v2487, %v2511
        %v2513 = vadd.f32 %v2508, %v2512
        %s2514 = scalar_lea.vmem %s2, 64
        %v2515 = vld [vmem:[%s2514] sm:$0xff]
        %v2516 = vld [vmem:[%s2514 + $0x8] sm:$0xff]
        %v2517 = vld [vmem:[%s2514 + $0x10] sm:$0xff]
        %v2518 = vld [vmem:[%s2514 + $0x18] sm:$0xff]
        %s2519 = scalar_lea.vmem %s4, 128
        %v2520 = vld [vmem:[%s2519] sm:$0xff]
        %v2521 = vld [vmem:[%s2519 + $0x8] sm:$0xff]
        %v2522 = vld [vmem:[%s2519 + $0x10] sm:$0xff]
        %v2523 = vld [vmem:[%s2519 + $0x18] sm:$0xff]
        %s2524 = scalar_lea.vmem %s4, 160
        %v2525 = vld [vmem:[%s2524] sm:$0xff]
        %v2526 = vld [vmem:[%s2524 + $0x8] sm:$0xff]
        %v2527 = vld [vmem:[%s2524 + $0x10] sm:$0xff]
        %v2528 = vld [vmem:[%s2524 + $0x18] sm:$0xff]
        %v2529 = vadd.f32 %v2513, %v315
        %v2530 = vld [vmem:[%s6 + $0xd] sm:$0x1]
        %v2531 = vlaneseq
        %v2532 = vshrl.u32 %v2531, 7
        %v2533 = vsub.s32 0, %v2532
        %v2534 = vrot.slane %v2530, %v2533
        %v2536 = vsel %vm335, %v2529, 0
        %2538 = vmatprep.subr.mxu0 0.0
        %2539 = vmatpush1.msra.mxu0 %v2515
        %2540 = vmatprep.subr.mxu0 0.0
        %2541 = vmatpush1.msra.mxu0 %v2516
        %2542 = vmatprep.subr.mxu0 0.0
        %2543 = vmatpush1.msra.mxu0 %v2517
        %2544 = vmatprep.subr.mxu0 0.0
        %2545 = vmatpush1.msra.mxu0 %v2518
        %2546 = vmatprep.subr.mxu0 0.0
        %2547 = vmatpush1.msra.mxu0 0.0
        %2548 = vmatprep.subr.mxu0 0.0
        %2549 = vmatpush1.msra.mxu0 0.0
        %2550 = vmatprep.subr.mxu0 0.0
        %2551 = vmatpush1.msra.mxu0 0.0
        %2552 = vmatprep.subr.mxu0 0.0
        %2553 = vmatpush1.msra.mxu0 0.0
        %2554 = vmatprep.subr.mxu0 0.0
        %2555 = vmatpush1.msra.mxu0 0.0
        %2556 = vmatprep.subr.mxu0 0.0
        %2557 = vmatpush1.msra.mxu0 0.0
        %2558 = vmatprep.subr.mxu0 0.0
        %2559 = vmatpush1.msra.mxu0 0.0
        %2560 = vmatprep.subr.mxu0 0.0
        %2561 = vmatpush1.msra.mxu0 0.0
        %2562 = vmatprep.subr.mxu0 0.0
        %2563 = vmatpush1.msra.mxu0 0.0
        %2564 = vmatprep.subr.mxu0 0.0
        %2565 = vmatpush1.msra.mxu0 0.0
        %2566 = vmatprep.subr.mxu0 0.0
        %2567 = vmatpush1.msra.mxu0 0.0
        %2568 = vmatprep.subr.mxu0 0.0
        %2569 = vmatpush1.msra.mxu0 0.0
        %2570 = vmatprep.subr.mxu0 0.0
        %2571 = vmatpush1.msra.mxu0 0.0
        %2572 = vmatprep.subr.mxu0 0.0
        %2573 = vmatpush1.msra.mxu0 0.0
        %2574 = vmatprep.subr.mxu0 0.0
        %2575 = vmatpush1.msra.mxu0 0.0
        %2576 = vmatprep.subr.mxu0 0.0
        %2577 = vmatpush1.msra.mxu0 0.0
        %2578 = vmatprep.subr.mxu0 0.0
        %2579 = vmatpush1.msra.mxu0 0.0
        %2580 = vmatprep.subr.mxu0 0.0
        %2581 = vmatpush1.msra.mxu0 0.0
        %2582 = vmatprep.subr.mxu0 0.0
        %2583 = vmatpush1.msra.mxu0 0.0
        %2584 = vmatprep.subr.mxu0 0.0
        %2585 = vmatpush1.msra.mxu0 0.0
        %2586 = vmatprep.subr.mxu0 0.0
        %2587 = vmatpush1.msra.mxu0 0.0
        %2588 = vmatprep.subr.mxu0 0.0
        %2589 = vmatpush1.msra.mxu0 0.0
        %2590 = vmatprep.subr.mxu0 0.0
        %2591 = vmatpush1.msra.mxu0 0.0
        %2592 = vmatprep.subr.mxu0 0.0
        %2593 = vmatpush1.msra.mxu0 0.0
        %2594 = vmatprep.subr.mxu0 0.0
        %2595 = vmatpush1.msra.mxu0 0.0
        %2596 = vmatprep.subr.mxu0 0.0
        %2597 = vmatpush1.msra.mxu0 0.0
        %2598 = vmatprep.subr.mxu0 0.0
        %2599 = vmatpush1.msra.mxu0 0.0
        %2600 = vmatprep.subr.mxu0 0.0
        %2601 = vmatpush1.msra.mxu0 0.0
        %2602 = vmatprep.mubr.f32.mxu0 0.0
        %2603 = vmatmul.mubr.f32.gmra.mrb[0].mxu0 %v2536
        %v2604 = vpop.f32.mrb[0].mxu0
        %v2605 = vadd.f32 %v2534, %v2604
        %v2606 = vpop.f32.mrb[0].mxu0
        %2607 = vdwg.mxu0
        %v2608 = vld [vmem:[%s6 + $0xe] sm:$0x1]
        %v2609 = vlaneseq
        %v2610 = vshrl.u32 %v2609, 7
        %v2611 = vsub.s32 0, %v2610
        %v2612 = vrot.slane %v2608, %v2611
        %v2614 = vsel %vm335, %v2513, 0
        %2616 = vmatprep.subr.mxu0 0.0
        %2617 = vmatpush1.msra.mxu0 %v2520
        %2618 = vmatprep.subr.mxu0 0.0
        %2619 = vmatpush1.msra.mxu0 %v2521
        %2620 = vmatprep.subr.mxu0 0.0
        %2621 = vmatpush1.msra.mxu0 %v2522
        %2622 = vmatprep.subr.mxu0 0.0
        %2623 = vmatpush1.msra.mxu0 %v2523
        %2624 = vmatprep.subr.mxu0 0.0
        %2625 = vmatpush1.msra.mxu0 0.0
        %2626 = vmatprep.subr.mxu0 0.0
        %2627 = vmatpush1.msra.mxu0 0.0
        %2628 = vmatprep.subr.mxu0 0.0
        %2629 = vmatpush1.msra.mxu0 0.0
        %2630 = vmatprep.subr.mxu0 0.0
        %2631 = vmatpush1.msra.mxu0 0.0
        %2632 = vmatprep.subr.mxu0 0.0
        %2633 = vmatpush1.msra.mxu0 0.0
        %2634 = vmatprep.subr.mxu0 0.0
        %2635 = vmatpush1.msra.mxu0 0.0
        %2636 = vmatprep.subr.mxu0 0.0
        %2637 = vmatpush1.msra.mxu0 0.0
        %2638 = vmatprep.subr.mxu0 0.0
        %2639 = vmatpush1.msra.mxu0 0.0
        %2640 = vmatprep.subr.mxu0 0.0
        %2641 = vmatpush1.msra.mxu0 0.0
        %2642 = vmatprep.subr.mxu0 0.0
        %2643 = vmatpush1.msra.mxu0 0.0
        %2644 = vmatprep.subr.mxu0 0.0
        %2645 = vmatpush1.msra.mxu0 0.0
        %2646 = vmatprep.subr.mxu0 0.0
        %2647 = vmatpush1.msra.mxu0 0.0
        %2648 = vmatprep.subr.mxu0 0.0
        %2649 = vmatpush1.msra.mxu0 0.0
        %2650 = vmatprep.subr.mxu0 0.0
        %2651 = vmatpush1.msra.mxu0 0.0
        %2652 = vmatprep.subr.mxu0 0.0
        %2653 = vmatpush1.msra.mxu0 0.0
        %2654 = vmatprep.subr.mxu0 0.0
        %2655 = vmatpush1.msra.mxu0 0.0
        %2656 = vmatprep.subr.mxu0 0.0
        %2657 = vmatpush1.msra.mxu0 0.0
        %2658 = vmatprep.subr.mxu0 0.0
        %2659 = vmatpush1.msra.mxu0 0.0
        %2660 = vmatprep.subr.mxu0 0.0
        %2661 = vmatpush1.msra.mxu0 0.0
        %2662 = vmatprep.subr.mxu0 0.0
        %2663 = vmatpush1.msra.mxu0 0.0
        %2664 = vmatprep.subr.mxu0 0.0
        %2665 = vmatpush1.msra.mxu0 0.0
        %2666 = vmatprep.subr.mxu0 0.0
        %2667 = vmatpush1.msra.mxu0 0.0
        %2668 = vmatprep.subr.mxu0 0.0
        %2669 = vmatpush1.msra.mxu0 0.0
        %2670 = vmatprep.subr.mxu0 0.0
        %2671 = vmatpush1.msra.mxu0 0.0
        %2672 = vmatprep.subr.mxu0 0.0
        %2673 = vmatpush1.msra.mxu0 0.0
        %2674 = vmatprep.subr.mxu0 0.0
        %2675 = vmatpush1.msra.mxu0 0.0
        %2676 = vmatprep.subr.mxu0 0.0
        %2677 = vmatpush1.msra.mxu0 0.0
        %2678 = vmatprep.subr.mxu0 0.0
        %2679 = vmatpush1.msra.mxu0 0.0
        %2680 = vmatprep.mubr.f32.mxu0 0.0
        %2681 = vmatmul.mubr.f32.gmra.mrb[0].mxu0 %v2614
        %v2682 = vpop.f32.mrb[0].mxu0
        %v2683 = vadd.f32 %v2612, %v2682
        %v2684 = vpop.f32.mrb[0].mxu0
        %2685 = vdwg.mxu0
        %2687 = vrot.lane.b32.xlu0 %v2605, 96
        %v2688 = vpop.permute.xlu0 %2687
        %v2689 = vsel %vm490, %v2605, 0
        %v2691 = vsel %vm490, %v2688, 0
        %2693 = vmatprep.subr.mxu0 0.0
        %2694 = vmatpush1.xpose.msra.mxu0 %v2691
        %2695 = vmatprep.subr.mxu0 0.0
        %2696 = vmatpush1.xpose.msra.mxu0 0.0
        %2697 = vmatprep.subr.mxu0 0.0
        %2698 = vmatpush1.xpose.msra.mxu0 0.0
        %2699 = vmatprep.subr.mxu0 0.0
        %2700 = vmatpush1.xpose.msra.mxu0 0.0
        %2701 = vmatprep.subr.mxu0 0.0
        %2702 = vmatpush1.xpose.msra.mxu0 0.0
        %2703 = vmatprep.subr.mxu0 0.0
        %2704 = vmatpush1.xpose.msra.mxu0 0.0
        %2705 = vmatprep.subr.mxu0 0.0
        %2706 = vmatpush1.xpose.msra.mxu0 0.0
        %2707 = vmatprep.subr.mxu0 0.0
        %2708 = vmatpush1.xpose.msra.mxu0 0.0
        %2709 = vmatprep.subr.mxu0 0.0
        %2710 = vmatpush1.xpose.msra.mxu0 0.0
        %2711 = vmatprep.subr.mxu0 0.0
        %2712 = vmatpush1.xpose.msra.mxu0 0.0
        %2713 = vmatprep.subr.mxu0 0.0
        %2714 = vmatpush1.xpose.msra.mxu0 0.0
        %2715 = vmatprep.subr.mxu0 0.0
        %2716 = vmatpush1.xpose.msra.mxu0 0.0
        %2717 = vmatprep.subr.mxu0 0.0
        %2718 = vmatpush1.xpose.msra.mxu0 0.0
        %2719 = vmatprep.subr.mxu0 0.0
        %2720 = vmatpush1.xpose.msra.mxu0 0.0
        %2721 = vmatprep.subr.mxu0 0.0
        %2722 = vmatpush1.xpose.msra.mxu0 0.0
        %2723 = vmatprep.subr.mxu0 0.0
        %2724 = vmatpush1.xpose.msra.mxu0 0.0
        %2725 = vmatprep.subr.mxu0 0.0
        %2726 = vmatpush1.xpose.msra.mxu0 0.0
        %2727 = vmatprep.subr.mxu0 0.0
        %2728 = vmatpush1.xpose.msra.mxu0 0.0
        %2729 = vmatprep.subr.mxu0 0.0
        %2730 = vmatpush1.xpose.msra.mxu0 0.0
        %2731 = vmatprep.subr.mxu0 0.0
        %2732 = vmatpush1.xpose.msra.mxu0 0.0
        %2733 = vmatprep.subr.mxu0 0.0
        %2734 = vmatpush1.xpose.msra.mxu0 0.0
        %2735 = vmatprep.subr.mxu0 0.0
        %2736 = vmatpush1.xpose.msra.mxu0 0.0
        %2737 = vmatprep.subr.mxu0 0.0
        %2738 = vmatpush1.xpose.msra.mxu0 0.0
        %2739 = vmatprep.subr.mxu0 0.0
        %2740 = vmatpush1.xpose.msra.mxu0 0.0
        %2741 = vmatprep.subr.mxu0 0.0
        %2742 = vmatpush1.xpose.msra.mxu0 0.0
        %2743 = vmatprep.subr.mxu0 0.0
        %2744 = vmatpush1.xpose.msra.mxu0 0.0
        %2745 = vmatprep.subr.mxu0 0.0
        %2746 = vmatpush1.xpose.msra.mxu0 0.0
        %2747 = vmatprep.subr.mxu0 0.0
        %2748 = vmatpush1.xpose.msra.mxu0 0.0
        %2749 = vmatprep.subr.mxu0 0.0
        %2750 = vmatpush1.xpose.msra.mxu0 0.0
        %2751 = vmatprep.subr.mxu0 0.0
        %2752 = vmatpush1.xpose.msra.mxu0 0.0
        %2753 = vmatprep.subr.mxu0 0.0
        %2754 = vmatpush1.xpose.msra.mxu0 0.0
        %2755 = vmatprep.subr.mxu0 0.0
        %2756 = vmatpush1.xpose.msra.mxu0 0.0
        %2757 = vmatprep.mubr.f32.mxu0 0.0
        %2758 = vmatmul.mubr.f32.gmra.mrb[0].mxu0 %v2689
        %v2759 = vpop.f32.mrb[0].mxu0
        %v2760 = vadd.f32 0.0, %v2759
        %v2761 = vpop.f32.mrb[0].mxu0
        %2762 = vdwg.mxu0
        %2763 = vrot.lane.b32.xlu0 %v2605, 120
        %v2764 = vpop.permute.xlu0 %2763
        %2765 = vrot.lane.b32.xlu0 %v2605, 88
        %v2766 = vpop.permute.xlu0 %2765
        %v2767 = vsel %vm490, %v2764, 0
        %v2769 = vsel %vm490, %v2766, 0
        %2771 = vmatprep.subr.mxu0 0.0
        %2772 = vmatpush1.xpose.msra.mxu0 %v2769
        %2773 = vmatprep.subr.mxu0 0.0
        %2774 = vmatpush1.xpose.msra.mxu0 0.0
        %2775 = vmatprep.subr.mxu0 0.0
        %2776 = vmatpush1.xpose.msra.mxu0 0.0
        %2777 = vmatprep.subr.mxu0 0.0
        %2778 = vmatpush1.xpose.msra.mxu0 0.0
        %2779 = vmatprep.subr.mxu0 0.0
        %2780 = vmatpush1.xpose.msra.mxu0 0.0
        %2781 = vmatprep.subr.mxu0 0.0
        %2782 = vmatpush1.xpose.msra.mxu0 0.0
        %2783 = vmatprep.subr.mxu0 0.0
        %2784 = vmatpush1.xpose.msra.mxu0 0.0
        %2785 = vmatprep.subr.mxu0 0.0
        %2786 = vmatpush1.xpose.msra.mxu0 0.0
        %2787 = vmatprep.subr.mxu0 0.0
        %2788 = vmatpush1.xpose.msra.mxu0 0.0
        %2789 = vmatprep.subr.mxu0 0.0
        %2790 = vmatpush1.xpose.msra.mxu0 0.0
        %2791 = vmatprep.subr.mxu0 0.0
        %2792 = vmatpush1.xpose.msra.mxu0 0.0
        %2793 = vmatprep.subr.mxu0 0.0
        %2794 = vmatpush1.xpose.msra.mxu0 0.0
        %2795 = vmatprep.subr.mxu0 0.0
        %2796 = vmatpush1.xpose.msra.mxu0 0.0
        %2797 = vmatprep.subr.mxu0 0.0
        %2798 = vmatpush1.xpose.msra.mxu0 0.0
        %2799 = vmatprep.subr.mxu0 0.0
        %2800 = vmatpush1.xpose.msra.mxu0 0.0
        %2801 = vmatprep.subr.mxu0 0.0
        %2802 = vmatpush1.xpose.msra.mxu0 0.0
        %2803 = vmatprep.subr.mxu0 0.0
        %2804 = vmatpush1.xpose.msra.mxu0 0.0
        %2805 = vmatprep.subr.mxu0 0.0
        %2806 = vmatpush1.xpose.msra.mxu0 0.0
        %2807 = vmatprep.subr.mxu0 0.0
        %2808 = vmatpush1.xpose.msra.mxu0 0.0
        %2809 = vmatprep.subr.mxu0 0.0
        %2810 = vmatpush1.xpose.msra.mxu0 0.0
        %2811 = vmatprep.subr.mxu0 0.0
        %2812 = vmatpush1.xpose.msra.mxu0 0.0
        %2813 = vmatprep.subr.mxu0 0.0
        %2814 = vmatpush1.xpose.msra.mxu0 0.0
        %2815 = vmatprep.subr.mxu0 0.0
        %2816 = vmatpush1.xpose.msra.mxu0 0.0
        %2817 = vmatprep.subr.mxu0 0.0
        %2818 = vmatpush1.xpose.msra.mxu0 0.0
        %2819 = vmatprep.subr.mxu0 0.0
        %2820 = vmatpush1.xpose.msra.mxu0 0.0
        %2821 = vmatprep.subr.mxu0 0.0
        %2822 = vmatpush1.xpose.msra.mxu0 0.0
        %2823 = vmatprep.subr.mxu0 0.0
        %2824 = vmatpush1.xpose.msra.mxu0 0.0
        %2825 = vmatprep.subr.mxu0 0.0
        %2826 = vmatpush1.xpose.msra.mxu0 0.0
        %2827 = vmatprep.subr.mxu0 0.0
        %2828 = vmatpush1.xpose.msra.mxu0 0.0
        %2829 = vmatprep.subr.mxu0 0.0
        %2830 = vmatpush1.xpose.msra.mxu0 0.0
        %2831 = vmatprep.subr.mxu0 0.0
        %2832 = vmatpush1.xpose.msra.mxu0 0.0
        %2833 = vmatprep.subr.mxu0 0.0
        %2834 = vmatpush1.xpose.msra.mxu0 0.0
        %2835 = vmatprep.mubr.f32.mxu0 0.0
        %2836 = vmatmul.mubr.f32.gmra.mrb[0].mxu0 %v2767
        %v2837 = vpop.f32.mrb[0].mxu0
        %v2838 = vadd.f32 0.0, %v2837
        %v2839 = vpop.f32.mrb[0].mxu0
        %2840 = vdwg.mxu0
        %2841 = vrot.lane.b32.xlu0 %v2605, 112
        %v2842 = vpop.permute.xlu0 %2841
        %2843 = vrot.lane.b32.xlu0 %v2605, 80
        %v2844 = vpop.permute.xlu0 %2843
        %v2845 = vsel %vm490, %v2842, 0
        %v2847 = vsel %vm490, %v2844, 0
        %2849 = vmatprep.subr.mxu0 0.0
        %2850 = vmatpush1.xpose.msra.mxu0 %v2847
        %2851 = vmatprep.subr.mxu0 0.0
        %2852 = vmatpush1.xpose.msra.mxu0 0.0
        %2853 = vmatprep.subr.mxu0 0.0
        %2854 = vmatpush1.xpose.msra.mxu0 0.0
        %2855 = vmatprep.subr.mxu0 0.0
        %2856 = vmatpush1.xpose.msra.mxu0 0.0
        %2857 = vmatprep.subr.mxu0 0.0
        %2858 = vmatpush1.xpose.msra.mxu0 0.0
        %2859 = vmatprep.subr.mxu0 0.0
        %2860 = vmatpush1.xpose.msra.mxu0 0.0
        %2861 = vmatprep.subr.mxu0 0.0
        %2862 = vmatpush1.xpose.msra.mxu0 0.0
        %2863 = vmatprep.subr.mxu0 0.0
        %2864 = vmatpush1.xpose.msra.mxu0 0.0
        %2865 = vmatprep.subr.mxu0 0.0
        %2866 = vmatpush1.xpose.msra.mxu0 0.0
        %2867 = vmatprep.subr.mxu0 0.0
        %2868 = vmatpush1.xpose.msra.mxu0 0.0
        %2869 = vmatprep.subr.mxu0 0.0
        %2870 = vmatpush1.xpose.msra.mxu0 0.0
        %2871 = vmatprep.subr.mxu0 0.0
        %2872 = vmatpush1.xpose.msra.mxu0 0.0
        %2873 = vmatprep.subr.mxu0 0.0
        %2874 = vmatpush1.xpose.msra.mxu0 0.0
        %2875 = vmatprep.subr.mxu0 0.0
        %2876 = vmatpush1.xpose.msra.mxu0 0.0
        %2877 = vmatprep.subr.mxu0 0.0
        %2878 = vmatpush1.xpose.msra.mxu0 0.0
        %2879 = vmatprep.subr.mxu0 0.0
        %2880 = vmatpush1.xpose.msra.mxu0 0.0
        %2881 = vmatprep.subr.mxu0 0.0
        %2882 = vmatpush1.xpose.msra.mxu0 0.0
        %2883 = vmatprep.subr.mxu0 0.0
        %2884 = vmatpush1.xpose.msra.mxu0 0.0
        %2885 = vmatprep.subr.mxu0 0.0
        %2886 = vmatpush1.xpose.msra.mxu0 0.0
        %2887 = vmatprep.subr.mxu0 0.0
        %2888 = vmatpush1.xpose.msra.mxu0 0.0
        %2889 = vmatprep.subr.mxu0 0.0
        %2890 = vmatpush1.xpose.msra.mxu0 0.0
        %2891 = vmatprep.subr.mxu0 0.0
        %2892 = vmatpush1.xpose.msra.mxu0 0.0
        %2893 = vmatprep.subr.mxu0 0.0
        %2894 = vmatpush1.xpose.msra.mxu0 0.0
        %2895 = vmatprep.subr.mxu0 0.0
        %2896 = vmatpush1.xpose.msra.mxu0 0.0
        %2897 = vmatprep.subr.mxu0 0.0
        %2898 = vmatpush1.xpose.msra.mxu0 0.0
        %2899 = vmatprep.subr.mxu0 0.0
        %2900 = vmatpush1.xpose.msra.mxu0 0.0
        %2901 = vmatprep.subr.mxu0 0.0
        %2902 = vmatpush1.xpose.msra.mxu0 0.0
        %2903 = vmatprep.subr.mxu0 0.0
        %2904 = vmatpush1.xpose.msra.mxu0 0.0
        %2905 = vmatprep.subr.mxu0 0.0
        %2906 = vmatpush1.xpose.msra.mxu0 0.0
        %2907 = vmatprep.subr.mxu0 0.0
        %2908 = vmatpush1.xpose.msra.mxu0 0.0
        %2909 = vmatprep.subr.mxu0 0.0
        %2910 = vmatpush1.xpose.msra.mxu0 0.0
        %2911 = vmatprep.subr.mxu0 0.0
        %2912 = vmatpush1.xpose.msra.mxu0 0.0
        %2913 = vmatprep.mubr.f32.mxu0 0.0
        %2914 = vmatmul.mubr.f32.gmra.mrb[0].mxu0 %v2845
        %v2915 = vpop.f32.mrb[0].mxu0
        %v2916 = vadd.f32 0.0, %v2915
        %v2917 = vpop.f32.mrb[0].mxu0
        %2918 = vdwg.mxu0
        %2919 = vrot.lane.b32.xlu0 %v2605, 104
        %v2920 = vpop.permute.xlu0 %2919
        %2921 = vrot.lane.b32.xlu0 %v2605, 72
        %v2922 = vpop.permute.xlu0 %2921
        %v2923 = vsel %vm490, %v2920, 0
        %v2925 = vsel %vm490, %v2922, 0
        %2927 = vmatprep.subr.mxu0 0.0
        %2928 = vmatpush1.xpose.msra.mxu0 %v2925
        %2929 = vmatprep.subr.mxu0 0.0
        %2930 = vmatpush1.xpose.msra.mxu0 0.0
        %2931 = vmatprep.subr.mxu0 0.0
        %2932 = vmatpush1.xpose.msra.mxu0 0.0
        %2933 = vmatprep.subr.mxu0 0.0
        %2934 = vmatpush1.xpose.msra.mxu0 0.0
        %2935 = vmatprep.subr.mxu0 0.0
        %2936 = vmatpush1.xpose.msra.mxu0 0.0
        %2937 = vmatprep.subr.mxu0 0.0
        %2938 = vmatpush1.xpose.msra.mxu0 0.0
        %2939 = vmatprep.subr.mxu0 0.0
        %2940 = vmatpush1.xpose.msra.mxu0 0.0
        %2941 = vmatprep.subr.mxu0 0.0
        %2942 = vmatpush1.xpose.msra.mxu0 0.0
        %2943 = vmatprep.subr.mxu0 0.0
        %2944 = vmatpush1.xpose.msra.mxu0 0.0
        %2945 = vmatprep.subr.mxu0 0.0
        %2946 = vmatpush1.xpose.msra.mxu0 0.0
        %2947 = vmatprep.subr.mxu0 0.0
        %2948 = vmatpush1.xpose.msra.mxu0 0.0
        %2949 = vmatprep.subr.mxu0 0.0
        %2950 = vmatpush1.xpose.msra.mxu0 0.0
        %2951 = vmatprep.subr.mxu0 0.0
        %2952 = vmatpush1.xpose.msra.mxu0 0.0
        %2953 = vmatprep.subr.mxu0 0.0
        %2954 = vmatpush1.xpose.msra.mxu0 0.0
        %2955 = vmatprep.subr.mxu0 0.0
        %2956 = vmatpush1.xpose.msra.mxu0 0.0
        %2957 = vmatprep.subr.mxu0 0.0
        %2958 = vmatpush1.xpose.msra.mxu0 0.0
        %2959 = vmatprep.subr.mxu0 0.0
        %2960 = vmatpush1.xpose.msra.mxu0 0.0
        %2961 = vmatprep.subr.mxu0 0.0
        %2962 = vmatpush1.xpose.msra.mxu0 0.0
        %2963 = vmatprep.subr.mxu0 0.0
        %2964 = vmatpush1.xpose.msra.mxu0 0.0
        %2965 = vmatprep.subr.mxu0 0.0
        %2966 = vmatpush1.xpose.msra.mxu0 0.0
        %2967 = vmatprep.subr.mxu0 0.0
        %2968 = vmatpush1.xpose.msra.mxu0 0.0
        %2969 = vmatprep.subr.mxu0 0.0
        %2970 = vmatpush1.xpose.msra.mxu0 0.0
        %2971 = vmatprep.subr.mxu0 0.0
        %2972 = vmatpush1.xpose.msra.mxu0 0.0
        %2973 = vmatprep.subr.mxu0 0.0
        %2974 = vmatpush1.xpose.msra.mxu0 0.0
        %2975 = vmatprep.subr.mxu0 0.0
        %2976 = vmatpush1.xpose.msra.mxu0 0.0
        %2977 = vmatprep.subr.mxu0 0.0
        %2978 = vmatpush1.xpose.msra.mxu0 0.0
        %2979 = vmatprep.subr.mxu0 0.0
        %2980 = vmatpush1.xpose.msra.mxu0 0.0
        %2981 = vmatprep.subr.mxu0 0.0
        %2982 = vmatpush1.xpose.msra.mxu0 0.0
        %2983 = vmatprep.subr.mxu0 0.0
        %2984 = vmatpush1.xpose.msra.mxu0 0.0
        %2985 = vmatprep.subr.mxu0 0.0
        %2986 = vmatpush1.xpose.msra.mxu0 0.0
        %2987 = vmatprep.subr.mxu0 0.0
        %2988 = vmatpush1.xpose.msra.mxu0 0.0
        %2989 = vmatprep.subr.mxu0 0.0
        %2990 = vmatpush1.xpose.msra.mxu0 0.0
        %2991 = vmatprep.mubr.f32.mxu0 0.0
        %2992 = vmatmul.mubr.f32.gmra.mrb[0].mxu0 %v2923
        %v2993 = vpop.f32.mrb[0].mxu0
        %v2994 = vadd.f32 0.0, %v2993
        %v2995 = vpop.f32.mrb[0].mxu0
        %2996 = vdwg.mxu0
        %v2997 = vsel %vm490, %v2760, -inf
        %2998 = vmax.xlane.f32.xlu0 %v2997
        %v2999 = vpop.xlane.xlu0 %2998
        %v3000 = vsel %vm490, %v2838, -inf
        %3001 = vmax.xlane.f32.xlu0 %v3000
        %v3002 = vpop.xlane.xlu0 %3001
        %v3003 = vsel %vm490, %v2916, -inf
        %3004 = vmax.xlane.f32.xlu0 %v3003
        %v3005 = vpop.xlane.xlu0 %3004
        %v3006 = vsel %vm490, %v2994, -inf
        %3007 = vmax.xlane.f32.xlu0 %v3006
        %v3008 = vpop.xlane.xlu0 %3007
        %v3009 = vsub.f32 %v2760, %v2999
        %v3010 = vsub.f32 %v2838, %v3002
        %v3011 = vsub.f32 %v2916, %v3005
        %v3012 = vsub.f32 %v2994, %v3008
        %v3013 = vmul.f32 %v3009, 1.442695
        %v3014 = vpow.pop %v3013
        %v3015 = vmul.f32 %v3010, 1.442695
        %v3016 = vpow.pop %v3015
        %v3017 = vmul.f32 %v3011, 1.442695
        %v3018 = vpow.pop %v3017
        %v3019 = vmul.f32 %v3012, 1.442695
        %v3020 = vpow.pop %v3019
        %v3021 = vsel %vm490, %v3014, 0.0
        %3022 = vadd.xlane.f32.xlu0 %v3021
        %v3023 = vpop.xlane.xlu0 %3022
        %v3024 = vsel %vm490, %v3016, 0.0
        %3025 = vadd.xlane.f32.xlu0 %v3024
        %v3026 = vpop.xlane.xlu0 %3025
        %v3027 = vsel %vm490, %v3018, 0.0
        %3028 = vadd.xlane.f32.xlu0 %v3027
        %v3029 = vpop.xlane.xlu0 %3028
        %v3030 = vsel %vm490, %v3020, 0.0
        %3031 = vadd.xlane.f32.xlu0 %v3030
        %v3032 = vpop.xlane.xlu0 %3031
        %v3033 = vrcp.pop %v3023
        %v3034 = vmul.f32 %v3014, %v3033
        %v3035 = vrcp.pop %v3026
        %v3036 = vmul.f32 %v3016, %v3035
        %v3037 = vrcp.pop %v3029
        %v3038 = vmul.f32 %v3018, %v3037
        %v3039 = vrcp.pop %v3032
        %v3040 = vmul.f32 %v3020, %v3039
        %v3042 = vsel %vm490, %v3034, 0
        %3044 = vmatprep.subr.mxu0 0.0
        %3045 = vmatpush1.msra.mxu0 %v2683
        %3046 = vmatprep.subr.mxu0 0.0
        %3047 = vmatpush1.msra.mxu0 0.0
        %3048 = vmatprep.subr.mxu0 0.0
        %3049 = vmatpush1.msra.mxu0 0.0
        %3050 = vmatprep.subr.mxu0 0.0
        %3051 = vmatpush1.msra.mxu0 0.0
        %3052 = vmatprep.subr.mxu0 0.0
        %3053 = vmatpush1.msra.mxu0 0.0
        %3054 = vmatprep.subr.mxu0 0.0
        %3055 = vmatpush1.msra.mxu0 0.0
        %3056 = vmatprep.subr.mxu0 0.0
        %3057 = vmatpush1.msra.mxu0 0.0
        %3058 = vmatprep.subr.mxu0 0.0
        %3059 = vmatpush1.msra.mxu0 0.0
        %3060 = vmatprep.subr.mxu0 0.0
        %3061 = vmatpush1.msra.mxu0 0.0
        %3062 = vmatprep.subr.mxu0 0.0
        %3063 = vmatpush1.msra.mxu0 0.0
        %3064 = vmatprep.subr.mxu0 0.0
        %3065 = vmatpush1.msra.mxu0 0.0
        %3066 = vmatprep.subr.mxu0 0.0
        %3067 = vmatpush1.msra.mxu0 0.0
        %3068 = vmatprep.subr.mxu0 0.0
        %3069 = vmatpush1.msra.mxu0 0.0
        %3070 = vmatprep.subr.mxu0 0.0
        %3071 = vmatpush1.msra.mxu0 0.0
        %3072 = vmatprep.subr.mxu0 0.0
        %3073 = vmatpush1.msra.mxu0 0.0
        %3074 = vmatprep.subr.mxu0 0.0
        %3075 = vmatpush1.msra.mxu0 0.0
        %3076 = vmatprep.subr.mxu0 0.0
        %3077 = vmatpush1.msra.mxu0 0.0
        %3078 = vmatprep.subr.mxu0 0.0
        %3079 = vmatpush1.msra.mxu0 0.0
        %3080 = vmatprep.subr.mxu0 0.0
        %3081 = vmatpush1.msra.mxu0 0.0
        %3082 = vmatprep.subr.mxu0 0.0
        %3083 = vmatpush1.msra.mxu0 0.0
        %3084 = vmatprep.subr.mxu0 0.0
        %3085 = vmatpush1.msra.mxu0 0.0
        %3086 = vmatprep.subr.mxu0 0.0
        %3087 = vmatpush1.msra.mxu0 0.0
        %3088 = vmatprep.subr.mxu0 0.0
        %3089 = vmatpush1.msra.mxu0 0.0
        %3090 = vmatprep.subr.mxu0 0.0
        %3091 = vmatpush1.msra.mxu0 0.0
        %3092 = vmatprep.subr.mxu0 0.0
        %3093 = vmatpush1.msra.mxu0 0.0
        %3094 = vmatprep.subr.mxu0 0.0
        %3095 = vmatpush1.msra.mxu0 0.0
        %3096 = vmatprep.subr.mxu0 0.0
        %3097 = vmatpush1.msra.mxu0 0.0
        %3098 = vmatprep.subr.mxu0 0.0
        %3099 = vmatpush1.msra.mxu0 0.0
        %3100 = vmatprep.subr.mxu0 0.0
        %3101 = vmatpush1.msra.mxu0 0.0
        %3102 = vmatprep.subr.mxu0 0.0
        %3103 = vmatpush1.msra.mxu0 0.0
        %3104 = vmatprep.subr.mxu0 0.0
        %3105 = vmatpush1.msra.mxu0 0.0
        %3106 = vmatprep.subr.mxu0 0.0
        %3107 = vmatpush1.msra.mxu0 0.0
        %3108 = vmatprep.mubr.f32.mxu0 0.0
        %3109 = vmatmul.mubr.f32.gmra.mrb[0].mxu0 %v3042
        %v3110 = vpop.f32.mrb[0].mxu0
        %v3111 = vadd.f32 0.0, %v3110
        %v3112 = vpop.f32.mrb[0].mxu0
        %3113 = vdwg.mxu0
        %3115 = vrot.lane.b32.xlu0 %v2683, 120
        %v3116 = vpop.permute.xlu0 %3115
        %v3119 = vsel %vm490, %v3036, 0
        %3121 = vmatprep.subr.mxu0 0.0
        %3122 = vmatpush1.msra.mxu0 %v3116
        %3123 = vmatprep.subr.mxu0 0.0
        %3124 = vmatpush1.msra.mxu0 0.0
        %3125 = vmatprep.subr.mxu0 0.0
        %3126 = vmatpush1.msra.mxu0 0.0
        %3127 = vmatprep.subr.mxu0 0.0
        %3128 = vmatpush1.msra.mxu0 0.0
        %3129 = vmatprep.subr.mxu0 0.0
        %3130 = vmatpush1.msra.mxu0 0.0
        %3131 = vmatprep.subr.mxu0 0.0
        %3132 = vmatpush1.msra.mxu0 0.0
        %3133 = vmatprep.subr.mxu0 0.0
        %3134 = vmatpush1.msra.mxu0 0.0
        %3135 = vmatprep.subr.mxu0 0.0
        %3136 = vmatpush1.msra.mxu0 0.0
        %3137 = vmatprep.subr.mxu0 0.0
        %3138 = vmatpush1.msra.mxu0 0.0
        %3139 = vmatprep.subr.mxu0 0.0
        %3140 = vmatpush1.msra.mxu0 0.0
        %3141 = vmatprep.subr.mxu0 0.0
        %3142 = vmatpush1.msra.mxu0 0.0
        %3143 = vmatprep.subr.mxu0 0.0
        %3144 = vmatpush1.msra.mxu0 0.0
        %3145 = vmatprep.subr.mxu0 0.0
        %3146 = vmatpush1.msra.mxu0 0.0
        %3147 = vmatprep.subr.mxu0 0.0
        %3148 = vmatpush1.msra.mxu0 0.0
        %3149 = vmatprep.subr.mxu0 0.0
        %3150 = vmatpush1.msra.mxu0 0.0
        %3151 = vmatprep.subr.mxu0 0.0
        %3152 = vmatpush1.msra.mxu0 0.0
        %3153 = vmatprep.subr.mxu0 0.0
        %3154 = vmatpush1.msra.mxu0 0.0
        %3155 = vmatprep.subr.mxu0 0.0
        %3156 = vmatpush1.msra.mxu0 0.0
        %3157 = vmatprep.subr.mxu0 0.0
        %3158 = vmatpush1.msra.mxu0 0.0
        %3159 = vmatprep.subr.mxu0 0.0
        %3160 = vmatpush1.msra.mxu0 0.0
        %3161 = vmatprep.subr.mxu0 0.0
        %3162 = vmatpush1.msra.mxu0 0.0
        %3163 = vmatprep.subr.mxu0 0.0
        %3164 = vmatpush1.msra.mxu0 0.0
        %3165 = vmatprep.subr.mxu0 0.0
        %3166 = vmatpush1.msra.mxu0 0.0
        %3167 = vmatprep.subr.mxu0 0.0
        %3168 = vmatpush1.msra.mxu0 0.0
        %3169 = vmatprep.subr.mxu0 0.0
        %3170 = vmatpush1.msra.mxu0 0.0
        %3171 = vmatprep.subr.mxu0 0.0
        %3172 = vmatpush1.msra.mxu0 0.0
        %3173 = vmatprep.subr.mxu0 0.0
        %3174 = vmatpush1.msra.mxu0 0.0
        %3175 = vmatprep.subr.mxu0 0.0
        %3176 = vmatpush1.msra.mxu0 0.0
        %3177 = vmatprep.subr.mxu0 0.0
        %3178 = vmatpush1.msra.mxu0 0.0
        %3179 = vmatprep.subr.mxu0 0.0
        %3180 = vmatpush1.msra.mxu0 0.0
        %3181 = vmatprep.subr.mxu0 0.0
        %3182 = vmatpush1.msra.mxu0 0.0
        %3183 = vmatprep.subr.mxu0 0.0
        %3184 = vmatpush1.msra.mxu0 0.0
        %3185 = vmatprep.mubr.f32.mxu0 0.0
        %3186 = vmatmul.mubr.f32.gmra.mrb[0].mxu0 %v3119
        %v3187 = vpop.f32.mrb[0].mxu0
        %v3188 = vadd.f32 0.0, %v3187
        %v3189 = vpop.f32.mrb[0].mxu0
        %3190 = vdwg.mxu0
        %3191 = vrot.lane.b32.xlu0 %v2683, 112
        %v3192 = vpop.permute.xlu0 %3191
        %v3195 = vsel %vm490, %v3038, 0
        %3197 = vmatprep.subr.mxu0 0.0
        %3198 = vmatpush1.msra.mxu0 %v3192
        %3199 = vmatprep.subr.mxu0 0.0
        %3200 = vmatpush1.msra.mxu0 0.0
        %3201 = vmatprep.subr.mxu0 0.0
        %3202 = vmatpush1.msra.mxu0 0.0
        %3203 = vmatprep.subr.mxu0 0.0
        %3204 = vmatpush1.msra.mxu0 0.0
        %3205 = vmatprep.subr.mxu0 0.0
        %3206 = vmatpush1.msra.mxu0 0.0
        %3207 = vmatprep.subr.mxu0 0.0
        %3208 = vmatpush1.msra.mxu0 0.0
        %3209 = vmatprep.subr.mxu0 0.0
        %3210 = vmatpush1.msra.mxu0 0.0
        %3211 = vmatprep.subr.mxu0 0.0
        %3212 = vmatpush1.msra.mxu0 0.0
        %3213 = vmatprep.subr.mxu0 0.0
        %3214 = vmatpush1.msra.mxu0 0.0
        %3215 = vmatprep.subr.mxu0 0.0
        %3216 = vmatpush1.msra.mxu0 0.0
        %3217 = vmatprep.subr.mxu0 0.0
        %3218 = vmatpush1.msra.mxu0 0.0
        %3219 = vmatprep.subr.mxu0 0.0
        %3220 = vmatpush1.msra.mxu0 0.0
        %3221 = vmatprep.subr.mxu0 0.0
        %3222 = vmatpush1.msra.mxu0 0.0
        %3223 = vmatprep.subr.mxu0 0.0
        %3224 = vmatpush1.msra.mxu0 0.0
        %3225 = vmatprep.subr.mxu0 0.0
        %3226 = vmatpush1.msra.mxu0 0.0
        %3227 = vmatprep.subr.mxu0 0.0
        %3228 = vmatpush1.msra.mxu0 0.0
        %3229 = vmatprep.subr.mxu0 0.0
        %3230 = vmatpush1.msra.mxu0 0.0
        %3231 = vmatprep.subr.mxu0 0.0
        %3232 = vmatpush1.msra.mxu0 0.0
        %3233 = vmatprep.subr.mxu0 0.0
        %3234 = vmatpush1.msra.mxu0 0.0
        %3235 = vmatprep.subr.mxu0 0.0
        %3236 = vmatpush1.msra.mxu0 0.0
        %3237 = vmatprep.subr.mxu0 0.0
        %3238 = vmatpush1.msra.mxu0 0.0
        %3239 = vmatprep.subr.mxu0 0.0
        %3240 = vmatpush1.msra.mxu0 0.0
        %3241 = vmatprep.subr.mxu0 0.0
        %3242 = vmatpush1.msra.mxu0 0.0
        %3243 = vmatprep.subr.mxu0 0.0
        %3244 = vmatpush1.msra.mxu0 0.0
        %3245 = vmatprep.subr.mxu0 0.0
        %3246 = vmatpush1.msra.mxu0 0.0
        %3247 = vmatprep.subr.mxu0 0.0
        %3248 = vmatpush1.msra.mxu0 0.0
        %3249 = vmatprep.subr.mxu0 0.0
        %3250 = vmatpush1.msra.mxu0 0.0
        %3251 = vmatprep.subr.mxu0 0.0
        %3252 = vmatpush1.msra.mxu0 0.0
        %3253 = vmatprep.subr.mxu0 0.0
        %3254 = vmatpush1.msra.mxu0 0.0
        %3255 = vmatprep.subr.mxu0 0.0
        %3256 = vmatpush1.msra.mxu0 0.0
        %3257 = vmatprep.subr.mxu0 0.0
        %3258 = vmatpush1.msra.mxu0 0.0
        %3259 = vmatprep.subr.mxu0 0.0
        %3260 = vmatpush1.msra.mxu0 0.0
        %3261 = vmatprep.mubr.f32.mxu0 0.0
        %3262 = vmatmul.mubr.f32.gmra.mrb[0].mxu0 %v3195
        %v3263 = vpop.f32.mrb[0].mxu0
        %v3264 = vadd.f32 0.0, %v3263
        %v3265 = vpop.f32.mrb[0].mxu0
        %3266 = vdwg.mxu0
        %3267 = vrot.lane.b32.xlu0 %v2683, 104
        %v3268 = vpop.permute.xlu0 %3267
        %v3271 = vsel %vm490, %v3040, 0
        %3273 = vmatprep.subr.mxu0 0.0
        %3274 = vmatpush1.msra.mxu0 %v3268
        %3275 = vmatprep.subr.mxu0 0.0
        %3276 = vmatpush1.msra.mxu0 0.0
        %3277 = vmatprep.subr.mxu0 0.0
        %3278 = vmatpush1.msra.mxu0 0.0
        %3279 = vmatprep.subr.mxu0 0.0
        %3280 = vmatpush1.msra.mxu0 0.0
        %3281 = vmatprep.subr.mxu0 0.0
        %3282 = vmatpush1.msra.mxu0 0.0
        %3283 = vmatprep.subr.mxu0 0.0
        %3284 = vmatpush1.msra.mxu0 0.0
        %3285 = vmatprep.subr.mxu0 0.0
        %3286 = vmatpush1.msra.mxu0 0.0
        %3287 = vmatprep.subr.mxu0 0.0
        %3288 = vmatpush1.msra.mxu0 0.0
        %3289 = vmatprep.subr.mxu0 0.0
        %3290 = vmatpush1.msra.mxu0 0.0
        %3291 = vmatprep.subr.mxu0 0.0
        %3292 = vmatpush1.msra.mxu0 0.0
        %3293 = vmatprep.subr.mxu0 0.0
        %3294 = vmatpush1.msra.mxu0 0.0
        %3295 = vmatprep.subr.mxu0 0.0
        %3296 = vmatpush1.msra.mxu0 0.0
        %3297 = vmatprep.subr.mxu0 0.0
        %3298 = vmatpush1.msra.mxu0 0.0
        %3299 = vmatprep.subr.mxu0 0.0
        %3300 = vmatpush1.msra.mxu0 0.0
        %3301 = vmatprep.subr.mxu0 0.0
        %3302 = vmatpush1.msra.mxu0 0.0
        %3303 = vmatprep.subr.mxu0 0.0
        %3304 = vmatpush1.msra.mxu0 0.0
        %3305 = vmatprep.subr.mxu0 0.0
        %3306 = vmatpush1.msra.mxu0 0.0
        %3307 = vmatprep.subr.mxu0 0.0
        %3308 = vmatpush1.msra.mxu0 0.0
        %3309 = vmatprep.subr.mxu0 0.0
        %3310 = vmatpush1.msra.mxu0 0.0
        %3311 = vmatprep.subr.mxu0 0.0
        %3312 = vmatpush1.msra.mxu0 0.0
        %3313 = vmatprep.subr.mxu0 0.0
        %3314 = vmatpush1.msra.mxu0 0.0
        %3315 = vmatprep.subr.mxu0 0.0
        %3316 = vmatpush1.msra.mxu0 0.0
        %3317 = vmatprep.subr.mxu0 0.0
        %3318 = vmatpush1.msra.mxu0 0.0
        %3319 = vmatprep.subr.mxu0 0.0
        %3320 = vmatpush1.msra.mxu0 0.0
        %3321 = vmatprep.subr.mxu0 0.0
        %3322 = vmatpush1.msra.mxu0 0.0
        %3323 = vmatprep.subr.mxu0 0.0
        %3324 = vmatpush1.msra.mxu0 0.0
        %3325 = vmatprep.subr.mxu0 0.0
        %3326 = vmatpush1.msra.mxu0 0.0
        %3327 = vmatprep.subr.mxu0 0.0
        %3328 = vmatpush1.msra.mxu0 0.0
        %3329 = vmatprep.subr.mxu0 0.0
        %3330 = vmatpush1.msra.mxu0 0.0
        %3331 = vmatprep.subr.mxu0 0.0
        %3332 = vmatpush1.msra.mxu0 0.0
        %3333 = vmatprep.subr.mxu0 0.0
        %3334 = vmatpush1.msra.mxu0 0.0
        %3335 = vmatprep.subr.mxu0 0.0
        %3336 = vmatpush1.msra.mxu0 0.0
        %3337 = vmatprep.mubr.f32.mxu0 0.0
        %3338 = vmatmul.mubr.f32.gmra.mrb[0].mxu0 %v3271
        %v3339 = vpop.f32.mrb[0].mxu0
        %v3340 = vadd.f32 0.0, %v3339
        %v3341 = vpop.f32.mrb[0].mxu0
        %3342 = vdwg.mxu0
        %3344 = vrot.lane.b32.xlu0 %v3188, 8
        %v3345 = vpop.permute.xlu0 %3344
        %3348 = vrot.lane.b32.xlu0 %v3264, 16
        %v3349 = vpop.permute.xlu0 %3348
        %3352 = vrot.lane.b32.xlu0 %v3340, 24
        %v3353 = vpop.permute.xlu0 %3352
        %v3355 = vsel %vm490, %v3111, %v3345
        %v3356 = vsel %vm1158, %v3355, %v3349
        %v3357 = vsel %vm1160, %v3356, %v3353
        %v3358 = vld [vmem:[%s6 + $0xf] sm:$0x1]
        %v3359 = vlaneseq
        %v3360 = vshrl.u32 %v3359, 7
        %v3361 = vsub.s32 0, %v3360
        %v3362 = vrot.slane %v3358, %v3361
        %v3364 = vsel %vm335, %v3357, 0
        %3366 = vmatprep.subr.mxu0 0.0
        %3367 = vmatpush1.msra.mxu0 %v2525
        %3368 = vmatprep.subr.mxu0 0.0
        %3369 = vmatpush1.msra.mxu0 %v2526
        %3370 = vmatprep.subr.mxu0 0.0
        %3371 = vmatpush1.msra.mxu0 %v2527
        %3372 = vmatprep.subr.mxu0 0.0
        %3373 = vmatpush1.msra.mxu0 %v2528
        %3374 = vmatprep.subr.mxu0 0.0
        %3375 = vmatpush1.msra.mxu0 0.0
        %3376 = vmatprep.subr.mxu0 0.0
        %3377 = vmatpush1.msra.mxu0 0.0
        %3378 = vmatprep.subr.mxu0 0.0
        %3379 = vmatpush1.msra.mxu0 0.0
        %3380 = vmatprep.subr.mxu0 0.0
        %3381 = vmatpush1.msra.mxu0 0.0
        %3382 = vmatprep.subr.mxu0 0.0
        %3383 = vmatpush1.msra.mxu0 0.0
        %3384 = vmatprep.subr.mxu0 0.0
        %3385 = vmatpush1.msra.mxu0 0.0
        %3386 = vmatprep.subr.mxu0 0.0
        %3387 = vmatpush1.msra.mxu0 0.0
        %3388 = vmatprep.subr.mxu0 0.0
        %3389 = vmatpush1.msra.mxu0 0.0
        %3390 = vmatprep.subr.mxu0 0.0
        %3391 = vmatpush1.msra.mxu0 0.0
        %3392 = vmatprep.subr.mxu0 0.0
        %3393 = vmatpush1.msra.mxu0 0.0
        %3394 = vmatprep.subr.mxu0 0.0
        %3395 = vmatpush1.msra.mxu0 0.0
        %3396 = vmatprep.subr.mxu0 0.0
        %3397 = vmatpush1.msra.mxu0 0.0
        %3398 = vmatprep.subr.mxu0 0.0
        %3399 = vmatpush1.msra.mxu0 0.0
        %3400 = vmatprep.subr.mxu0 0.0
        %3401 = vmatpush1.msra.mxu0 0.0
        %3402 = vmatprep.subr.mxu0 0.0
        %3403 = vmatpush1.msra.mxu0 0.0
        %3404 = vmatprep.subr.mxu0 0.0
        %3405 = vmatpush1.msra.mxu0 0.0
        %3406 = vmatprep.subr.mxu0 0.0
        %3407 = vmatpush1.msra.mxu0 0.0
        %3408 = vmatprep.subr.mxu0 0.0
        %3409 = vmatpush1.msra.mxu0 0.0
        %3410 = vmatprep.subr.mxu0 0.0
        %3411 = vmatpush1.msra.mxu0 0.0
        %3412 = vmatprep.subr.mxu0 0.0
        %3413 = vmatpush1.msra.mxu0 0.0
        %3414 = vmatprep.subr.mxu0 0.0
        %3415 = vmatpush1.msra.mxu0 0.0
        %3416 = vmatprep.subr.mxu0 0.0
        %3417 = vmatpush1.msra.mxu0 0.0
        %3418 = vmatprep.subr.mxu0 0.0
        %3419 = vmatpush1.msra.mxu0 0.0
        %3420 = vmatprep.subr.mxu0 0.0
        %3421 = vmatpush1.msra.mxu0 0.0
        %3422 = vmatprep.subr.mxu0 0.0
        %3423 = vmatpush1.msra.mxu0 0.0
        %3424 = vmatprep.subr.mxu0 0.0
        %3425 = vmatpush1.msra.mxu0 0.0
        %3426 = vmatprep.subr.mxu0 0.0
        %3427 = vmatpush1.msra.mxu0 0.0
        %3428 = vmatprep.subr.mxu0 0.0
        %3429 = vmatpush1.msra.mxu0 0.0
        %3430 = vmatprep.mubr.f32.mxu0 0.0
        %3431 = vmatmul.mubr.f32.gmra.mrb[0].mxu0 %v3364
        %v3432 = vpop.f32.mrb[0].mxu0
        %v3433 = vadd.f32 %v3362, %v3432
        %v3434 = vpop.f32.mrb[0].mxu0
        %3435 = vdwg.mxu0
        %v3436 = vadd.f32 %v2513, %v3433
        %v3437 = vld [vmem:[%s6 + $0x10] sm:$0x1]
        %v3438 = vld [vmem:[%s6 + $0x11] sm:$0x1]
        %v3439 = vsel %vm335, %v3436, 0.0
        %3440 = vadd.xlane.f32.xlu0 %v3439
        %v3441 = vpop.xlane.xlu0 %3440
        %v3442 = vmul.f32 %v3441, %v1246
        %v3443 = vmul.f32 %v3436, %v3436
        %v3444 = vsel %vm335, %v3443, 0.0
        %3445 = vadd.xlane.f32.xlu0 %v3444
        %v3446 = vpop.xlane.xlu0 %3445
        %v3447 = vmul.f32 %v3446, %v1246
        %v3448 = vmul.f32 %v3442, %v3442
        %v3449 = vsub.f32 %v3447, %v3448
        %v3450 = vmax.f32 %v3449, 0.0
        %v3451 = vsub.f32 %v3436, %v3442
        %v3452 = vadd.f32 %v3450, 1e-05
        %v3453 = vrsqrt.pop %v3452
        %v3454 = vmul.f32 %v3451, %v3453
        %v3455 = vlaneseq
        %v3456 = vshrl.u32 %v3455, 7
        %v3457 = vsub.s32 0, %v3456
        %v3458 = vrot.slane %v3437, %v3457
        %v3459 = vmul.f32 %v3454, %v3458
        %v3460 = vlaneseq
        %v3461 = vshrl.u32 %v3460, 7
        %v3462 = vsub.s32 0, %v3461
        %v3463 = vrot.slane %v3438, %v3462
        %v3464 = vadd.f32 %v3459, %v3463
        %s3465 = scalar_lea.vmem %s4, 192
        %v3466 = vld [vmem:[%s3465] sm:$0xff]
        %v3467 = vld [vmem:[%s3465 + $0x8] sm:$0xff]
        %v3468 = vld [vmem:[%s3465 + $0x10] sm:$0xff]
        %v3469 = vld [vmem:[%s3465 + $0x18] sm:$0xff]
        %s3470 = scalar_lea.vmem %s4, 224
        %v3471 = vld [vmem:[%s3470] sm:$0xff]
        %v3472 = vld [vmem:[%s3470 + $0x8] sm:$0xff]
        %v3473 = vld [vmem:[%s3470 + $0x10] sm:$0xff]
        %v3474 = vld [vmem:[%s3470 + $0x18] sm:$0xff]
        %s3475 = scalar_lea.vmem %s3, 128
        %v3476 = vld [vmem:[%s3475] sm:$0xff]
        %v3477 = vld [vmem:[%s3475 + $0x8] sm:$0xff]
        %v3478 = vld [vmem:[%s3475 + $0x10] sm:$0xff]
        %v3479 = vld [vmem:[%s3475 + $0x18] sm:$0xff]
        %v3480 = vld [vmem:[%s3475 + $0x20] sm:$0xff]
        %v3481 = vld [vmem:[%s3475 + $0x28] sm:$0xff]
        %v3482 = vld [vmem:[%s3475 + $0x30] sm:$0xff]
        %v3483 = vld [vmem:[%s3475 + $0x38] sm:$0xff]
        %s3484 = scalar_lea.vmem %s5, 64
        %v3485 = vld [vmem:[%s3484] sm:$0xff]
        %v3486 = vld [vmem:[%s3484 + $0x8] sm:$0xff]
        %v3487 = vld [vmem:[%s3484 + $0x10] sm:$0xff]
        %v3488 = vld [vmem:[%s3484 + $0x18] sm:$0xff]
        %v3489 = vld [vmem:[%s3484 + $0x20] sm:$0xff]
        %v3490 = vld [vmem:[%s3484 + $0x28] sm:$0xff]
        %v3491 = vld [vmem:[%s3484 + $0x30] sm:$0xff]
        %v3492 = vld [vmem:[%s3484 + $0x38] sm:$0xff]
        %v3493 = vadd.f32 %v3464, %v315
        %v3494 = vld [vmem:[%s6 + $0x12] sm:$0x1]
        %v3495 = vlaneseq
        %v3496 = vshrl.u32 %v3495, 7
        %v3497 = vsub.s32 0, %v3496
        %v3498 = vrot.slane %v3494, %v3497
        %v3500 = vsel %vm335, %v3493, 0
        %3502 = vmatprep.subr.mxu0 0.0
        %3503 = vmatpush1.msra.mxu0 %v3466
        %3504 = vmatprep.subr.mxu0 0.0
        %3505 = vmatpush1.msra.mxu0 %v3467
        %3506 = vmatprep.subr.mxu0 0.0
        %3507 = vmatpush1.msra.mxu0 %v3468
        %3508 = vmatprep.subr.mxu0 0.0
        %3509 = vmatpush1.msra.mxu0 %v3469
        %3510 = vmatprep.subr.mxu0 0.0
        %3511 = vmatpush1.msra.mxu0 0.0
        %3512 = vmatprep.subr.mxu0 0.0
        %3513 = vmatpush1.msra.mxu0 0.0
        %3514 = vmatprep.subr.mxu0 0.0
        %3515 = vmatpush1.msra.mxu0 0.0
        %3516 = vmatprep.subr.mxu0 0.0
        %3517 = vmatpush1.msra.mxu0 0.0
        %3518 = vmatprep.subr.mxu0 0.0
        %3519 = vmatpush1.msra.mxu0 0.0
        %3520 = vmatprep.subr.mxu0 0.0
        %3521 = vmatpush1.msra.mxu0 0.0
        %3522 = vmatprep.subr.mxu0 0.0
        %3523 = vmatpush1.msra.mxu0 0.0
        %3524 = vmatprep.subr.mxu0 0.0
        %3525 = vmatpush1.msra.mxu0 0.0
        %3526 = vmatprep.subr.mxu0 0.0
        %3527 = vmatpush1.msra.mxu0 0.0
        %3528 = vmatprep.subr.mxu0 0.0
        %3529 = vmatpush1.msra.mxu0 0.0
        %3530 = vmatprep.subr.mxu0 0.0
        %3531 = vmatpush1.msra.mxu0 0.0
        %3532 = vmatprep.subr.mxu0 0.0
        %3533 = vmatpush1.msra.mxu0 0.0
        %3534 = vmatprep.subr.mxu0 0.0
        %3535 = vmatpush1.msra.mxu0 0.0
        %3536 = vmatprep.subr.mxu0 0.0
        %3537 = vmatpush1.msra.mxu0 0.0
        %3538 = vmatprep.subr.mxu0 0.0
        %3539 = vmatpush1.msra.mxu0 0.0
        %3540 = vmatprep.subr.mxu0 0.0
        %3541 = vmatpush1.msra.mxu0 0.0
        %3542 = vmatprep.subr.mxu0 0.0
        %3543 = vmatpush1.msra.mxu0 0.0
        %3544 = vmatprep.subr.mxu0 0.0
        %3545 = vmatpush1.msra.mxu0 0.0
        %3546 = vmatprep.subr.mxu0 0.0
        %3547 = vmatpush1.msra.mxu0 0.0
        %3548 = vmatprep.subr.mxu0 0.0
        %3549 = vmatpush1.msra.mxu0 0.0
        %3550 = vmatprep.subr.mxu0 0.0
        %3551 = vmatpush1.msra.mxu0 0.0
        %3552 = vmatprep.subr.mxu0 0.0
        %3553 = vmatpush1.msra.mxu0 0.0
        %3554 = vmatprep.subr.mxu0 0.0
        %3555 = vmatpush1.msra.mxu0 0.0
        %3556 = vmatprep.subr.mxu0 0.0
        %3557 = vmatpush1.msra.mxu0 0.0
        %3558 = vmatprep.subr.mxu0 0.0
        %3559 = vmatpush1.msra.mxu0 0.0
        %3560 = vmatprep.subr.mxu0 0.0
        %3561 = vmatpush1.msra.mxu0 0.0
        %3562 = vmatprep.subr.mxu0 0.0
        %3563 = vmatpush1.msra.mxu0 0.0
        %3564 = vmatprep.subr.mxu0 0.0
        %3565 = vmatpush1.msra.mxu0 0.0
        %3566 = vmatprep.mubr.f32.mxu0 0.0
        %3567 = vmatmul.mubr.f32.gmra.mrb[0].mxu0 %v3500
        %v3568 = vpop.f32.mrb[0].mxu0
        %v3569 = vadd.f32 %v3498, %v3568
        %v3570 = vpop.f32.mrb[0].mxu0
        %3571 = vdwg.mxu0
        %3573 = vset.pattern.permute.xlu0 0
        %3574 = vperm.xlu0 %3573, %v3485
        %v3575 = vpop.permute.xlu0 %3574
        %3578 = vset.pattern.permute.xlu0 0
        %3579 = vperm.xlu0 %3578, %v3486
        %v3580 = vpop.permute.xlu0 %3579
        %3583 = vset.pattern.permute.xlu0 0
        %3584 = vperm.xlu0 %3583, %v3487
        %v3585 = vpop.permute.xlu0 %3584
        %3588 = vset.pattern.permute.xlu0 0
        %3589 = vperm.xlu0 %3588, %v3488
        %v3590 = vpop.permute.xlu0 %3589
        %3593 = vset.pattern.permute.xlu0 0
        %3594 = vperm.xlu0 %3593, %v3489
        %v3595 = vpop.permute.xlu0 %3594
        %3598 = vset.pattern.permute.xlu0 0
        %3599 = vperm.xlu0 %3598, %v3490
        %v3600 = vpop.permute.xlu0 %3599
        %3603 = vset.pattern.permute.xlu0 0
        %3604 = vperm.xlu0 %3603, %v3491
        %v3605 = vpop.permute.xlu0 %3604
        %3608 = vset.pattern.permute.xlu0 0
        %3609 = vperm.xlu0 %3608, %v3492
        %v3610 = vpop.permute.xlu0 %3609
        %v3613 = vsel %vm335, %v3476, 0
        %v3616 = vsel %vm335, %v3477, 0
        %v3619 = vsel %vm335, %v3478, 0
        %v3622 = vsel %vm335, %v3479, 0
        %v3625 = vsel %vm335, %v3480, 0
        %v3628 = vsel %vm335, %v3481, 0
        %v3631 = vsel %vm335, %v3482, 0
        %v3634 = vsel %vm335, %v3483, 0
        %3636 = vmatprep.subr.mxu0 0.0
        %3637 = vmatpush1.msra.mxu0 %v1375
        %3638 = vmatprep.subr.mxu0 0.0
        %3639 = vmatpush1.msra.mxu0 %v1376
        %3640 = vmatprep.subr.mxu0 0.0
        %3641 = vmatpush1.msra.mxu0 %v1377
        %3642 = vmatprep.subr.mxu0 0.0
        %3643 = vmatpush1.msra.mxu0 %v1378
        %3644 = vmatprep.subr.mxu0 0.0
        %3645 = vmatpush1.msra.mxu0 0.0
        %3646 = vmatprep.subr.mxu0 0.0
        %3647 = vmatpush1.msra.mxu0 0.0
        %3648 = vmatprep.subr.mxu0 0.0
        %3649 = vmatpush1.msra.mxu0 0.0
        %3650 = vmatprep.subr.mxu0 0.0
        %3651 = vmatpush1.msra.mxu0 0.0
        %3652 = vmatprep.subr.mxu0 0.0
        %3653 = vmatpush1.msra.mxu0 0.0
        %3654 = vmatprep.subr.mxu0 0.0
        %3655 = vmatpush1.msra.mxu0 0.0
        %3656 = vmatprep.subr.mxu0 0.0
        %3657 = vmatpush1.msra.mxu0 0.0
        %3658 = vmatprep.subr.mxu0 0.0
        %3659 = vmatpush1.msra.mxu0 0.0
        %3660 = vmatprep.subr.mxu0 0.0
        %3661 = vmatpush1.msra.mxu0 0.0
        %3662 = vmatprep.subr.mxu0 0.0
        %3663 = vmatpush1.msra.mxu0 0.0
        %3664 = vmatprep.subr.mxu0 0.0
        %3665 = vmatpush1.msra.mxu0 0.0
        %3666 = vmatprep.subr.mxu0 0.0
        %3667 = vmatpush1.msra.mxu0 0.0
        %3668 = vmatprep.subr.mxu0 0.0
        %3669 = vmatpush1.msra.mxu0 0.0
        %3670 = vmatprep.subr.mxu0 0.0
        %3671 = vmatpush1.msra.mxu0 0.0
        %3672 = vmatprep.subr.mxu0 0.0
        %3673 = vmatpush1.msra.mxu0 0.0
        %3674 = vmatprep.subr.mxu0 0.0
        %3675 = vmatpush1.msra.mxu0 0.0
        %3676 = vmatprep.subr.mxu0 0.0
        %3677 = vmatpush1.msra.mxu0 0.0
        %3678 = vmatprep.subr.mxu0 0.0
        %3679 = vmatpush1.msra.mxu0 0.0
        %3680 = vmatprep.subr.mxu0 0.0
        %3681 = vmatpush1.msra.mxu0 0.0
        %3682 = vmatprep.subr.mxu0 0.0
        %3683 = vmatpush1.msra.mxu0 0.0
        %3684 = vmatprep.subr.mxu0 0.0
        %3685 = vmatpush1.msra.mxu0 0.0
        %3686 = vmatprep.subr.mxu0 0.0
        %3687 = vmatpush1.msra.mxu0 0.0
        %3688 = vmatprep.subr.mxu0 0.0
        %3689 = vmatpush1.msra.mxu0 0.0
        %3690 = vmatprep.subr.mxu0 0.0
        %3691 = vmatpush1.msra.mxu0 0.0
        %3692 = vmatprep.subr.mxu0 0.0
        %3693 = vmatpush1.msra.mxu0 0.0
        %3694 = vmatprep.subr.mxu0 0.0
        %3695 = vmatpush1.msra.mxu0 0.0
        %3696 = vmatprep.subr.mxu0 0.0
        %3697 = vmatpush1.msra.mxu0 0.0
        %3698 = vmatprep.subr.mxu0 0.0
        %3699 = vmatpush1.msra.mxu0 0.0
        %3700 = vmatprep.mubr.f32.mxu0 0.0
        %3701 = vmatmul.mubr.f32.gmra.mrb[0].mxu0 %v3613
        %v3702 = vpop.f32.mrb[0].mxu0
        %v3703 = vadd.f32 %v3575, %v3702
        %v3704 = vpop.f32.mrb[0].mxu0
        %3705 = vmatprep.mubr.f32.mxu0 0.0
        %3706 = vmatmul.mubr.f32.gmra.mrb[0].mxu0 %v3616
        %v3707 = vpop.f32.mrb[0].mxu0
        %v3708 = vadd.f32 %v3580, %v3707
        %v3709 = vpop.f32.mrb[0].mxu0
        %3710 = vmatprep.mubr.f32.mxu0 0.0
        %3711 = vmatmul.mubr.f32.gmra.mrb[0].mxu0 %v3619
        %v3712 = vpop.f32.mrb[0].mxu0
        %v3713 = vadd.f32 %v3585, %v3712
        %v3714 = vpop.f32.mrb[0].mxu0
        %3715 = vmatprep.mubr.f32.mxu0 0.0
        %3716 = vmatmul.mubr.f32.gmra.mrb[0].mxu0 %v3622
        %v3717 = vpop.f32.mrb[0].mxu0
        %v3718 = vadd.f32 %v3590, %v3717
        %v3719 = vpop.f32.mrb[0].mxu0
        %3720 = vmatprep.mubr.f32.mxu0 0.0
        %3721 = vmatmul.mubr.f32.gmra.mrb[0].mxu0 %v3625
        %v3722 = vpop.f32.mrb[0].mxu0
        %v3723 = vadd.f32 %v3595, %v3722
        %v3724 = vpop.f32.mrb[0].mxu0
        %3725 = vmatprep.mubr.f32.mxu0 0.0
        %3726 = vmatmul.mubr.f32.gmra.mrb[0].mxu0 %v3628
        %v3727 = vpop.f32.mrb[0].mxu0
        %v3728 = vadd.f32 %v3600, %v3727
        %v3729 = vpop.f32.mrb[0].mxu0
        %3730 = vmatprep.mubr.f32.mxu0 0.0
        %3731 = vmatmul.mubr.f32.gmra.mrb[0].mxu0 %v3631
        %v3732 = vpop.f32.mrb[0].mxu0
        %v3733 = vadd.f32 %v3605, %v3732
        %v3734 = vpop.f32.mrb[0].mxu0
        %3735 = vmatprep.mubr.f32.mxu0 0.0
        %3736 = vmatmul.mubr.f32.gmra.mrb[0].mxu0 %v3634
        %v3737 = vpop.f32.mrb[0].mxu0
        %v3738 = vadd.f32 %v3610, %v3737
        %v3739 = vpop.f32.mrb[0].mxu0
        %3740 = vdwg.mxu0
        %v3742 = vsel %vm490, %v3569, 0
        %3744 = vmatprep.subr.mxu0 0.0
        %3745 = vmatpush1.msra.mxu0 %v3703
        %3746 = vmatprep.subr.mxu0 0.0
        %3747 = vmatpush1.msra.mxu0 0.0
        %3748 = vmatprep.subr.mxu0 0.0
        %3749 = vmatpush1.msra.mxu0 0.0
        %3750 = vmatprep.subr.mxu0 0.0
        %3751 = vmatpush1.msra.mxu0 0.0
        %3752 = vmatprep.subr.mxu0 0.0
        %3753 = vmatpush1.msra.mxu0 0.0
        %3754 = vmatprep.subr.mxu0 0.0
        %3755 = vmatpush1.msra.mxu0 0.0
        %3756 = vmatprep.subr.mxu0 0.0
        %3757 = vmatpush1.msra.mxu0 0.0
        %3758 = vmatprep.subr.mxu0 0.0
        %3759 = vmatpush1.msra.mxu0 0.0
        %3760 = vmatprep.subr.mxu0 0.0
        %3761 = vmatpush1.msra.mxu0 0.0
        %3762 = vmatprep.subr.mxu0 0.0
        %3763 = vmatpush1.msra.mxu0 0.0
        %3764 = vmatprep.subr.mxu0 0.0
        %3765 = vmatpush1.msra.mxu0 0.0
        %3766 = vmatprep.subr.mxu0 0.0
        %3767 = vmatpush1.msra.mxu0 0.0
        %3768 = vmatprep.subr.mxu0 0.0
        %3769 = vmatpush1.msra.mxu0 0.0
        %3770 = vmatprep.subr.mxu0 0.0
        %3771 = vmatpush1.msra.mxu0 0.0
        %3772 = vmatprep.subr.mxu0 0.0
        %3773 = vmatpush1.msra.mxu0 0.0
        %3774 = vmatprep.subr.mxu0 0.0
        %3775 = vmatpush1.msra.mxu0 0.0
        %3776 = vmatprep.subr.mxu0 0.0
        %3777 = vmatpush1.msra.mxu0 0.0
        %3778 = vmatprep.subr.mxu0 0.0
        %3779 = vmatpush1.msra.mxu0 0.0
        %3780 = vmatprep.subr.mxu0 0.0
        %3781 = vmatpush1.msra.mxu0 0.0
        %3782 = vmatprep.subr.mxu0 0.0
        %3783 = vmatpush1.msra.mxu0 0.0
        %3784 = vmatprep.subr.mxu0 0.0
        %3785 = vmatpush1.msra.mxu0 0.0
        %3786 = vmatprep.subr.mxu0 0.0
        %3787 = vmatpush1.msra.mxu0 0.0
        %3788 = vmatprep.subr.mxu0 0.0
        %3789 = vmatpush1.msra.mxu0 0.0
        %3790 = vmatprep.subr.mxu0 0.0
        %3791 = vmatpush1.msra.mxu0 0.0
        %3792 = vmatprep.subr.mxu0 0.0
        %3793 = vmatpush1.msra.mxu0 0.0
        %3794 = vmatprep.subr.mxu0 0.0
        %3795 = vmatpush1.msra.mxu0 0.0
        %3796 = vmatprep.subr.mxu0 0.0
        %3797 = vmatpush1.msra.mxu0 0.0
        %3798 = vmatprep.subr.mxu0 0.0
        %3799 = vmatpush1.msra.mxu0 0.0
        %3800 = vmatprep.subr.mxu0 0.0
        %3801 = vmatpush1.msra.mxu0 0.0
        %3802 = vmatprep.subr.mxu0 0.0
        %3803 = vmatpush1.msra.mxu0 0.0
        %3804 = vmatprep.subr.mxu0 0.0
        %3805 = vmatpush1.msra.mxu0 0.0
        %3806 = vmatprep.subr.mxu0 0.0
        %3807 = vmatpush1.msra.mxu0 0.0
        %3808 = vmatprep.mubr.f32.mxu0 0.0
        %3809 = vmatmul.mubr.f32.gmra.mrb[0].mxu0 %v3742
        %v3810 = vpop.f32.mrb[0].mxu0
        %v3811 = vadd.f32 0.0, %v3810
        %v3812 = vpop.f32.mrb[0].mxu0
        %3813 = vdwg.mxu0
        %3814 = vrot.lane.b32.xlu0 %v3569, 120
        %v3815 = vpop.permute.xlu0 %3814
        %v3816 = vsel %vm490, %v3815, 0
        %3818 = vmatprep.subr.mxu0 0.0
        %3819 = vmatpush1.msra.mxu0 %v3708
        %3820 = vmatprep.subr.mxu0 0.0
        %3821 = vmatpush1.msra.mxu0 0.0
        %3822 = vmatprep.subr.mxu0 0.0
        %3823 = vmatpush1.msra.mxu0 0.0
        %3824 = vmatprep.subr.mxu0 0.0
        %3825 = vmatpush1.msra.mxu0 0.0
        %3826 = vmatprep.subr.mxu0 0.0
        %3827 = vmatpush1.msra.mxu0 0.0
        %3828 = vmatprep.subr.mxu0 0.0
        %3829 = vmatpush1.msra.mxu0 0.0
        %3830 = vmatprep.subr.mxu0 0.0
        %3831 = vmatpush1.msra.mxu0 0.0
        %3832 = vmatprep.subr.mxu0 0.0
        %3833 = vmatpush1.msra.mxu0 0.0
        %3834 = vmatprep.subr.mxu0 0.0
        %3835 = vmatpush1.msra.mxu0 0.0
        %3836 = vmatprep.subr.mxu0 0.0
        %3837 = vmatpush1.msra.mxu0 0.0
        %3838 = vmatprep.subr.mxu0 0.0
        %3839 = vmatpush1.msra.mxu0 0.0
        %3840 = vmatprep.subr.mxu0 0.0
        %3841 = vmatpush1.msra.mxu0 0.0
        %3842 = vmatprep.subr.mxu0 0.0
        %3843 = vmatpush1.msra.mxu0 0.0
        %3844 = vmatprep.subr.mxu0 0.0
        %3845 = vmatpush1.msra.mxu0 0.0
        %3846 = vmatprep.subr.mxu0 0.0
        %3847 = vmatpush1.msra.mxu0 0.0
        %3848 = vmatprep.subr.mxu0 0.0
        %3849 = vmatpush1.msra.mxu0 0.0
        %3850 = vmatprep.subr.mxu0 0.0
        %3851 = vmatpush1.msra.mxu0 0.0
        %3852 = vmatprep.subr.mxu0 0.0
        %3853 = vmatpush1.msra.mxu0 0.0
        %3854 = vmatprep.subr.mxu0 0.0
        %3855 = vmatpush1.msra.mxu0 0.0
        %3856 = vmatprep.subr.mxu0 0.0
        %3857 = vmatpush1.msra.mxu0 0.0
        %3858 = vmatprep.subr.mxu0 0.0
        %3859 = vmatpush1.msra.mxu0 0.0
        %3860 = vmatprep.subr.mxu0 0.0
        %3861 = vmatpush1.msra.mxu0 0.0
        %3862 = vmatprep.subr.mxu0 0.0
        %3863 = vmatpush1.msra.mxu0 0.0
        %3864 = vmatprep.subr.mxu0 0.0
        %3865 = vmatpush1.msra.mxu0 0.0
        %3866 = vmatprep.subr.mxu0 0.0
        %3867 = vmatpush1.msra.mxu0 0.0
        %3868 = vmatprep.subr.mxu0 0.0
        %3869 = vmatpush1.msra.mxu0 0.0
        %3870 = vmatprep.subr.mxu0 0.0
        %3871 = vmatpush1.msra.mxu0 0.0
        %3872 = vmatprep.subr.mxu0 0.0
        %3873 = vmatpush1.msra.mxu0 0.0
        %3874 = vmatprep.subr.mxu0 0.0
        %3875 = vmatpush1.msra.mxu0 0.0
        %3876 = vmatprep.subr.mxu0 0.0
        %3877 = vmatpush1.msra.mxu0 0.0
        %3878 = vmatprep.subr.mxu0 0.0
        %3879 = vmatpush1.msra.mxu0 0.0
        %3880 = vmatprep.subr.mxu0 0.0
        %3881 = vmatpush1.msra.mxu0 0.0
        %3882 = vmatprep.mubr.f32.mxu0 0.0
        %3883 = vmatmul.mubr.f32.gmra.mrb[0].mxu0 %v3816
        %v3884 = vpop.f32.mrb[0].mxu0
        %v3885 = vadd.f32 0.0, %v3884
        %v3886 = vpop.f32.mrb[0].mxu0
        %3887 = vdwg.mxu0
        %3888 = vrot.lane.b32.xlu0 %v3569, 112
        %v3889 = vpop.permute.xlu0 %3888
        %v3890 = vsel %vm490, %v3889, 0
        %3892 = vmatprep.subr.mxu0 0.0
        %3893 = vmatpush1.msra.mxu0 %v3713
        %3894 = vmatprep.subr.mxu0 0.0
        %3895 = vmatpush1.msra.mxu0 0.0
        %3896 = vmatprep.subr.mxu0 0.0
        %3897 = vmatpush1.msra.mxu0 0.0
        %3898 = vmatprep.subr.mxu0 0.0
        %3899 = vmatpush1.msra.mxu0 0.0
        %3900 = vmatprep.subr.mxu0 0.0
        %3901 = vmatpush1.msra.mxu0 0.0
        %3902 = vmatprep.subr.mxu0 0.0
        %3903 = vmatpush1.msra.mxu0 0.0
        %3904 = vmatprep.subr.mxu0 0.0
        %3905 = vmatpush1.msra.mxu0 0.0
        %3906 = vmatprep.subr.mxu0 0.0
        %3907 = vmatpush1.msra.mxu0 0.0
        %3908 = vmatprep.subr.mxu0 0.0
        %3909 = vmatpush1.msra.mxu0 0.0
        %3910 = vmatprep.subr.mxu0 0.0
        %3911 = vmatpush1.msra.mxu0 0.0
        %3912 = vmatprep.subr.mxu0 0.0
        %3913 = vmatpush1.msra.mxu0 0.0
        %3914 = vmatprep.subr.mxu0 0.0
        %3915 = vmatpush1.msra.mxu0 0.0
        %3916 = vmatprep.subr.mxu0 0.0
        %3917 = vmatpush1.msra.mxu0 0.0
        %3918 = vmatprep.subr.mxu0 0.0
        %3919 = vmatpush1.msra.mxu0 0.0
        %3920 = vmatprep.subr.mxu0 0.0
        %3921 = vmatpush1.msra.mxu0 0.0
        %3922 = vmatprep.subr.mxu0 0.0
        %3923 = vmatpush1.msra.mxu0 0.0
        %3924 = vmatprep.subr.mxu0 0.0
        %3925 = vmatpush1.msra.mxu0 0.0
        %3926 = vmatprep.subr.mxu0 0.0
        %3927 = vmatpush1.msra.mxu0 0.0
        %3928 = vmatprep.subr.mxu0 0.0
        %3929 = vmatpush1.msra.mxu0 0.0
        %3930 = vmatprep.subr.mxu0 0.0
        %3931 = vmatpush1.msra.mxu0 0.0
        %3932 = vmatprep.subr.mxu0 0.0
        %3933 = vmatpush1.msra.mxu0 0.0
        %3934 = vmatprep.subr.mxu0 0.0
        %3935 = vmatpush1.msra.mxu0 0.0
        %3936 = vmatprep.subr.mxu0 0.0
        %3937 = vmatpush1.msra.mxu0 0.0
        %3938 = vmatprep.subr.mxu0 0.0
        %3939 = vmatpush1.msra.mxu0 0.0
        %3940 = vmatprep.subr.mxu0 0.0
        %3941 = vmatpush1.msra.mxu0 0.0
        %3942 = vmatprep.subr.mxu0 0.0
        %3943 = vmatpush1.msra.mxu0 0.0
        %3944 = vmatprep.subr.mxu0 0.0
        %3945 = vmatpush1.msra.mxu0 0.0
        %3946 = vmatprep.subr.mxu0 0.0
        %3947 = vmatpush1.msra.mxu0 0.0
        %3948 = vmatprep.subr.mxu0 0.0
        %3949 = vmatpush1.msra.mxu0 0.0
        %3950 = vmatprep.subr.mxu0 0.0
        %3951 = vmatpush1.msra.mxu0 0.0
        %3952 = vmatprep.subr.mxu0 0.0
        %3953 = vmatpush1.msra.mxu0 0.0
        %3954 = vmatprep.subr.mxu0 0.0
        %3955 = vmatpush1.msra.mxu0 0.0
        %3956 = vmatprep.mubr.f32.mxu0 0.0
        %3957 = vmatmul.mubr.f32.gmra.mrb[0].mxu0 %v3890
        %v3958 = vpop.f32.mrb[0].mxu0
        %v3959 = vadd.f32 0.0, %v3958
        %v3960 = vpop.f32.mrb[0].mxu0
        %3961 = vdwg.mxu0
        %3962 = vrot.lane.b32.xlu0 %v3569, 104
        %v3963 = vpop.permute.xlu0 %3962
        %v3964 = vsel %vm490, %v3963, 0
        %3966 = vmatprep.subr.mxu0 0.0
        %3967 = vmatpush1.msra.mxu0 %v3718
        %3968 = vmatprep.subr.mxu0 0.0
        %3969 = vmatpush1.msra.mxu0 0.0
        %3970 = vmatprep.subr.mxu0 0.0
        %3971 = vmatpush1.msra.mxu0 0.0
        %3972 = vmatprep.subr.mxu0 0.0
        %3973 = vmatpush1.msra.mxu0 0.0
        %3974 = vmatprep.subr.mxu0 0.0
        %3975 = vmatpush1.msra.mxu0 0.0
        %3976 = vmatprep.subr.mxu0 0.0
        %3977 = vmatpush1.msra.mxu0 0.0
        %3978 = vmatprep.subr.mxu0 0.0
        %3979 = vmatpush1.msra.mxu0 0.0
        %3980 = vmatprep.subr.mxu0 0.0
        %3981 = vmatpush1.msra.mxu0 0.0
        %3982 = vmatprep.subr.mxu0 0.0
        %3983 = vmatpush1.msra.mxu0 0.0
        %3984 = vmatprep.subr.mxu0 0.0
        %3985 = vmatpush1.msra.mxu0 0.0
        %3986 = vmatprep.subr.mxu0 0.0
        %3987 = vmatpush1.msra.mxu0 0.0
        %3988 = vmatprep.subr.mxu0 0.0
        %3989 = vmatpush1.msra.mxu0 0.0
        %3990 = vmatprep.subr.mxu0 0.0
        %3991 = vmatpush1.msra.mxu0 0.0
        %3992 = vmatprep.subr.mxu0 0.0
        %3993 = vmatpush1.msra.mxu0 0.0
        %3994 = vmatprep.subr.mxu0 0.0
        %3995 = vmatpush1.msra.mxu0 0.0
        %3996 = vmatprep.subr.mxu0 0.0
        %3997 = vmatpush1.msra.mxu0 0.0
        %3998 = vmatprep.subr.mxu0 0.0
        %3999 = vmatpush1.msra.mxu0 0.0
        %4000 = vmatprep.subr.mxu0 0.0
        %4001 = vmatpush1.msra.mxu0 0.0
        %4002 = vmatprep.subr.mxu0 0.0
        %4003 = vmatpush1.msra.mxu0 0.0
        %4004 = vmatprep.subr.mxu0 0.0
        %4005 = vmatpush1.msra.mxu0 0.0
        %4006 = vmatprep.subr.mxu0 0.0
        %4007 = vmatpush1.msra.mxu0 0.0
        %4008 = vmatprep.subr.mxu0 0.0
        %4009 = vmatpush1.msra.mxu0 0.0
        %4010 = vmatprep.subr.mxu0 0.0
        %4011 = vmatpush1.msra.mxu0 0.0
        %4012 = vmatprep.subr.mxu0 0.0
        %4013 = vmatpush1.msra.mxu0 0.0
        %4014 = vmatprep.subr.mxu0 0.0
        %4015 = vmatpush1.msra.mxu0 0.0
        %4016 = vmatprep.subr.mxu0 0.0
        %4017 = vmatpush1.msra.mxu0 0.0
        %4018 = vmatprep.subr.mxu0 0.0
        %4019 = vmatpush1.msra.mxu0 0.0
        %4020 = vmatprep.subr.mxu0 0.0
        %4021 = vmatpush1.msra.mxu0 0.0
        %4022 = vmatprep.subr.mxu0 0.0
        %4023 = vmatpush1.msra.mxu0 0.0
        %4024 = vmatprep.subr.mxu0 0.0
        %4025 = vmatpush1.msra.mxu0 0.0
        %4026 = vmatprep.subr.mxu0 0.0
        %4027 = vmatpush1.msra.mxu0 0.0
        %4028 = vmatprep.subr.mxu0 0.0
        %4029 = vmatpush1.msra.mxu0 0.0
        %4030 = vmatprep.mubr.f32.mxu0 0.0
        %4031 = vmatmul.mubr.f32.gmra.mrb[0].mxu0 %v3964
        %v4032 = vpop.f32.mrb[0].mxu0
        %v4033 = vadd.f32 0.0, %v4032
        %v4034 = vpop.f32.mrb[0].mxu0
        %4035 = vdwg.mxu0
        %v4036 = vsel %vm1158, %v3811, -inf
        %4037 = vmax.xlane.f32.xlu0 %v4036
        %v4038 = vpop.xlane.xlu0 %4037
        %v4039 = vsel %vm1158, %v3885, -inf
        %4040 = vmax.xlane.f32.xlu0 %v4039
        %v4041 = vpop.xlane.xlu0 %4040
        %v4042 = vsel %vm1158, %v3959, -inf
        %4043 = vmax.xlane.f32.xlu0 %v4042
        %v4044 = vpop.xlane.xlu0 %4043
        %v4045 = vsel %vm1158, %v4033, -inf
        %4046 = vmax.xlane.f32.xlu0 %v4045
        %v4047 = vpop.xlane.xlu0 %4046
        %v4048 = vsub.f32 %v3811, %v4038
        %v4049 = vsub.f32 %v3885, %v4041
        %v4050 = vsub.f32 %v3959, %v4044
        %v4051 = vsub.f32 %v4033, %v4047
        %v4052 = vmul.f32 %v4048, 1.442695
        %v4053 = vpow.pop %v4052
        %v4054 = vmul.f32 %v4049, 1.442695
        %v4055 = vpow.pop %v4054
        %v4056 = vmul.f32 %v4050, 1.442695
        %v4057 = vpow.pop %v4056
        %v4058 = vmul.f32 %v4051, 1.442695
        %v4059 = vpow.pop %v4058
        %v4060 = vsel %vm1158, %v4053, 0.0
        %4061 = vadd.xlane.f32.xlu0 %v4060
        %v4062 = vpop.xlane.xlu0 %4061
        %v4063 = vsel %vm1158, %v4055, 0.0
        %4064 = vadd.xlane.f32.xlu0 %v4063
        %v4065 = vpop.xlane.xlu0 %4064
        %v4066 = vsel %vm1158, %v4057, 0.0
        %4067 = vadd.xlane.f32.xlu0 %v4066
        %v4068 = vpop.xlane.xlu0 %4067
        %v4069 = vsel %vm1158, %v4059, 0.0
        %4070 = vadd.xlane.f32.xlu0 %v4069
        %v4071 = vpop.xlane.xlu0 %4070
        %v4072 = vrcp.pop %v4062
        %v4073 = vmul.f32 %v4053, %v4072
        %v4074 = vrcp.pop %v4065
        %v4075 = vmul.f32 %v4055, %v4074
        %v4076 = vrcp.pop %v4068
        %v4077 = vmul.f32 %v4057, %v4076
        %v4078 = vrcp.pop %v4071
        %v4079 = vmul.f32 %v4059, %v4078
        %v4081 = vsel %vm1158, %v4073, 0
        %v4084 = vsel %vm1158, %v3723, 0
        %4086 = vmatprep.subr.mxu0 0.0
        %4087 = vmatpush1.xpose.msra.mxu0 %v4084
        %4088 = vmatprep.subr.mxu0 0.0
        %4089 = vmatpush1.xpose.msra.mxu0 0.0
        %4090 = vmatprep.subr.mxu0 0.0
        %4091 = vmatpush1.xpose.msra.mxu0 0.0
        %4092 = vmatprep.subr.mxu0 0.0
        %4093 = vmatpush1.xpose.msra.mxu0 0.0
        %4094 = vmatprep.subr.mxu0 0.0
        %4095 = vmatpush1.xpose.msra.mxu0 0.0
        %4096 = vmatprep.subr.mxu0 0.0
        %4097 = vmatpush1.xpose.msra.mxu0 0.0
        %4098 = vmatprep.subr.mxu0 0.0
        %4099 = vmatpush1.xpose.msra.mxu0 0.0
        %4100 = vmatprep.subr.mxu0 0.0
        %4101 = vmatpush1.xpose.msra.mxu0 0.0
        %4102 = vmatprep.subr.mxu0 0.0
        %4103 = vmatpush1.xpose.msra.mxu0 0.0
        %4104 = vmatprep.subr.mxu0 0.0
        %4105 = vmatpush1.xpose.msra.mxu0 0.0
        %4106 = vmatprep.subr.mxu0 0.0
        %4107 = vmatpush1.xpose.msra.mxu0 0.0
        %4108 = vmatprep.subr.mxu0 0.0
        %4109 = vmatpush1.xpose.msra.mxu0 0.0
        %4110 = vmatprep.subr.mxu0 0.0
        %4111 = vmatpush1.xpose.msra.mxu0 0.0
        %4112 = vmatprep.subr.mxu0 0.0
        %4113 = vmatpush1.xpose.msra.mxu0 0.0
        %4114 = vmatprep.subr.mxu0 0.0
        %4115 = vmatpush1.xpose.msra.mxu0 0.0
        %4116 = vmatprep.subr.mxu0 0.0
        %4117 = vmatpush1.xpose.msra.mxu0 0.0
        %4118 = vmatprep.subr.mxu0 0.0
        %4119 = vmatpush1.xpose.msra.mxu0 0.0
        %4120 = vmatprep.subr.mxu0 0.0
        %4121 = vmatpush1.xpose.msra.mxu0 0.0
        %4122 = vmatprep.subr.mxu0 0.0
        %4123 = vmatpush1.xpose.msra.mxu0 0.0
        %4124 = vmatprep.subr.mxu0 0.0
        %4125 = vmatpush1.xpose.msra.mxu0 0.0
        %4126 = vmatprep.subr.mxu0 0.0
        %4127 = vmatpush1.xpose.msra.mxu0 0.0
        %4128 = vmatprep.subr.mxu0 0.0
        %4129 = vmatpush1.xpose.msra.mxu0 0.0
        %4130 = vmatprep.subr.mxu0 0.0
        %4131 = vmatpush1.xpose.msra.mxu0 0.0
        %4132 = vmatprep.subr.mxu0 0.0
        %4133 = vmatpush1.xpose.msra.mxu0 0.0
        %4134 = vmatprep.subr.mxu0 0.0
        %4135 = vmatpush1.xpose.msra.mxu0 0.0
        %4136 = vmatprep.subr.mxu0 0.0
        %4137 = vmatpush1.xpose.msra.mxu0 0.0
        %4138 = vmatprep.subr.mxu0 0.0
        %4139 = vmatpush1.xpose.msra.mxu0 0.0
        %4140 = vmatprep.subr.mxu0 0.0
        %4141 = vmatpush1.xpose.msra.mxu0 0.0
        %4142 = vmatprep.subr.mxu0 0.0
        %4143 = vmatpush1.xpose.msra.mxu0 0.0
        %4144 = vmatprep.subr.mxu0 0.0
        %4145 = vmatpush1.xpose.msra.mxu0 0.0
        %4146 = vmatprep.subr.mxu0 0.0
        %4147 = vmatpush1.xpose.msra.mxu0 0.0
        %4148 = vmatprep.subr.mxu0 0.0
        %4149 = vmatpush1.xpose.msra.mxu0 0.0
        %4150 = vmatprep.mubr.f32.mxu0 0.0
        %4151 = vmatmul.mubr.f32.gmra.mrb[0].mxu0 %v4081
        %v4152 = vpop.f32.mrb[0].mxu0
        %v4153 = vadd.f32 0.0, %v4152
        %v4154 = vpop.f32.mrb[0].mxu0
        %4155 = vdwg.mxu0
        %v4157 = vsel %vm1158, %v4075, 0
        %v4160 = vsel %vm1158, %v3728, 0
        %4162 = vmatprep.subr.mxu0 0.0
        %4163 = vmatpush1.xpose.msra.mxu0 %v4160
        %4164 = vmatprep.subr.mxu0 0.0
        %4165 = vmatpush1.xpose.msra.mxu0 0.0
        %4166 = vmatprep.subr.mxu0 0.0
        %4167 = vmatpush1.xpose.msra.mxu0 0.0
        %4168 = vmatprep.subr.mxu0 0.0
        %4169 = vmatpush1.xpose.msra.mxu0 0.0
        %4170 = vmatprep.subr.mxu0 0.0
        %4171 = vmatpush1.xpose.msra.mxu0 0.0
        %4172 = vmatprep.subr.mxu0 0.0
        %4173 = vmatpush1.xpose.msra.mxu0 0.0
        %4174 = vmatprep.subr.mxu0 0.0
        %4175 = vmatpush1.xpose.msra.mxu0 0.0
        %4176 = vmatprep.subr.mxu0 0.0
        %4177 = vmatpush1.xpose.msra.mxu0 0.0
        %4178 = vmatprep.subr.mxu0 0.0
        %4179 = vmatpush1.xpose.msra.mxu0 0.0
        %4180 = vmatprep.subr.mxu0 0.0
        %4181 = vmatpush1.xpose.msra.mxu0 0.0
        %4182 = vmatprep.subr.mxu0 0.0
        %4183 = vmatpush1.xpose.msra.mxu0 0.0
        %4184 = vmatprep.subr.mxu0 0.0
        %4185 = vmatpush1.xpose.msra.mxu0 0.0
        %4186 = vmatprep.subr.mxu0 0.0
        %4187 = vmatpush1.xpose.msra.mxu0 0.0
        %4188 = vmatprep.subr.mxu0 0.0
        %4189 = vmatpush1.xpose.msra.mxu0 0.0
        %4190 = vmatprep.subr.mxu0 0.0
        %4191 = vmatpush1.xpose.msra.mxu0 0.0
        %4192 = vmatprep.subr.mxu0 0.0
        %4193 = vmatpush1.xpose.msra.mxu0 0.0
        %4194 = vmatprep.subr.mxu0 0.0
        %4195 = vmatpush1.xpose.msra.mxu0 0.0
        %4196 = vmatprep.subr.mxu0 0.0
        %4197 = vmatpush1.xpose.msra.mxu0 0.0
        %4198 = vmatprep.subr.mxu0 0.0
        %4199 = vmatpush1.xpose.msra.mxu0 0.0
        %4200 = vmatprep.subr.mxu0 0.0
        %4201 = vmatpush1.xpose.msra.mxu0 0.0
        %4202 = vmatprep.subr.mxu0 0.0
        %4203 = vmatpush1.xpose.msra.mxu0 0.0
        %4204 = vmatprep.subr.mxu0 0.0
        %4205 = vmatpush1.xpose.msra.mxu0 0.0
        %4206 = vmatprep.subr.mxu0 0.0
        %4207 = vmatpush1.xpose.msra.mxu0 0.0
        %4208 = vmatprep.subr.mxu0 0.0
        %4209 = vmatpush1.xpose.msra.mxu0 0.0
        %4210 = vmatprep.subr.mxu0 0.0
        %4211 = vmatpush1.xpose.msra.mxu0 0.0
        %4212 = vmatprep.subr.mxu0 0.0
        %4213 = vmatpush1.xpose.msra.mxu0 0.0
        %4214 = vmatprep.subr.mxu0 0.0
        %4215 = vmatpush1.xpose.msra.mxu0 0.0
        %4216 = vmatprep.subr.mxu0 0.0
        %4217 = vmatpush1.xpose.msra.mxu0 0.0
        %4218 = vmatprep.subr.mxu0 0.0
        %4219 = vmatpush1.xpose.msra.mxu0 0.0
        %4220 = vmatprep.subr.mxu0 0.0
        %4221 = vmatpush1.xpose.msra.mxu0 0.0
        %4222 = vmatprep.subr.mxu0 0.0
        %4223 = vmatpush1.xpose.msra.mxu0 0.0
        %4224 = vmatprep.subr.mxu0 0.0
        %4225 = vmatpush1.xpose.msra.mxu0 0.0
        %4226 = vmatprep.mubr.f32.mxu0 0.0
        %4227 = vmatmul.mubr.f32.gmra.mrb[0].mxu0 %v4157
        %v4228 = vpop.f32.mrb[0].mxu0
        %v4229 = vadd.f32 0.0, %v4228
        %v4230 = vpop.f32.mrb[0].mxu0
        %4231 = vdwg.mxu0
        %v4233 = vsel %vm1158, %v4077, 0
        %v4236 = vsel %vm1158, %v3733, 0
        %4238 = vmatprep.subr.mxu0 0.0
        %4239 = vmatpush1.xpose.msra.mxu0 %v4236
        %4240 = vmatprep.subr.mxu0 0.0
        %4241 = vmatpush1.xpose.msra.mxu0 0.0
        %4242 = vmatprep.subr.mxu0 0.0
        %4243 = vmatpush1.xpose.msra.mxu0 0.0
        %4244 = vmatprep.subr.mxu0 0.0
        %4245 = vmatpush1.xpose.msra.mxu0 0.0
        %4246 = vmatprep.subr.mxu0 0.0
        %4247 = vmatpush1.xpose.msra.mxu0 0.0
        %4248 = vmatprep.subr.mxu0 0.0
        %4249 = vmatpush1.xpose.msra.mxu0 0.0
        %4250 = vmatprep.subr.mxu0 0.0
        %4251 = vmatpush1.xpose.msra.mxu0 0.0
        %4252 = vmatprep.subr.mxu0 0.0
        %4253 = vmatpush1.xpose.msra.mxu0 0.0
        %4254 = vmatprep.subr.mxu0 0.0
        %4255 = vmatpush1.xpose.msra.mxu0 0.0
        %4256 = vmatprep.subr.mxu0 0.0
        %4257 = vmatpush1.xpose.msra.mxu0 0.0
        %4258 = vmatprep.subr.mxu0 0.0
        %4259 = vmatpush1.xpose.msra.mxu0 0.0
        %4260 = vmatprep.subr.mxu0 0.0
        %4261 = vmatpush1.xpose.msra.mxu0 0.0
        %4262 = vmatprep.subr.mxu0 0.0
        %4263 = vmatpush1.xpose.msra.mxu0 0.0
        %4264 = vmatprep.subr.mxu0 0.0
        %4265 = vmatpush1.xpose.msra.mxu0 0.0
        %4266 = vmatprep.subr.mxu0 0.0
        %4267 = vmatpush1.xpose.msra.mxu0 0.0
        %4268 = vmatprep.subr.mxu0 0.0
        %4269 = vmatpush1.xpose.msra.mxu0 0.0
        %4270 = vmatprep.subr.mxu0 0.0
        %4271 = vmatpush1.xpose.msra.mxu0 0.0
        %4272 = vmatprep.subr.mxu0 0.0
        %4273 = vmatpush1.xpose.msra.mxu0 0.0
        %4274 = vmatprep.subr.mxu0 0.0
        %4275 = vmatpush1.xpose.msra.mxu0 0.0
        %4276 = vmatprep.subr.mxu0 0.0
        %4277 = vmatpush1.xpose.msra.mxu0 0.0
        %4278 = vmatprep.subr.mxu0 0.0
        %4279 = vmatpush1.xpose.msra.mxu0 0.0
        %4280 = vmatprep.subr.mxu0 0.0
        %4281 = vmatpush1.xpose.msra.mxu0 0.0
        %4282 = vmatprep.subr.mxu0 0.0
        %4283 = vmatpush1.xpose.msra.mxu0 0.0
        %4284 = vmatprep.subr.mxu0 0.0
        %4285 = vmatpush1.xpose.msra.mxu0 0.0
        %4286 = vmatprep.subr.mxu0 0.0
        %4287 = vmatpush1.xpose.msra.mxu0 0.0
        %4288 = vmatprep.subr.mxu0 0.0
        %4289 = vmatpush1.xpose.msra.mxu0 0.0
        %4290 = vmatprep.subr.mxu0 0.0
        %4291 = vmatpush1.xpose.msra.mxu0 0.0
        %4292 = vmatprep.subr.mxu0 0.0
        %4293 = vmatpush1.xpose.msra.mxu0 0.0
        %4294 = vmatprep.subr.mxu0 0.0
        %4295 = vmatpush1.xpose.msra.mxu0 0.0
        %4296 = vmatprep.subr.mxu0 0.0
        %4297 = vmatpush1.xpose.msra.mxu0 0.0
        %4298 = vmatprep.subr.mxu0 0.0
        %4299 = vmatpush1.xpose.msra.mxu0 0.0
        %4300 = vmatprep.subr.mxu0 0.0
        %4301 = vmatpush1.xpose.msra.mxu0 0.0
        %4302 = vmatprep.mubr.f32.mxu0 0.0
        %4303 = vmatmul.mubr.f32.gmra.mrb[0].mxu0 %v4233
        %v4304 = vpop.f32.mrb[0].mxu0
        %v4305 = vadd.f32 0.0, %v4304
        %v4306 = vpop.f32.mrb[0].mxu0
        %4307 = vdwg.mxu0
        %v4309 = vsel %vm1158, %v4079, 0
        %v4312 = vsel %vm1158, %v3738, 0
        %4314 = vmatprep.subr.mxu0 0.0
        %4315 = vmatpush1.xpose.msra.mxu0 %v4312
        %4316 = vmatprep.subr.mxu0 0.0
        %4317 = vmatpush1.xpose.msra.mxu0 0.0
        %4318 = vmatprep.subr.mxu0 0.0
        %4319 = vmatpush1.xpose.msra.mxu0 0.0
        %4320 = vmatprep.subr.mxu0 0.0
        %4321 = vmatpush1.xpose.msra.mxu0 0.0
        %4322 = vmatprep.subr.mxu0 0.0
        %4323 = vmatpush1.xpose.msra.mxu0 0.0
        %4324 = vmatprep.subr.mxu0 0.0
        %4325 = vmatpush1.xpose.msra.mxu0 0.0
        %4326 = vmatprep.subr.mxu0 0.0
        %4327 = vmatpush1.xpose.msra.mxu0 0.0
        %4328 = vmatprep.subr.mxu0 0.0
        %4329 = vmatpush1.xpose.msra.mxu0 0.0
        %4330 = vmatprep.subr.mxu0 0.0
        %4331 = vmatpush1.xpose.msra.mxu0 0.0
        %4332 = vmatprep.subr.mxu0 0.0
        %4333 = vmatpush1.xpose.msra.mxu0 0.0
        %4334 = vmatprep.subr.mxu0 0.0
        %4335 = vmatpush1.xpose.msra.mxu0 0.0
        %4336 = vmatprep.subr.mxu0 0.0
        %4337 = vmatpush1.xpose.msra.mxu0 0.0
        %4338 = vmatprep.subr.mxu0 0.0
        %4339 = vmatpush1.xpose.msra.mxu0 0.0
        %4340 = vmatprep.subr.mxu0 0.0
        %4341 = vmatpush1.xpose.msra.mxu0 0.0
        %4342 = vmatprep.subr.mxu0 0.0
        %4343 = vmatpush1.xpose.msra.mxu0 0.0
        %4344 = vmatprep.subr.mxu0 0.0
        %4345 = vmatpush1.xpose.msra.mxu0 0.0
        %4346 = vmatprep.subr.mxu0 0.0
        %4347 = vmatpush1.xpose.msra.mxu0 0.0
        %4348 = vmatprep.subr.mxu0 0.0
        %4349 = vmatpush1.xpose.msra.mxu0 0.0
        %4350 = vmatprep.subr.mxu0 0.0
        %4351 = vmatpush1.xpose.msra.mxu0 0.0
        %4352 = vmatprep.subr.mxu0 0.0
        %4353 = vmatpush1.xpose.msra.mxu0 0.0
        %4354 = vmatprep.subr.mxu0 0.0
        %4355 = vmatpush1.xpose.msra.mxu0 0.0
        %4356 = vmatprep.subr.mxu0 0.0
        %4357 = vmatpush1.xpose.msra.mxu0 0.0
        %4358 = vmatprep.subr.mxu0 0.0
        %4359 = vmatpush1.xpose.msra.mxu0 0.0
        %4360 = vmatprep.subr.mxu0 0.0
        %4361 = vmatpush1.xpose.msra.mxu0 0.0
        %4362 = vmatprep.subr.mxu0 0.0
        %4363 = vmatpush1.xpose.msra.mxu0 0.0
        %4364 = vmatprep.subr.mxu0 0.0
        %4365 = vmatpush1.xpose.msra.mxu0 0.0
        %4366 = vmatprep.subr.mxu0 0.0
        %4367 = vmatpush1.xpose.msra.mxu0 0.0
        %4368 = vmatprep.subr.mxu0 0.0
        %4369 = vmatpush1.xpose.msra.mxu0 0.0
        %4370 = vmatprep.subr.mxu0 0.0
        %4371 = vmatpush1.xpose.msra.mxu0 0.0
        %4372 = vmatprep.subr.mxu0 0.0
        %4373 = vmatpush1.xpose.msra.mxu0 0.0
        %4374 = vmatprep.subr.mxu0 0.0
        %4375 = vmatpush1.xpose.msra.mxu0 0.0
        %4376 = vmatprep.subr.mxu0 0.0
        %4377 = vmatpush1.xpose.msra.mxu0 0.0
        %4378 = vmatprep.mubr.f32.mxu0 0.0
        %4379 = vmatmul.mubr.f32.gmra.mrb[0].mxu0 %v4309
        %v4380 = vpop.f32.mrb[0].mxu0
        %v4381 = vadd.f32 0.0, %v4380
        %v4382 = vpop.f32.mrb[0].mxu0
        %4383 = vdwg.mxu0
        %4385 = vrot.lane.b32.xlu0 %v4229, 8
        %v4386 = vpop.permute.xlu0 %4385
        %4389 = vrot.lane.b32.xlu0 %v4305, 16
        %v4390 = vpop.permute.xlu0 %4389
        %4393 = vrot.lane.b32.xlu0 %v4381, 24
        %v4394 = vpop.permute.xlu0 %4393
        %v4396 = vsel %vm490, %v4153, %v4386
        %v4397 = vsel %vm1158, %v4396, %v4390
        %v4398 = vsel %vm1160, %v4397, %v4394
        %v4399 = vadd.f32 %v4073, %v4075
        %v4400 = vadd.f32 %v4399, %v4077
        %v4401 = vadd.f32 %v4400, %v4079
        %v4402 = vmul.f32 %v4401, 0.25
        %v4403 = vld [vmem:[%s6 + $0x13] sm:$0x1]
        %v4404 = vlaneseq
        %v4405 = vshrl.u32 %v4404, 7
        %v4406 = vsub.s32 0, %v4405
        %v4407 = vrot.slane %v4403, %v4406
        %v4409 = vsel %vm335, %v4398, 0
        %4411 = vmatprep.subr.mxu0 0.0
        %4412 = vmatpush1.msra.mxu0 %v3471
        %4413 = vmatprep.subr.mxu0 0.0
        %4414 = vmatpush1.msra.mxu0 %v3472
        %4415 = vmatprep.subr.mxu0 0.0
        %4416 = vmatpush1.msra.mxu0 %v3473
        %4417 = vmatprep.subr.mxu0 0.0
        %4418 = vmatpush1.msra.mxu0 %v3474
        %4419 = vmatprep.subr.mxu0 0.0
        %4420 = vmatpush1.msra.mxu0 0.0
        %4421 = vmatprep.subr.mxu0 0.0
        %4422 = vmatpush1.msra.mxu0 0.0
        %4423 = vmatprep.subr.mxu0 0.0
        %4424 = vmatpush1.msra.mxu0 0.0
        %4425 = vmatprep.subr.mxu0 0.0
        %4426 = vmatpush1.msra.mxu0 0.0
        %4427 = vmatprep.subr.mxu0 0.0
        %4428 = vmatpush1.msra.mxu0 0.0
        %4429 = vmatprep.subr.mxu0 0.0
        %4430 = vmatpush1.msra.mxu0 0.0
        %4431 = vmatprep.subr.mxu0 0.0
        %4432 = vmatpush1.msra.mxu0 0.0
        %4433 = vmatprep.subr.mxu0 0.0
        %4434 = vmatpush1.msra.mxu0 0.0
        %4435 = vmatprep.subr.mxu0 0.0
        %4436 = vmatpush1.msra.mxu0 0.0
        %4437 = vmatprep.subr.mxu0 0.0
        %4438 = vmatpush1.msra.mxu0 0.0
        %4439 = vmatprep.subr.mxu0 0.0
        %4440 = vmatpush1.msra.mxu0 0.0
        %4441 = vmatprep.subr.mxu0 0.0
        %4442 = vmatpush1.msra.mxu0 0.0
        %4443 = vmatprep.subr.mxu0 0.0
        %4444 = vmatpush1.msra.mxu0 0.0
        %4445 = vmatprep.subr.mxu0 0.0
        %4446 = vmatpush1.msra.mxu0 0.0
        %4447 = vmatprep.subr.mxu0 0.0
        %4448 = vmatpush1.msra.mxu0 0.0
        %4449 = vmatprep.subr.mxu0 0.0
        %4450 = vmatpush1.msra.mxu0 0.0
        %4451 = vmatprep.subr.mxu0 0.0
        %4452 = vmatpush1.msra.mxu0 0.0
        %4453 = vmatprep.subr.mxu0 0.0
        %4454 = vmatpush1.msra.mxu0 0.0
        %4455 = vmatprep.subr.mxu0 0.0
        %4456 = vmatpush1.msra.mxu0 0.0
        %4457 = vmatprep.subr.mxu0 0.0
        %4458 = vmatpush1.msra.mxu0 0.0
        %4459 = vmatprep.subr.mxu0 0.0
        %4460 = vmatpush1.msra.mxu0 0.0
        %4461 = vmatprep.subr.mxu0 0.0
        %4462 = vmatpush1.msra.mxu0 0.0
        %4463 = vmatprep.subr.mxu0 0.0
        %4464 = vmatpush1.msra.mxu0 0.0
        %4465 = vmatprep.subr.mxu0 0.0
        %4466 = vmatpush1.msra.mxu0 0.0
        %4467 = vmatprep.subr.mxu0 0.0
        %4468 = vmatpush1.msra.mxu0 0.0
        %4469 = vmatprep.subr.mxu0 0.0
        %4470 = vmatpush1.msra.mxu0 0.0
        %4471 = vmatprep.subr.mxu0 0.0
        %4472 = vmatpush1.msra.mxu0 0.0
        %4473 = vmatprep.subr.mxu0 0.0
        %4474 = vmatpush1.msra.mxu0 0.0
        %4475 = vmatprep.mubr.f32.mxu0 0.0
        %4476 = vmatmul.mubr.f32.gmra.mrb[0].mxu0 %v4409
        %v4477 = vpop.f32.mrb[0].mxu0
        %v4478 = vadd.f32 %v4407, %v4477
        %v4479 = vpop.f32.mrb[0].mxu0
        %4480 = vdwg.mxu0
        %v4481 = vadd.f32 %v3464, %v4478
        %v4482 = vld [vmem:[%s6 + $0x14] sm:$0x1]
        %v4483 = vld [vmem:[%s6 + $0x15] sm:$0x1]
        %v4484 = vsel %vm335, %v4481, 0.0
        %4485 = vadd.xlane.f32.xlu0 %v4484
        %v4486 = vpop.xlane.xlu0 %4485
        %v4487 = vmul.f32 %v4486, %v1246
        %v4488 = vmul.f32 %v4481, %v4481
        %v4489 = vsel %vm335, %v4488, 0.0
        %4490 = vadd.xlane.f32.xlu0 %v4489
        %v4491 = vpop.xlane.xlu0 %4490
        %v4492 = vmul.f32 %v4491, %v1246
        %v4493 = vmul.f32 %v4487, %v4487
        %v4494 = vsub.f32 %v4492, %v4493
        %v4495 = vmax.f32 %v4494, 0.0
        %v4496 = vsub.f32 %v4481, %v4487
        %v4497 = vadd.f32 %v4495, 1e-05
        %v4498 = vrsqrt.pop %v4497
        %v4499 = vmul.f32 %v4496, %v4498
        %v4500 = vlaneseq
        %v4501 = vshrl.u32 %v4500, 7
        %v4502 = vsub.s32 0, %v4501
        %v4503 = vrot.slane %v4482, %v4502
        %v4504 = vmul.f32 %v4499, %v4503
        %v4505 = vlaneseq
        %v4506 = vshrl.u32 %v4505, 7
        %v4507 = vsub.s32 0, %v4506
        %v4508 = vrot.slane %v4483, %v4507
        %v4509 = vadd.f32 %v4504, %v4508
        %s4510 = scalar_lea.vmem %s2, 96
        %v4511 = vld [vmem:[%s4510] sm:$0xff]
        %v4512 = vld [vmem:[%s4510 + $0x8] sm:$0xff]
        %v4513 = vld [vmem:[%s4510 + $0x10] sm:$0xff]
        %v4514 = vld [vmem:[%s4510 + $0x18] sm:$0xff]
        %s4515 = scalar_lea.vmem %s3, 192
        %v4516 = vld [vmem:[%s4515] sm:$0xff]
        %v4517 = vld [vmem:[%s4515 + $0x8] sm:$0xff]
        %v4518 = vld [vmem:[%s4515 + $0x10] sm:$0xff]
        %v4519 = vld [vmem:[%s4515 + $0x18] sm:$0xff]
        %v4520 = vld [vmem:[%s4515 + $0x20] sm:$0xff]
        %v4521 = vld [vmem:[%s4515 + $0x28] sm:$0xff]
        %v4522 = vld [vmem:[%s4515 + $0x30] sm:$0xff]
        %v4523 = vld [vmem:[%s4515 + $0x38] sm:$0xff]
        %v4524 = vld [vmem:[%s6 + $0x16] sm:$0x1]
        %v4525 = vlaneseq
        %v4526 = vshrl.u32 %v4525, 7
        %v4527 = vsub.s32 0, %v4526
        %v4528 = vrot.slane %v4524, %v4527
        %v4530 = vsel %vm335, %v4509, 0
        %4532 = vmatprep.subr.mxu0 0.0
        %4533 = vmatpush1.msra.mxu0 %v4511
        %4534 = vmatprep.subr.mxu0 0.0
        %4535 = vmatpush1.msra.mxu0 %v4512
        %4536 = vmatprep.subr.mxu0 0.0
        %4537 = vmatpush1.msra.mxu0 %v4513
        %4538 = vmatprep.subr.mxu0 0.0
        %4539 = vmatpush1.msra.mxu0 %v4514
        %4540 = vmatprep.subr.mxu0 0.0
        %4541 = vmatpush1.msra.mxu0 0.0
        %4542 = vmatprep.subr.mxu0 0.0
        %4543 = vmatpush1.msra.mxu0 0.0
        %4544 = vmatprep.subr.mxu0 0.0
        %4545 = vmatpush1.msra.mxu0 0.0
        %4546 = vmatprep.subr.mxu0 0.0
        %4547 = vmatpush1.msra.mxu0 0.0
        %4548 = vmatprep.subr.mxu0 0.0
        %4549 = vmatpush1.msra.mxu0 0.0
        %4550 = vmatprep.subr.mxu0 0.0
        %4551 = vmatpush1.msra.mxu0 0.0
        %4552 = vmatprep.subr.mxu0 0.0
        %4553 = vmatpush1.msra.mxu0 0.0
        %4554 = vmatprep.subr.mxu0 0.0
        %4555 = vmatpush1.msra.mxu0 0.0
        %4556 = vmatprep.subr.mxu0 0.0
        %4557 = vmatpush1.msra.mxu0 0.0
        %4558 = vmatprep.subr.mxu0 0.0
        %4559 = vmatpush1.msra.mxu0 0.0
        %4560 = vmatprep.subr.mxu0 0.0
        %4561 = vmatpush1.msra.mxu0 0.0
        %4562 = vmatprep.subr.mxu0 0.0
        %4563 = vmatpush1.msra.mxu0 0.0
        %4564 = vmatprep.subr.mxu0 0.0
        %4565 = vmatpush1.msra.mxu0 0.0
        %4566 = vmatprep.subr.mxu0 0.0
        %4567 = vmatpush1.msra.mxu0 0.0
        %4568 = vmatprep.subr.mxu0 0.0
        %4569 = vmatpush1.msra.mxu0 0.0
        %4570 = vmatprep.subr.mxu0 0.0
        %4571 = vmatpush1.msra.mxu0 0.0
        %4572 = vmatprep.subr.mxu0 0.0
        %4573 = vmatpush1.msra.mxu0 0.0
        %4574 = vmatprep.subr.mxu0 0.0
        %4575 = vmatpush1.msra.mxu0 0.0
        %4576 = vmatprep.subr.mxu0 0.0
        %4577 = vmatpush1.msra.mxu0 0.0
        %4578 = vmatprep.subr.mxu0 0.0
        %4579 = vmatpush1.msra.mxu0 0.0
        %4580 = vmatprep.subr.mxu0 0.0
        %4581 = vmatpush1.msra.mxu0 0.0
        %4582 = vmatprep.subr.mxu0 0.0
        %4583 = vmatpush1.msra.mxu0 0.0
        %4584 = vmatprep.subr.mxu0 0.0
        %4585 = vmatpush1.msra.mxu0 0.0
        %4586 = vmatprep.subr.mxu0 0.0
        %4587 = vmatpush1.msra.mxu0 0.0
        %4588 = vmatprep.subr.mxu0 0.0
        %4589 = vmatpush1.msra.mxu0 0.0
        %4590 = vmatprep.subr.mxu0 0.0
        %4591 = vmatpush1.msra.mxu0 0.0
        %4592 = vmatprep.subr.mxu0 0.0
        %4593 = vmatpush1.msra.mxu0 0.0
        %4594 = vmatprep.subr.mxu0 0.0
        %4595 = vmatpush1.msra.mxu0 0.0
        %4596 = vmatprep.mubr.f32.mxu0 0.0
        %4597 = vmatmul.mubr.f32.gmra.mrb[0].mxu0 %v4530
        %v4598 = vpop.f32.mrb[0].mxu0
        %v4599 = vadd.f32 %v4528, %v4598
        %v4600 = vpop.f32.mrb[0].mxu0
        %4601 = vdwg.mxu0
        %v4602 = vmax.f32 %v4599, 0.0
        %v4603 = vld [vmem:[%s6 + $0x17] sm:$0x1]
        %v4604 = vlaneseq
        %v4605 = vshrl.u32 %v4604, 7
        %v4606 = vsub.s32 0, %v4605
        %v4607 = vrot.slane %v4603, %v4606
        %v4609 = vsel %vm2411, %v4602, 0
        %4611 = vmatprep.subr.mxu0 0.0
        %4612 = vmatpush1.msra.mxu0 %v4516
        %4613 = vmatprep.subr.mxu0 0.0
        %4614 = vmatpush1.msra.mxu0 %v4517
        %4615 = vmatprep.subr.mxu0 0.0
        %4616 = vmatpush1.msra.mxu0 %v4518
        %4617 = vmatprep.subr.mxu0 0.0
        %4618 = vmatpush1.msra.mxu0 %v4519
        %4619 = vmatprep.subr.mxu0 0.0
        %4620 = vmatpush1.msra.mxu0 %v4520
        %4621 = vmatprep.subr.mxu0 0.0
        %4622 = vmatpush1.msra.mxu0 %v4521
        %4623 = vmatprep.subr.mxu0 0.0
        %4624 = vmatpush1.msra.mxu0 %v4522
        %4625 = vmatprep.subr.mxu0 0.0
        %4626 = vmatpush1.msra.mxu0 %v4523
        %4627 = vmatprep.subr.mxu0 0.0
        %4628 = vmatpush1.msra.mxu0 0.0
        %4629 = vmatprep.subr.mxu0 0.0
        %4630 = vmatpush1.msra.mxu0 0.0
        %4631 = vmatprep.subr.mxu0 0.0
        %4632 = vmatpush1.msra.mxu0 0.0
        %4633 = vmatprep.subr.mxu0 0.0
        %4634 = vmatpush1.msra.mxu0 0.0
        %4635 = vmatprep.subr.mxu0 0.0
        %4636 = vmatpush1.msra.mxu0 0.0
        %4637 = vmatprep.subr.mxu0 0.0
        %4638 = vmatpush1.msra.mxu0 0.0
        %4639 = vmatprep.subr.mxu0 0.0
        %4640 = vmatpush1.msra.mxu0 0.0
        %4641 = vmatprep.subr.mxu0 0.0
        %4642 = vmatpush1.msra.mxu0 0.0
        %4643 = vmatprep.subr.mxu0 0.0
        %4644 = vmatpush1.msra.mxu0 0.0
        %4645 = vmatprep.subr.mxu0 0.0
        %4646 = vmatpush1.msra.mxu0 0.0
        %4647 = vmatprep.subr.mxu0 0.0
        %4648 = vmatpush1.msra.mxu0 0.0
        %4649 = vmatprep.subr.mxu0 0.0
        %4650 = vmatpush1.msra.mxu0 0.0
        %4651 = vmatprep.subr.mxu0 0.0
        %4652 = vmatpush1.msra.mxu0 0.0
        %4653 = vmatprep.subr.mxu0 0.0
        %4654 = vmatpush1.msra.mxu0 0.0
        %4655 = vmatprep.subr.mxu0 0.0
        %4656 = vmatpush1.msra.mxu0 0.0
        %4657 = vmatprep.subr.mxu0 0.0
        %4658 = vmatpush1.msra.mxu0 0.0
        %4659 = vmatprep.subr.mxu0 0.0
        %4660 = vmatpush1.msra.mxu0 0.0
        %4661 = vmatprep.subr.mxu0 0.0
        %4662 = vmatpush1.msra.mxu0 0.0
        %4663 = vmatprep.subr.mxu0 0.0
        %4664 = vmatpush1.msra.mxu0 0.0
        %4665 = vmatprep.subr.mxu0 0.0
        %4666 = vmatpush1.msra.mxu0 0.0
        %4667 = vmatprep.subr.mxu0 0.0
        %4668 = vmatpush1.msra.mxu0 0.0
        %4669 = vmatprep.subr.mxu0 0.0
        %4670 = vmatpush1.msra.mxu0 0.0
        %4671 = vmatprep.subr.mxu0 0.0
        %4672 = vmatpush1.msra.mxu0 0.0
        %4673 = vmatprep.subr.mxu0 0.0
        %4674 = vmatpush1.msra.mxu0 0.0
        %4675 = vmatprep.mubr.f32.mxu0 0.0
        %4676 = vmatmul.mubr.f32.gmra.mrb[0].mxu0 %v4609
        %v4677 = vpop.f32.mrb[0].mxu0
        %v4678 = vadd.f32 %v4607, %v4677
        %v4679 = vpop.f32.mrb[0].mxu0
        %4680 = vdwg.mxu0
        %v4681 = vadd.f32 %v4509, %v4678
        %v4682 = vld [vmem:[%s6 + $0x18] sm:$0x1]
        %v4683 = vld [vmem:[%s6 + $0x19] sm:$0x1]
        %v4684 = vsel %vm335, %v4681, 0.0
        %4685 = vadd.xlane.f32.xlu0 %v4684
        %v4686 = vpop.xlane.xlu0 %4685
        %v4687 = vmul.f32 %v4686, %v1246
        %v4688 = vmul.f32 %v4681, %v4681
        %v4689 = vsel %vm335, %v4688, 0.0
        %4690 = vadd.xlane.f32.xlu0 %v4689
        %v4691 = vpop.xlane.xlu0 %4690
        %v4692 = vmul.f32 %v4691, %v1246
        %v4693 = vmul.f32 %v4687, %v4687
        %v4694 = vsub.f32 %v4692, %v4693
        %v4695 = vmax.f32 %v4694, 0.0
        %v4696 = vsub.f32 %v4681, %v4687
        %v4697 = vadd.f32 %v4695, 1e-05
        %v4698 = vrsqrt.pop %v4697
        %v4699 = vmul.f32 %v4696, %v4698
        %v4700 = vlaneseq
        %v4701 = vshrl.u32 %v4700, 7
        %v4702 = vsub.s32 0, %v4701
        %v4703 = vrot.slane %v4682, %v4702
        %v4704 = vmul.f32 %v4699, %v4703
        %v4705 = vlaneseq
        %v4706 = vshrl.u32 %v4705, 7
        %v4707 = vsub.s32 0, %v4706
        %v4708 = vrot.slane %v4683, %v4707
        %v4709 = vadd.f32 %v4704, %v4708
        %v4710 = vld [vmem:[%s6 + $0x1a] sm:$0x1]
        %v4711 = vld [vmem:[%s6 + $0x1b] sm:$0x1]
        %v4712 = vsel %vm335, %v4709, 0.0
        %4713 = vadd.xlane.f32.xlu0 %v4712
        %v4714 = vpop.xlane.xlu0 %4713
        %v4715 = vmul.f32 %v4714, %v1246
        %v4716 = vmul.f32 %v4709, %v4709
        %v4717 = vsel %vm335, %v4716, 0.0
        %4718 = vadd.xlane.f32.xlu0 %v4717
        %v4719 = vpop.xlane.xlu0 %4718
        %v4720 = vmul.f32 %v4719, %v1246
        %v4721 = vmul.f32 %v4715, %v4715
        %v4722 = vsub.f32 %v4720, %v4721
        %v4723 = vmax.f32 %v4722, 0.0
        %v4724 = vsub.f32 %v4709, %v4715
        %v4725 = vadd.f32 %v4723, 1e-05
        %v4726 = vrsqrt.pop %v4725
        %v4727 = vmul.f32 %v4724, %v4726
        %v4728 = vlaneseq
        %v4729 = vshrl.u32 %v4728, 7
        %v4730 = vsub.s32 0, %v4729
        %v4731 = vrot.slane %v4710, %v4730
        %v4732 = vmul.f32 %v4727, %v4731
        %v4733 = vlaneseq
        %v4734 = vshrl.u32 %v4733, 7
        %v4735 = vsub.s32 0, %v4734
        %v4736 = vrot.slane %v4711, %v4735
        %v4737 = vadd.f32 %v4732, %v4736
        %4738 = vst.msk [vmem:[%s302] sm:$0xff] %vm335, %v4737
        %4739 = vst.msk [vmem:[%s309] sm:$0xff] %vm1158, %v4402
        %s4740 = sand.u32 %s186, 1
        %s4741 = scalar_lea.sflag [#allocation3], %s4740
        %s4742 = sand.u32 %s186, 1
        %s4743 = smul.addr %s4742, 8
        %s4744 = scalar_lea.vmem [#allocation2], %s4743
        %s4745 = sand.u32 %s212, 1
        %s4746 = scalar_lea.sflag [#allocation5], %s4745
        %s4747 = sand.u32 %s212, 1
        %s4748 = smul.addr %s4747, 8
        %s4749 = scalar_lea.vmem [#allocation4], %s4748
        // Predicated region
        $region49: #{transformer_forward.1} parent=47 // pred_check
          %p4750 = pneg %p196
        $region50: #{transformer_forward.1} parent=47 // pred_check_branch
          %4752 = sbr.rel (%p4750) target = $region52
        $region51: #{transformer_forward.1} parent=47 // pred_region
          %s4754 = ssub.s32 128, 128
          %4755 = vsyncadd %s4741, %s4754
          %s4756 = smul.addr %s26, 128
          %s4757 = scalar_lea.hbm %s7, %s4756
          %s4759 = sshll.u32 %s4744, 4
          %s4760 = int_to_ptr.vmem [resolvable:$true] %s4759
          %4762 = dma.vmem_to_hbm [thread:$0]  %s4760, 128, %s4757, %s4741
        $region52: #{transformer_forward.1} parent=47 // pred_fallthru
          _
        // Predicated region
        $region53: #{transformer_forward.1} parent=47 // pred_check
          %p4763 = pneg %p222
        $region54: #{transformer_forward.1} parent=47 // pred_check_branch
          %4765 = sbr.rel (%p4763) target = $region56
        $region55: #{transformer_forward.1} parent=47 // pred_region
          %s4767 = ssub.s32 128, 128
          %4768 = vsyncadd %s4746, %s4767
          %s4769 = smul.addr %s26, 128
          %s4770 = scalar_lea.hbm %s8, %s4769
          %s4772 = sshll.u32 %s4749, 4
          %s4773 = int_to_ptr.vmem [resolvable:$true] %s4772
          %4775 = dma.vmem_to_hbm [thread:$0]  %s4773, 128, %s4770, %s4746
        $region56: #{transformer_forward.1} parent=47 // pred_fallthru
          _
      $region48: #{transformer_forward.1} parent=5 // pred_fallthru
        _
      %p4776 = scmp.le.s32.totalorder 2, %s21
      // Predicated region
      $region57: #{transformer_forward.1} parent=5 // pred_check
        %p4777 = pneg %p4776
      $region58: #{transformer_forward.1} parent=5 // pred_check_branch
        %4779 = sbr.rel (%p4777) target = $region60
      $region59: #{transformer_forward.1} parent=5 // pred_region
        %s4780 = ssub.s32 %s21, 2
        // Predicated region
        $region61: #{transformer_forward.1} parent=59 // pred_check
          %p4781 = pneg %p202
        $region62: #{transformer_forward.1} parent=59 // pred_check_branch
          %4783 = sbr.rel (%p4781) target = $region64
        $region63: #{transformer_forward.1} parent=59 // pred_region
          %s4784 = sand.u32 %s187, 1
          %s4785 = scalar_lea.sflag [#allocation3], %s4784
          %s4786 = sand.u32 %s187, 1
          %s4787 = smul.addr %s4786, 8
          %s4788 = scalar_lea.vmem [#allocation2], %s4787
          %4789 = dma.done %s4785, 128
        $region64: #{transformer_forward.1} parent=59 // pred_fallthru
          _
        // Predicated region
        $region65: #{transformer_forward.1} parent=59 // pred_check
          %p4790 = pneg %p228
        $region66: #{transformer_forward.1} parent=59 // pred_check_branch
          %4792 = sbr.rel (%p4790) target = $region68
        $region67: #{transformer_forward.1} parent=59 // pred_region
          %s4793 = sand.u32 %s213, 1
          %s4794 = scalar_lea.sflag [#allocation5], %s4793
          %s4795 = sand.u32 %s213, 1
          %s4796 = smul.addr %s4795, 8
          %s4797 = scalar_lea.vmem [#allocation4], %s4796
          %4798 = dma.done %s4794, 128
        $region68: #{transformer_forward.1} parent=59 // pred_fallthru
          _
      $region60: #{transformer_forward.1} parent=5 // pred_fallthru
        _
    $region6: #{transformer_forward.1} parent=1 // loop_footer
      %s25 = sadd.s32 1, %s21
    $region7: #{transformer_forward.1} parent=1 // loop_footer_branch
      %20 = sbr.rel target = $region3
    $region8: #{transformer_forward.1} parent=1 // loop_exit
      _
    %4799 = vsyncpa [#allocation3], 1
    %s4800 = scalar_lea.sflag [#allocation3], 1
    %4801 = vsyncpa %s4800, 1
    %4802 = vsyncpa [#allocation5], 1
    %s4803 = scalar_lea.sflag [#allocation5], 1
    %4804 = vsyncpa %s4803, 1

</llo_original>
